<compile_context>
chip_gen: v6e
topology: v6e:2x2x1
jax: 0.10.0
libtpu: 0.0.40
codegen_flags: <defaults>
</compile_context>

<pallas_src>
import math
from functools import partial

import numpy as np
import jax
import jax.numpy as jnp
from jax.experimental import pallas as pl
from jax.experimental.pallas import tpu as pltpu


def _layer_norm(x, w, b, eps):
    # PyTorch nn.LayerNorm: biased variance over last dim, eps inside rsqrt.
    mu = jnp.mean(x, axis=-1, keepdims=True)
    var = jnp.mean((x - mu) ** 2, axis=-1, keepdims=True)
    return (x - mu) * jax.lax.rsqrt(var + eps) * w + b


def mgan_kernel(q_ref, k_ref, v_ref,
                lnq_w_ref, lnq_b_ref,
                fc1_w_ref, fc1_b_ref, fc2_w_ref, fc2_b_ref,
                wq_ref, wk_ref, wv_ref, fco_ref,
                lna_w_ref, lna_b_ref,
                o_ref,
                *, nhead, d_k, d_v, l, norm_type, matmul_dtype, approx_recip):
    B, Lq, C = q_ref.shape          # B = sequences in this block
    Lk = k_ref.shape[1]
    Tq, Tk = B * Lq, B * Lk
    mdt = matmul_dtype

    # token-flattened slabs: every token-wise matmul uses M = B*L rows
    q2 = q_ref[...].reshape(Tq, C)
    k2 = k_ref[...].reshape(Tk, C)
    v2 = v_ref[...].reshape(Tk, C)

    # MGAN: q = LayerNorm(q)   (f32 VPU/EUP math)
    qn = _layer_norm(q2, lnq_w_ref[...], lnq_b_ref[...], 1e-6)

    # sg = sigmoid(fc1(q)) * fc2(q)   (MXU operands cast to matmul_dtype)
    qn_m = qn.astype(mdt)
    sg = (jax.nn.sigmoid(
              jnp.dot(qn_m, fc1_w_ref[...].astype(mdt),
                      preferred_element_type=jnp.float32) + fc1_b_ref[...])
          * (jnp.dot(qn_m, fc2_w_ref[...].astype(mdt),
                     preferred_element_type=jnp.float32) + fc2_b_ref[...]))

    # ---- cross_attn_AWG(sg, k, v) ----
    # Hoisted Q/K/V projections: one wide-N MXU launch each.
    # (wq was pre-scaled by 1/sqrt(d_k) on the host.)
    qp = jnp.dot(sg.astype(mdt), wq_ref[...].astype(mdt),
                 preferred_element_type=jnp.float32)        # (Tq, H*d_k)
    kp = jnp.dot(k2.astype(mdt), wk_ref[...].astype(mdt),
                 preferred_element_type=jnp.float32)        # (Tk, H*d_k)
    vp = jnp.dot(v2.astype(mdt), wv_ref[...].astype(mdt),
                 preferred_element_type=jnp.float32)        # (Tk, H*d_v)

    def to_heads(x, L, d):
        # (B*L, H*d) -> head-major batch (H*B, L, d): cheap lane extract per
        # head + major-dim reshape + leading-axis concat (no minor relayout
        # of the big slabs).
        if nhead == 1:
            return x.reshape(B, L, d)
        return jnp.concatenate(
            [x[:, h * d:(h + 1) * d].reshape(B, L, d) for h in range(nhead)],
            axis=0)

    qh = to_heads(qp, Lq, d_k)        # (H*B, Lq, d_k)
    kh = to_heads(kp, Lk, d_k)        # (H*B, Lk, d_k)
    vh = to_heads(vp, Lk, d_v)        # (H*B, Lk, d_v)

    # heads folded into the einsum batch: one pass over (H*B, Lq, Lk)
    s = jnp.einsum('bqd,bkd->bqk', qh.astype(mdt), kh.astype(mdt),
                   preferred_element_type=jnp.float32)

    # Softmax numerator only.  The AWG threshold (mean or l-th largest) and
    # the final W /= sum(W) are invariant to the positive per-row softmax
    # denominator, so the explicit 1/sum(exp) normalization is dropped
    # (saves a row-sum, a reciprocal and a full-tensor multiply per head
    # with bit-identical gating).
    p = jnp.exp(s - jnp.max(s, axis=-1, keepdims=True))

    if norm_type == 'mean':
        thr = jnp.mean(p, axis=-1, keepdims=True)
    else:
        # 'topk': l-th largest value via (l-1) knock-out row-max passes
        # (O(l*Lk), reductions on the XLU).  Exact ties among the top-l
        # values may admit extra elements vs torch.topk; benign for
        # continuous softmax values.
        work = p
        for _ in range(l - 1):
            work = jnp.where(
                work >= jnp.max(work, axis=-1, keepdims=True), -1.0, work)
        thr = jnp.max(work, axis=-1, keepdims=True)

    W = jnp.where(p >= thr, p, 0.0)                 # single select gate
    denom = jnp.sum(W, axis=-1, keepdims=True)
    if approx_recip:
        W = W * pl.reciprocal(denom, approx=True)   # EUP, ~1e-3 rel error
    else:
        W = W / denom                               # exact (matches reference)

    oh = jnp.einsum('bqk,bkd->bqd', W.astype(mdt), vh.astype(mdt),
                    preferred_element_type=jnp.float32)     # (H*B, Lq, d_v)

    # fused per-head out-projection: concat(heads) @ fco == sum_h oh_h @ fco_h
    attn_out = jnp.zeros((Tq, C), jnp.float32)
    for h in range(nhead):
        oh_h = oh[h * B:(h + 1) * B].reshape(Tq, d_v)
        attn_out = attn_out + jnp.dot(
            oh_h.astype(mdt),
            fco_ref[h * d_v:(h + 1) * d_v, :].astype(mdt),
            preferred_element_type=jnp.float32)

    # residual + LayerNorm (dropout = identity in eval mode)
    awg = _layer_norm(attn_out + sg, lna_w_ref[...], lna_b_ref[...], 1e-6)

    # MGAN tail: GLU(cat(sg, awg), -1) = sg * sigmoid(awg); dropout = identity
    o_ref[...] = qn + sg * jax.nn.sigmoid(awg)               # (B*Lq, C) slab


def _default_b_blk(B, Lq):
    # Want >= 128 tokens per grid step (MXU M / lane-dense stores) but also a
    # grid of >= 2 steps so both TensorCores of a v7x megacore get work under
    # dimension_semantics=("parallel",).  On single-TC v5e/v6e the extra grid
    # step costs ~0.35us -- negligible -- so this default is safe everywhere.
    # Pass b_blk explicitly to retune (larger on v5e/v6e, smaller on v7x if
    # the per-step working set approaches the 64 MiB VMEM).
    b = B
    while b % 2 == 0 and B // b < 2 and (b // 2) * Lq >= 128:
        b //= 2
    return b


def mgan_forward(q, k, v, params, *, nhead, d_k, d_v, l, norm_type,
                 b_blk=None, matmul_dtype=jnp.float32, approx_recip=False,
                 vmem_limit_bytes=48 * 1024 * 1024):
    """q: (B, Lq, C), k/v: (B, Lk, C) float32.  Returns (B, Lq, C)."""
    B, Lq, C = q.shape
    Lk = k.shape[1]
    assert v.shape[1] == Lk and k.shape[-1] == C and v.shape[-1] == C
    assert d_k == d_v  # the PyTorch module's .view() implicitly requires this
    if norm_type != 'mean':
        assert 1 <= l <= Lk
    if b_blk is None:
        b_blk = _default_b_blk(B, Lq)
    assert B % b_blk == 0 and (b_blk * Lq) % 8 == 0
    grid = (B // b_blk,)

    # fold the 1/sqrt(d_k) attention scale into wq (one-time, host side)
    weights = [params['lnq_w'], params['lnq_b'],
               params['fc1_w'], params['fc1_b'],
               params['fc2_w'], params['fc2_b'],
               params['wq'] * (1.0 / math.sqrt(d_k)),
               params['wk'], params['wv'], params['fco'],
               params['lna_w'], params['lna_b']]

    def full_spec(a):
        nd = a.ndim
        return pl.BlockSpec(a.shape, lambda i, nd=nd: (0,) * nd)

    in_specs = ([pl.BlockSpec((b_blk, Lq, C), lambda i: (i, 0, 0)),
                 pl.BlockSpec((b_blk, Lk, C), lambda i: (i, 0, 0)),
                 pl.BlockSpec((b_blk, Lk, C), lambda i: (i, 0, 0))]
                + [full_spec(w) for w in weights])

    kernel = partial(mgan_kernel, nhead=nhead, d_k=d_k, d_v=d_v, l=l,
                     norm_type=norm_type, matmul_dtype=matmul_dtype,
                     approx_recip=approx_recip)

    out = pl.pallas_call(
        kernel,
        out_shape=jax.ShapeDtypeStruct((B * Lq, C), jnp.float32),
        grid=grid,
        in_specs=in_specs,
        out_specs=pl.BlockSpec((b_blk * Lq, C), lambda i: (i, 0)),
        compiler_params=pltpu.CompilerParams(
            dimension_semantics=("parallel",),
            vmem_limit_bytes=vmem_limit_bytes),
    )(q, k, v, *weights)
    return out.reshape(B, Lq, C)


def init_params(key, *, conformer_class, nhead, d_k, d_v):
    C = conformer_class
    ks = jax.random.split(key, 12)

    def u(k, shape, scale):
        return jax.random.uniform(k, shape, jnp.float32, -scale, scale)

    lin = 1.0 / math.sqrt(C)
    return dict(
        lnq_w=1.0 + 0.1 * u(ks[0], (1, C), 1.0),
        lnq_b=0.1 * u(ks[1], (1, C), 1.0),
        fc1_w=u(ks[2], (C, C), lin), fc1_b=u(ks[3], (1, C), lin),
        fc2_w=u(ks[4], (C, C), lin), fc2_b=u(ks[5], (1, C), lin),
        wq=u(ks[6], (C, nhead * d_k), 0.8),
        wk=u(ks[7], (C, nhead * d_k), 0.8),
        wv=u(ks[8], (C, nhead * d_v), lin),
        fco=u(ks[9], (nhead * d_v, C), 1.0 / math.sqrt(nhead * d_v)),
        lna_w=1.0 + 0.1 * u(ks[10], (1, C), 1.0),
        lna_b=0.1 * u(ks[11], (1, C), 1.0),
    )


def reference_forward(q, k, v, params, *, nhead, d_k, d_v, l, norm_type):
    """Pure-JAX reference mirroring the PyTorch module (eval mode)."""
    B, Lq, C = q.shape
    Lk = k.shape[1]
    qn = _layer_norm(q, params['lnq_w'], params['lnq_b'], 1e-6)
    sg = (jax.nn.sigmoid(qn @ params['fc1_w'] + params['fc1_b'])
          * (qn @ params['fc2_w'] + params['fc2_b']))
    qp = jnp.transpose((sg @ params['wq']).reshape(B, Lq, nhead, d_k),
                       (0, 2, 1, 3))
    kp = jnp.transpose((k @ params['wk']).reshape(B, Lk, nhead, d_k),
                       (0, 2, 1, 3))
    vp = jnp.transpose((v @ params['wv']).reshape(B, Lk, nhead, d_v),
                       (0, 2, 1, 3))
    attn = jax.nn.softmax(
        jnp.einsum('bhqd,bhkd->bhqk', qp / math.sqrt(d_k), kp), axis=-1)
    if norm_type == 'mean':
        thr = jnp.mean(attn, axis=-1, keepdims=True)
    else:
        thr = jax.lax.top_k(attn, l)[0][..., l - 1:l]
    W = attn * (attn >= thr).astype(attn.dtype)
    W = W / jnp.sum(W, axis=-1, keepdims=True)
    out = jnp.einsum('bhqk,bhkd->bhqd', W, vp)
    out = jnp.transpose(out, (0, 2, 1, 3)).reshape(B, Lq, nhead * d_v)
    out = out @ params['fco']
    awg = _layer_norm(out + sg, params['lna_w'], params['lna_b'], 1e-6)
    return qn + sg * jax.nn.sigmoid(awg)


if __name__ == "__main__":
    # module hyper-params (small, consistent with the forward)
    NHEAD, D_K, D_V = 2, 16, 16
    CONFORMER_CLASS = 32
    L_TOPK = 4
    B, LQ, LK = 16, 16, 16   # default b_blk -> 8 seqs * 16 tok = 128 / step

    key = jax.random.PRNGKey(0)
    kq, kk_, kv, kp = jax.random.split(key, 4)
    q = jax.random.normal(kq, (B, LQ, CONFORMER_CLASS), jnp.float32)
    k = jax.random.normal(kk_, (B, LK, CONFORMER_CLASS), jnp.float32)
    v = jax.random.normal(kv, (B, LK, CONFORMER_CLASS), jnp.float32)
    params = init_params(kp, conformer_class=CONFORMER_CLASS,
                         nhead=NHEAD, d_k=D_K, d_v=D_V)

    refs = {}
    for norm_type in ('mean', 'topk'):
        refs[norm_type] = reference_forward(
            q, k, v, params, nhead=NHEAD, d_k=D_K, d_v=D_V, l=L_TOPK,
            norm_type=norm_type)
        # exact-precision path (f32 MXU operands): tight check vs reference
        out = jax.block_until_ready(
            mgan_forward(q, k, v, params, nhead=NHEAD, d_k=D_K, d_v=D_V,
                         l=L_TOPK, norm_type=norm_type))
        assert out.shape == (B, LQ, CONFORMER_CLASS)
        np.testing.assert_allclose(np.asarray(out),
                                   np.asarray(refs[norm_type]),
                                   rtol=2e-3, atol=2e-3)

    # bf16-MXU fast path (f32 accumulation, f32 VPU/EUP math) + approx EUP
    # reciprocal.  The hard AWG threshold can flip near-tie gates under bf16
    # perturbation, so this is a sanity check rather than a tight assert.
    out_bf16 = jax.block_until_ready(
        mgan_forward(q, k, v, params, nhead=NHEAD, d_k=D_K, d_v=D_V,
                     l=L_TOPK, norm_type='mean',
                     matmul_dtype=jnp.bfloat16, approx_recip=True))
    diff = np.abs(np.asarray(out_bf16) - np.asarray(refs['mean']))
    assert np.isfinite(np.asarray(out_bf16)).all()
    assert float(diff.mean()) < 5e-2

    print("KERNEL_OK")
</pallas_src>

<mosaic_0001>
module attributes {stable_mosaic.version = 11 : i64} {
  func.func @mgan_kernel(%arg0: i32, %arg1: memref<8x16x32xf32, #tpu.memory_space<vmem>>, %arg2: memref<8x16x32xf32, #tpu.memory_space<vmem>>, %arg3: memref<8x16x32xf32, #tpu.memory_space<vmem>>, %arg4: memref<1x32xf32, #tpu.memory_space<vmem>>, %arg5: memref<1x32xf32, #tpu.memory_space<vmem>>, %arg6: memref<32x32xf32, #tpu.memory_space<vmem>>, %arg7: memref<1x32xf32, #tpu.memory_space<vmem>>, %arg8: memref<32x32xf32, #tpu.memory_space<vmem>>, %arg9: memref<1x32xf32, #tpu.memory_space<vmem>>, %arg10: memref<32x32xf32, #tpu.memory_space<vmem>>, %arg11: memref<32x32xf32, #tpu.memory_space<vmem>>, %arg12: memref<32x32xf32, #tpu.memory_space<vmem>>, %arg13: memref<32x32xf32, #tpu.memory_space<vmem>>, %arg14: memref<1x32xf32, #tpu.memory_space<vmem>>, %arg15: memref<1x32xf32, #tpu.memory_space<vmem>>, %arg16: memref<128x32xf32, #tpu.memory_space<vmem>>) attributes {dimension_semantics = [#tpu.dimension_semantics<parallel>], iteration_bounds = array<i64: 2>, scalar_prefetch = 0 : i64, scratch_operands = 0 : i64, tpu.core_type = #tpu.core_type<tc>, window_params = [{transform_indices = @transform_0, window_bounds = array<i64: 8, 16, 32>}, {transform_indices = @transform_1, window_bounds = array<i64: 8, 16, 32>}, {transform_indices = @transform_2, window_bounds = array<i64: 8, 16, 32>}, {pipeline_mode = #tpu.pipeline_mode<synchronous>, transform_indices = @transform_3, window_bounds = array<i64: 1, 32>}, {pipeline_mode = #tpu.pipeline_mode<synchronous>, transform_indices = @transform_4, window_bounds = array<i64: 1, 32>}, {pipeline_mode = #tpu.pipeline_mode<synchronous>, transform_indices = @transform_5, window_bounds = array<i64: 32, 32>}, {pipeline_mode = #tpu.pipeline_mode<synchronous>, transform_indices = @transform_6, window_bounds = array<i64: 1, 32>}, {pipeline_mode = #tpu.pipeline_mode<synchronous>, transform_indices = @transform_7, window_bounds = array<i64: 32, 32>}, {pipeline_mode = #tpu.pipeline_mode<synchronous>, transform_indices = @transform_8, window_bounds = array<i64: 1, 32>}, {pipeline_mode = #tpu.pipeline_mode<synchronous>, transform_indices = @transform_9, window_bounds = array<i64: 32, 32>}, {pipeline_mode = #tpu.pipeline_mode<synchronous>, transform_indices = @transform_10, window_bounds = array<i64: 32, 32>}, {pipeline_mode = #tpu.pipeline_mode<synchronous>, transform_indices = @transform_11, window_bounds = array<i64: 32, 32>}, {pipeline_mode = #tpu.pipeline_mode<synchronous>, transform_indices = @transform_12, window_bounds = array<i64: 32, 32>}, {pipeline_mode = #tpu.pipeline_mode<synchronous>, transform_indices = @transform_13, window_bounds = array<i64: 1, 32>}, {pipeline_mode = #tpu.pipeline_mode<synchronous>, transform_indices = @transform_14, window_bounds = array<i64: 1, 32>}, {transform_indices = @transform_15, window_bounds = array<i64: 128, 32>}]} {
    %c0 = arith.constant 0 : index
    %c0_0 = arith.constant 0 : index
    %c0_1 = arith.constant 0 : index
    %0 = vector.load %arg1[%c0, %c0_0, %c0_1] : memref<8x16x32xf32, #tpu.memory_space<vmem>>, vector<8x16x32xf32>
    %1 = vector.shape_cast %0 : vector<8x16x32xf32> to vector<128x32xf32>
    %c0_2 = arith.constant 0 : index
    %c0_3 = arith.constant 0 : index
    %c0_4 = arith.constant 0 : index
    %2 = vector.load %arg2[%c0_2, %c0_3, %c0_4] : memref<8x16x32xf32, #tpu.memory_space<vmem>>, vector<8x16x32xf32>
    %3 = vector.shape_cast %2 : vector<8x16x32xf32> to vector<128x32xf32>
    %c0_5 = arith.constant 0 : index
    %c0_6 = arith.constant 0 : index
    %c0_7 = arith.constant 0 : index
    %4 = vector.load %arg3[%c0_5, %c0_6, %c0_7] : memref<8x16x32xf32, #tpu.memory_space<vmem>>, vector<8x16x32xf32>
    %5 = vector.shape_cast %4 : vector<8x16x32xf32> to vector<128x32xf32>
    %c0_8 = arith.constant 0 : index
    %c0_9 = arith.constant 0 : index
    %6 = vector.load %arg4[%c0_8, %c0_9] : memref<1x32xf32, #tpu.memory_space<vmem>>, vector<1x32xf32>
    %c0_10 = arith.constant 0 : index
    %c0_11 = arith.constant 0 : index
    %7 = vector.load %arg5[%c0_10, %c0_11] : memref<1x32xf32, #tpu.memory_space<vmem>>, vector<1x32xf32>
    %cst = arith.constant dense<0.000000e+00> : vector<128xf32>
    %8 = vector.multi_reduction <add>, %1, %cst [1] : vector<128x32xf32> to vector<128xf32>
    %9 = vector.shape_cast %8 : vector<128xf32> to vector<128x1xf32>
    %cst_12 = arith.constant 3.200000e+01 : f32
    %10 = vector.broadcast %cst_12 : f32 to vector<128x1xf32>
    %11 = arith.divf %9, %10 : vector<128x1xf32>
    %12 = vector.broadcast %11 : vector<128x1xf32> to vector<128x32xf32>
    %13 = arith.subf %1, %12 : vector<128x32xf32>
    %14 = arith.mulf %13, %13 : vector<128x32xf32>
    %cst_13 = arith.constant dense<0.000000e+00> : vector<128xf32>
    %15 = vector.multi_reduction <add>, %14, %cst_13 [1] : vector<128x32xf32> to vector<128xf32>
    %16 = vector.shape_cast %15 : vector<128xf32> to vector<128x1xf32>
    %cst_14 = arith.constant 3.200000e+01 : f32
    %17 = vector.broadcast %cst_14 : f32 to vector<128x1xf32>
    %18 = arith.divf %16, %17 : vector<128x1xf32>
    %19 = vector.broadcast %11 : vector<128x1xf32> to vector<128x32xf32>
    %20 = arith.subf %1, %19 : vector<128x32xf32>
    %cst_15 = arith.constant 9.99999997E-7 : f32
    %21 = vector.broadcast %cst_15 : f32 to vector<128x1xf32>
    %22 = arith.addf %18, %21 : vector<128x1xf32>
    %23 = math.rsqrt %22 : vector<128x1xf32>
    %24 = vector.broadcast %23 : vector<128x1xf32> to vector<128x32xf32>
    %25 = arith.mulf %20, %24 : vector<128x32xf32>
    %26 = vector.broadcast %6 : vector<1x32xf32> to vector<128x32xf32>
    %27 = arith.mulf %25, %26 : vector<128x32xf32>
    %28 = vector.broadcast %7 : vector<1x32xf32> to vector<128x32xf32>
    %29 = arith.addf %27, %28 : vector<128x32xf32>
    %c0_16 = arith.constant 0 : index
    %c0_17 = arith.constant 0 : index
    %30 = vector.load %arg6[%c0_16, %c0_17] : memref<32x32xf32, #tpu.memory_space<vmem>>, vector<32x32xf32>
    %cst_18 = arith.constant dense<0.000000e+00> : vector<128x32xf32>
    %31 = tpu.matmul %29, %30, %cst_18 {dimension_numbers = #tpu.dot_dimension_numbers<[1], [0], [0], [1], [0, 0, 1, 1], [], []>} : vector<128x32xf32>, vector<32x32xf32>, vector<128x32xf32> -> vector<128x32xf32>
    %c0_19 = arith.constant 0 : index
    %c0_20 = arith.constant 0 : index
    %32 = vector.load %arg7[%c0_19, %c0_20] : memref<1x32xf32, #tpu.memory_space<vmem>>, vector<1x32xf32>
    %33 = vector.broadcast %32 : vector<1x32xf32> to vector<128x32xf32>
    %34 = arith.addf %31, %33 : vector<128x32xf32>
    %35 = arith.negf %34 : vector<128x32xf32>
    %36 = math.exp %35 : vector<128x32xf32>
    %cst_21 = arith.constant 1.000000e+00 : f32
    %37 = vector.broadcast %cst_21 : f32 to vector<128x32xf32>
    %38 = arith.addf %37, %36 : vector<128x32xf32>
    %39 = arith.divf %37, %38 : vector<128x32xf32>
    %c0_22 = arith.constant 0 : index
    %c0_23 = arith.constant 0 : index
    %40 = vector.load %arg8[%c0_22, %c0_23] : memref<32x32xf32, #tpu.memory_space<vmem>>, vector<32x32xf32>
    %cst_24 = arith.constant dense<0.000000e+00> : vector<128x32xf32>
    %41 = tpu.matmul %29, %40, %cst_24 {dimension_numbers = #tpu.dot_dimension_numbers<[1], [0], [0], [1], [0, 0, 1, 1], [], []>} : vector<128x32xf32>, vector<32x32xf32>, vector<128x32xf32> -> vector<128x32xf32>
    %c0_25 = arith.constant 0 : index
    %c0_26 = arith.constant 0 : index
    %42 = vector.load %arg9[%c0_25, %c0_26] : memref<1x32xf32, #tpu.memory_space<vmem>>, vector<1x32xf32>
    %43 = vector.broadcast %42 : vector<1x32xf32> to vector<128x32xf32>
    %44 = arith.addf %41, %43 : vector<128x32xf32>
    %45 = arith.mulf %39, %44 : vector<128x32xf32>
    %c0_27 = arith.constant 0 : index
    %c0_28 = arith.constant 0 : index
    %46 = vector.load %arg10[%c0_27, %c0_28] : memref<32x32xf32, #tpu.memory_space<vmem>>, vector<32x32xf32>
    %cst_29 = arith.constant dense<0.000000e+00> : vector<128x32xf32>
    %47 = tpu.matmul %45, %46, %cst_29 {dimension_numbers = #tpu.dot_dimension_numbers<[1], [0], [0], [1], [0, 0, 1, 1], [], []>} : vector<128x32xf32>, vector<32x32xf32>, vector<128x32xf32> -> vector<128x32xf32>
    %c0_30 = arith.constant 0 : index
    %c0_31 = arith.constant 0 : index
    %48 = vector.load %arg11[%c0_30, %c0_31] : memref<32x32xf32, #tpu.memory_space<vmem>>, vector<32x32xf32>
    %cst_32 = arith.constant dense<0.000000e+00> : vector<128x32xf32>
    %49 = tpu.matmul %3, %48, %cst_32 {dimension_numbers = #tpu.dot_dimension_numbers<[1], [0], [0], [1], [0, 0, 1, 1], [], []>} : vector<128x32xf32>, vector<32x32xf32>, vector<128x32xf32> -> vector<128x32xf32>
    %c0_33 = arith.constant 0 : index
    %c0_34 = arith.constant 0 : index
    %50 = vector.load %arg12[%c0_33, %c0_34] : memref<32x32xf32, #tpu.memory_space<vmem>>, vector<32x32xf32>
    %cst_35 = arith.constant dense<0.000000e+00> : vector<128x32xf32>
    %51 = tpu.matmul %5, %50, %cst_35 {dimension_numbers = #tpu.dot_dimension_numbers<[1], [0], [0], [1], [0, 0, 1, 1], [], []>} : vector<128x32xf32>, vector<32x32xf32>, vector<128x32xf32> -> vector<128x32xf32>
    %52 = vector.extract_strided_slice %47 {offsets = [0, 0], sizes = [128, 16], strides = [1, 1]} : vector<128x32xf32> to vector<128x16xf32>
    %53 = vector.shape_cast %52 : vector<128x16xf32> to vector<8x16x16xf32>
    %54 = vector.extract_strided_slice %47 {offsets = [0, 16], sizes = [128, 16], strides = [1, 1]} : vector<128x32xf32> to vector<128x16xf32>
    %55 = vector.shape_cast %54 : vector<128x16xf32> to vector<8x16x16xf32>
    %56 = tpu.concatenate %53, %55 in 0 : vector<8x16x16xf32>, vector<8x16x16xf32> -> vector<16x16x16xf32>
    %57 = vector.extract_strided_slice %49 {offsets = [0, 0], sizes = [128, 16], strides = [1, 1]} : vector<128x32xf32> to vector<128x16xf32>
    %58 = vector.shape_cast %57 : vector<128x16xf32> to vector<8x16x16xf32>
    %59 = vector.extract_strided_slice %49 {offsets = [0, 16], sizes = [128, 16], strides = [1, 1]} : vector<128x32xf32> to vector<128x16xf32>
    %60 = vector.shape_cast %59 : vector<128x16xf32> to vector<8x16x16xf32>
    %61 = tpu.concatenate %58, %60 in 0 : vector<8x16x16xf32>, vector<8x16x16xf32> -> vector<16x16x16xf32>
    %62 = vector.extract_strided_slice %51 {offsets = [0, 0], sizes = [128, 16], strides = [1, 1]} : vector<128x32xf32> to vector<128x16xf32>
    %63 = vector.shape_cast %62 : vector<128x16xf32> to vector<8x16x16xf32>
    %64 = vector.extract_strided_slice %51 {offsets = [0, 16], sizes = [128, 16], strides = [1, 1]} : vector<128x32xf32> to vector<128x16xf32>
    %65 = vector.shape_cast %64 : vector<128x16xf32> to vector<8x16x16xf32>
    %66 = tpu.concatenate %63, %65 in 0 : vector<8x16x16xf32>, vector<8x16x16xf32> -> vector<16x16x16xf32>
    "tpu.trace_start"() <{level = 10 : i32, message = "bqd,bkd->bqk"}> : () -> ()
    %cst_36 = arith.constant dense<0.000000e+00> : vector<16x16x16xf32>
    %67 = tpu.matmul %56, %61, %cst_36 {dimension_numbers = #tpu.dot_dimension_numbers<[2], [2], [1], [1], [0, 0, 0, 1, 1, 1], [0], [0]>} : vector<16x16x16xf32>, vector<16x16x16xf32>, vector<16x16x16xf32> -> vector<16x16x16xf32>
    "tpu.trace_stop"() : () -> ()
    %cst_37 = arith.constant dense<0xFF800000> : vector<16x16xf32>
    %68 = vector.multi_reduction <maximumf>, %67, %cst_37 [2] : vector<16x16x16xf32> to vector<16x16xf32>
    %69 = vector.shape_cast %68 : vector<16x16xf32> to vector<16x16x1xf32>
    %70 = vector.broadcast %69 : vector<16x16x1xf32> to vector<16x16x16xf32>
    %71 = arith.subf %67, %70 : vector<16x16x16xf32>
    %72 = math.exp %71 : vector<16x16x16xf32>
    %cst_38 = arith.constant dense<0.000000e+00> : vector<16x16xf32>
    %73 = vector.multi_reduction <add>, %72, %cst_38 [2] : vector<16x16x16xf32> to vector<16x16xf32>
    %74 = vector.shape_cast %73 : vector<16x16xf32> to vector<16x16x1xf32>
    %cst_39 = arith.constant 1.600000e+01 : f32
    %75 = vector.broadcast %cst_39 : f32 to vector<16x16x1xf32>
    %76 = arith.divf %74, %75 : vector<16x16x1xf32>
    %77 = vector.broadcast %76 : vector<16x16x1xf32> to vector<16x16x16xf32>
    %78 = arith.cmpf oge, %72, %77 : vector<16x16x16xf32>
    %cst_40 = arith.constant 0.000000e+00 : f32
    %79 = vector.broadcast %cst_40 : f32 to vector<16x16x16xf32>
    %80 = arith.select %78, %72, %79 : vector<16x16x16xi1>, vector<16x16x16xf32>
    %cst_41 = arith.constant dense<0.000000e+00> : vector<16x16xf32>
    %81 = vector.multi_reduction <add>, %80, %cst_41 [2] : vector<16x16x16xf32> to vector<16x16xf32>
    %82 = vector.shape_cast %81 : vector<16x16xf32> to vector<16x16x1xf32>
    %83 = vector.broadcast %82 : vector<16x16x1xf32> to vector<16x16x16xf32>
    %84 = arith.divf %80, %83 : vector<16x16x16xf32>
    "tpu.trace_start"() <{level = 10 : i32, message = "bqk,bkd->bqd"}> : () -> ()
    %cst_42 = arith.constant dense<0.000000e+00> : vector<16x16x16xf32>
    %85 = tpu.matmul %84, %66, %cst_42 {dimension_numbers = #tpu.dot_dimension_numbers<[2], [1], [1], [2], [0, 0, 0, 1, 1, 2], [0], [0]>} : vector<16x16x16xf32>, vector<16x16x16xf32>, vector<16x16x16xf32> -> vector<16x16x16xf32>
    %cst_43 = arith.constant 0.000000e+00 : f32
    "tpu.trace_stop"() : () -> ()
    %86 = vector.broadcast %cst_43 : f32 to vector<128x32xf32>
    %87 = vector.extract_strided_slice %85 {offsets = [0, 0, 0], sizes = [8, 16, 16], strides = [1, 1, 1]} : vector<16x16x16xf32> to vector<8x16x16xf32>
    %88 = vector.shape_cast %87 : vector<8x16x16xf32> to vector<128x16xf32>
    %c0_44 = arith.constant 0 : index
    %c0_45 = arith.constant 0 : index
    %89 = vector.load %arg13[%c0_44, %c0_45] : memref<32x32xf32, #tpu.memory_space<vmem>>, vector<16x32xf32>
    %cst_46 = arith.constant dense<0.000000e+00> : vector<128x32xf32>
    %90 = tpu.matmul %88, %89, %cst_46 {dimension_numbers = #tpu.dot_dimension_numbers<[1], [0], [0], [1], [0, 0, 1, 1], [], []>} : vector<128x16xf32>, vector<16x32xf32>, vector<128x32xf32> -> vector<128x32xf32>
    %91 = arith.addf %86, %90 : vector<128x32xf32>
    %92 = vector.extract_strided_slice %85 {offsets = [8, 0, 0], sizes = [8, 16, 16], strides = [1, 1, 1]} : vector<16x16x16xf32> to vector<8x16x16xf32>
    %93 = vector.shape_cast %92 : vector<8x16x16xf32> to vector<128x16xf32>
    %c16 = arith.constant 16 : index
    %c0_47 = arith.constant 0 : index
    %94 = vector.load %arg13[%c16, %c0_47] : memref<32x32xf32, #tpu.memory_space<vmem>>, vector<16x32xf32>
    %cst_48 = arith.constant dense<0.000000e+00> : vector<128x32xf32>
    %95 = tpu.matmul %93, %94, %cst_48 {dimension_numbers = #tpu.dot_dimension_numbers<[1], [0], [0], [1], [0, 0, 1, 1], [], []>} : vector<128x16xf32>, vector<16x32xf32>, vector<128x32xf32> -> vector<128x32xf32>
    %96 = arith.addf %91, %95 : vector<128x32xf32>
    %97 = arith.addf %96, %45 : vector<128x32xf32>
    %c0_49 = arith.constant 0 : index
    %c0_50 = arith.constant 0 : index
    %98 = vector.load %arg14[%c0_49, %c0_50] : memref<1x32xf32, #tpu.memory_space<vmem>>, vector<1x32xf32>
    %c0_51 = arith.constant 0 : index
    %c0_52 = arith.constant 0 : index
    %99 = vector.load %arg15[%c0_51, %c0_52] : memref<1x32xf32, #tpu.memory_space<vmem>>, vector<1x32xf32>
    %cst_53 = arith.constant dense<0.000000e+00> : vector<128xf32>
    %100 = vector.multi_reduction <add>, %97, %cst_53 [1] : vector<128x32xf32> to vector<128xf32>
    %101 = vector.shape_cast %100 : vector<128xf32> to vector<128x1xf32>
    %cst_54 = arith.constant 3.200000e+01 : f32
    %102 = vector.broadcast %cst_54 : f32 to vector<128x1xf32>
    %103 = arith.divf %101, %102 : vector<128x1xf32>
    %104 = vector.broadcast %103 : vector<128x1xf32> to vector<128x32xf32>
    %105 = arith.subf %97, %104 : vector<128x32xf32>
    %106 = arith.mulf %105, %105 : vector<128x32xf32>
    %cst_55 = arith.constant dense<0.000000e+00> : vector<128xf32>
    %107 = vector.multi_reduction <add>, %106, %cst_55 [1] : vector<128x32xf32> to vector<128xf32>
    %108 = vector.shape_cast %107 : vector<128xf32> to vector<128x1xf32>
    %cst_56 = arith.constant 3.200000e+01 : f32
    %109 = vector.broadcast %cst_56 : f32 to vector<128x1xf32>
    %110 = arith.divf %108, %109 : vector<128x1xf32>
    %111 = vector.broadcast %103 : vector<128x1xf32> to vector<128x32xf32>
    %112 = arith.subf %97, %111 : vector<128x32xf32>
    %cst_57 = arith.constant 9.99999997E-7 : f32
    %113 = vector.broadcast %cst_57 : f32 to vector<128x1xf32>
    %114 = arith.addf %110, %113 : vector<128x1xf32>
    %115 = math.rsqrt %114 : vector<128x1xf32>
    %116 = vector.broadcast %115 : vector<128x1xf32> to vector<128x32xf32>
    %117 = arith.mulf %112, %116 : vector<128x32xf32>
    %118 = vector.broadcast %98 : vector<1x32xf32> to vector<128x32xf32>
    %119 = arith.mulf %117, %118 : vector<128x32xf32>
    %120 = vector.broadcast %99 : vector<1x32xf32> to vector<128x32xf32>
    %121 = arith.addf %119, %120 : vector<128x32xf32>
    %122 = arith.negf %121 : vector<128x32xf32>
    %123 = math.exp %122 : vector<128x32xf32>
    %cst_58 = arith.constant 1.000000e+00 : f32
    %124 = vector.broadcast %cst_58 : f32 to vector<128x32xf32>
    %125 = arith.addf %124, %123 : vector<128x32xf32>
    %126 = arith.divf %124, %125 : vector<128x32xf32>
    %127 = arith.mulf %45, %126 : vector<128x32xf32>
    %128 = arith.addf %29, %127 : vector<128x32xf32>
    %c0_59 = arith.constant 0 : index
    %c0_60 = arith.constant 0 : index
    %129 = vector.load %arg16[%c0_59, %c0_60] : memref<128x32xf32, #tpu.memory_space<vmem>>, vector<128x32xf32>
    tpu.vector_store %arg16[%c0_59, %c0_60], %128 {strides = array<i32>} : memref<128x32xf32, #tpu.memory_space<vmem>>, vector<128x32xf32>,
    return
  }
  func.func @transform_0(%arg0: i32) -> (i32, i32, i32) {
    %c0_i32 = arith.constant 0 : i32
    %c0_i32_0 = arith.constant 0 : i32
    %c0_i32_1 = arith.constant 0 : i32
    return %arg0, %c0_i32, %c0_i32_0 : i32, i32, i32
  }
  func.func @transform_1(%arg0: i32) -> (i32, i32, i32) {
    %c0_i32 = arith.constant 0 : i32
    %c0_i32_0 = arith.constant 0 : i32
    %c0_i32_1 = arith.constant 0 : i32
    return %arg0, %c0_i32, %c0_i32_0 : i32, i32, i32
  }
  func.func @transform_2(%arg0: i32) -> (i32, i32, i32) {
    %c0_i32 = arith.constant 0 : i32
    %c0_i32_0 = arith.constant 0 : i32
    %c0_i32_1 = arith.constant 0 : i32
    return %arg0, %c0_i32, %c0_i32_0 : i32, i32, i32
  }
  func.func @transform_3(%arg0: i32) -> (i32, i32) {
    %c0_i32 = arith.constant 0 : i32
    %c0_i32_0 = arith.constant 0 : i32
    %c0_i32_1 = arith.constant 0 : i32
    return %c0_i32, %c0_i32_0 : i32, i32
  }
  func.func @transform_4(%arg0: i32) -> (i32, i32) {
    %c0_i32 = arith.constant 0 : i32
    %c0_i32_0 = arith.constant 0 : i32
    %c0_i32_1 = arith.constant 0 : i32
    return %c0_i32, %c0_i32_0 : i32, i32
  }
  func.func @transform_5(%arg0: i32) -> (i32, i32) {
    %c0_i32 = arith.constant 0 : i32
    %c0_i32_0 = arith.constant 0 : i32
    %c0_i32_1 = arith.constant 0 : i32
    return %c0_i32, %c0_i32_0 : i32, i32
  }
  func.func @transform_6(%arg0: i32) -> (i32, i32) {
    %c0_i32 = arith.constant 0 : i32
    %c0_i32_0 = arith.constant 0 : i32
    %c0_i32_1 = arith.constant 0 : i32
    return %c0_i32, %c0_i32_0 : i32, i32
  }
  func.func @transform_7(%arg0: i32) -> (i32, i32) {
    %c0_i32 = arith.constant 0 : i32
    %c0_i32_0 = arith.constant 0 : i32
    %c0_i32_1 = arith.constant 0 : i32
    return %c0_i32, %c0_i32_0 : i32, i32
  }
  func.func @transform_8(%arg0: i32) -> (i32, i32) {
    %c0_i32 = arith.constant 0 : i32
    %c0_i32_0 = arith.constant 0 : i32
    %c0_i32_1 = arith.constant 0 : i32
    return %c0_i32, %c0_i32_0 : i32, i32
  }
  func.func @transform_9(%arg0: i32) -> (i32, i32) {
    %c0_i32 = arith.constant 0 : i32
    %c0_i32_0 = arith.constant 0 : i32
    %c0_i32_1 = arith.constant 0 : i32
    return %c0_i32, %c0_i32_0 : i32, i32
  }
  func.func @transform_10(%arg0: i32) -> (i32, i32) {
    %c0_i32 = arith.constant 0 : i32
    %c0_i32_0 = arith.constant 0 : i32
    %c0_i32_1 = arith.constant 0 : i32
    return %c0_i32, %c0_i32_0 : i32, i32
  }
  func.func @transform_11(%arg0: i32) -> (i32, i32) {
    %c0_i32 = arith.constant 0 : i32
    %c0_i32_0 = arith.constant 0 : i32
    %c0_i32_1 = arith.constant 0 : i32
    return %c0_i32, %c0_i32_0 : i32, i32
  }
  func.func @transform_12(%arg0: i32) -> (i32, i32) {
    %c0_i32 = arith.constant 0 : i32
    %c0_i32_0 = arith.constant 0 : i32
    %c0_i32_1 = arith.constant 0 : i32
    return %c0_i32, %c0_i32_0 : i32, i32
  }
  func.func @transform_13(%arg0: i32) -> (i32, i32) {
    %c0_i32 = arith.constant 0 : i32
    %c0_i32_0 = arith.constant 0 : i32
    %c0_i32_1 = arith.constant 0 : i32
    return %c0_i32, %c0_i32_0 : i32, i32
  }
  func.func @transform_14(%arg0: i32) -> (i32, i32) {
    %c0_i32 = arith.constant 0 : i32
    %c0_i32_0 = arith.constant 0 : i32
    %c0_i32_1 = arith.constant 0 : i32
    return %c0_i32, %c0_i32_0 : i32, i32
  }
  func.func @transform_15(%arg0: i32) -> (i32, i32) {
    %c0_i32 = arith.constant 0 : i32
    %c0_i32_0 = arith.constant 0 : i32
    return %arg0, %c0_i32 : i32, i32
  }
}

</mosaic_0001>

<llo_original>
// kernel: tpu_custom_call.1
$region0: #{tpu_custom_call.1}
  #allocation0 [shape = 'u32[]', space=smem, size = 0x4, offset = 0x4, fixed_abs, tag = 'smem constant byte address 0x4 - core index']
  #allocation1 [shape = 'u32[144,128]{1,0:T(1,128)}', space=vmem, size = 0x12000, scoped, tag = 'internal scratch']
  %s0 = inlined_call_operand.hbm [shape: f32[16,16,32], index: 0, kind: input, shape index: {}]
  %s1 = inlined_call_operand.hbm [shape: f32[16,16,32], index: 1, kind: input, shape index: {}]
  %s2 = inlined_call_operand.hbm [shape: f32[16,16,32], index: 2, kind: input, shape index: {}]
  %s3 = inlined_call_operand.vmem [shape: f32[1,32], index: 3, kind: input, shape index: {}]
  %s4 = inlined_call_operand.vmem [shape: f32[1,32], index: 4, kind: input, shape index: {}]
  %s5 = inlined_call_operand.hbm [shape: f32[32,32], index: 5, kind: input, shape index: {}]
  %s6 = inlined_call_operand.vmem [shape: f32[1,32], index: 6, kind: input, shape index: {}]
  %s7 = inlined_call_operand.hbm [shape: f32[32,32], index: 7, kind: input, shape index: {}]
  %s8 = inlined_call_operand.vmem [shape: f32[1,32], index: 8, kind: input, shape index: {}]
  %s9 = inlined_call_operand.hbm [shape: f32[32,32], index: 9, kind: input, shape index: {}]
  %s10 = inlined_call_operand.hbm [shape: f32[32,32], index: 10, kind: input, shape index: {}]
  %s11 = inlined_call_operand.hbm [shape: f32[32,32], index: 11, kind: input, shape index: {}]
  %s12 = inlined_call_operand.hbm [shape: f32[32,32], index: 12, kind: input, shape index: {}]
  %s13 = inlined_call_operand.vmem [shape: f32[1,32], index: 13, kind: input, shape index: {}]
  %s14 = inlined_call_operand.vmem [shape: f32[1,32], index: 14, kind: input, shape index: {}]
  %s15 = inlined_call_operand.vmem [shape: f32[256,32], index: 15, kind: output, shape index: {}]
  %s16 = sld [smem:[#allocation0]]
  $region129: #{tpu_custom_call.1} parent=0
    _
  %s18 = ssub.s32 1, %s16
  %s19 = scalar_select 0, %s18, %s16
  $region1: #{tpu_custom_call.1} parent=0
    #allocation2 [shape = 'u8[131072]{0}', space=vmem, size = 0x20000, scoped, tag = 'input window, operand 0']
    #allocation3 [shape = 's32[2]{0}', space=sflag, size = 0x8, scoped, tag = 'scoped memory for tpu_custom_call.1']
    #allocation4 [shape = 'u8[131072]{0}', space=vmem, size = 0x20000, scoped, tag = 'input window, operand 1']
    #allocation5 [shape = 's32[2]{0}', space=sflag, size = 0x8, scoped, tag = 'scoped memory for tpu_custom_call.1']
    #allocation6 [shape = 'u8[131072]{0}', space=vmem, size = 0x20000, scoped, tag = 'input window, operand 2']
    #allocation7 [shape = 'u8[16384]{0}', space=vmem, size = 0x4000, scoped, tag = 'input window, operand 5, single buffered']
    #allocation8 [shape = 's32[1]{0}', space=sflag, size = 0x4, scoped, tag = 'scoped memory for tpu_custom_call.1']
    #allocation9 [shape = 'u8[16384]{0}', space=vmem, size = 0x4000, scoped, tag = 'input window, operand 7, single buffered']
    #allocation10 [shape = 'u8[16384]{0}', space=vmem, size = 0x4000, scoped, tag = 'input window, operand 9, single buffered']
    #allocation11 [shape = 's32[1]{0}', space=sflag, size = 0x4, scoped, tag = 'scoped memory for tpu_custom_call.1']
    #allocation12 [shape = 'u8[16384]{0}', space=vmem, size = 0x4000, scoped, tag = 'input window, operand 10, single buffered']
    #allocation13 [shape = 'u8[16384]{0}', space=vmem, size = 0x4000, scoped, tag = 'input window, operand 11, single buffered']
    #allocation14 [shape = 's32[1]{0}', space=sflag, size = 0x4, scoped, tag = 'scoped memory for tpu_custom_call.1']
    #allocation15 [shape = 'u8[16384]{0}', space=vmem, size = 0x4000, scoped, tag = 'input window, operand 12, single buffered']
    %20 = vsyncpa [#allocation3], 0
    %s21 = scalar_lea.sflag [#allocation3], 1
    %22 = vsyncpa %s21, 0
    %23 = vsyncpa [#allocation5], 0
    %s24 = scalar_lea.sflag [#allocation5], 1
    %25 = vsyncpa %s24, 0
    %26 = vsyncpa [#allocation8], 0
    %27 = vsyncpa [#allocation11], 0
    %28 = vsyncpa [#allocation14], 0
    loop: start=0, step=1, limit=4
    $region2: #{tpu_custom_call.1} parent=1 // loop_pre_header
      _
    $region3: #{tpu_custom_call.1} parent=1 // loop_header
      %s30 = sphi 0, %s34
      %p31 = scmp.ge.s32.totalorder %s30, 4
      %s40 = sphi 0, %s42
      %s43 = sphi 0, %s40
      %s44 = sphi 0, %s43
      %s60 = sphi 0, %s44
      %s66 = sphi 0, %s68
      %s69 = sphi 0, %s66
      %s70 = sphi 0, %s69
      %s86 = sphi 0, %s70
      %s92 = sphi 0, %s94
      %s95 = sphi 0, %s92
      %s96 = sphi 0, %s95
      %s112 = sphi 0, %s96
      %s116 = sphi 0, %s116
      %s118 = sphi 0, %s116
      %s119 = sphi 0, %s118
      %s133 = sphi 0, %s119
      %s137 = sphi 0, %s137
      %s139 = sphi 0, %s137
      %s140 = sphi 0, %s139
      %s154 = sphi 0, %s140
      %s158 = sphi 0, %s158
      %s160 = sphi 0, %s158
      %s161 = sphi 0, %s160
      %s175 = sphi 0, %s161
      %s179 = sphi 0, %s179
      %s181 = sphi 0, %s179
      %s182 = sphi 0, %s181
      %s196 = sphi 0, %s182
      %s200 = sphi 0, %s200
      %s202 = sphi 0, %s200
      %s203 = sphi 0, %s202
      %s217 = sphi 0, %s203
      %s221 = sphi 0, %s221
      %s223 = sphi 0, %s221
      %s224 = sphi 0, %s223
      %s238 = sphi 0, %s224
      %s242 = sphi 0, %s242
      %s244 = sphi 0, %s242
      %s245 = sphi 0, %s244
      %s259 = sphi 0, %s245
      %s263 = sphi 0, %s263
      %s265 = sphi 0, %s263
      %s266 = sphi 0, %s265
      %s280 = sphi 0, %s266
      %s284 = sphi 0, %s284
      %s286 = sphi 0, %s284
      %s287 = sphi 0, %s286
      %s301 = sphi 0, %s287
      %s305 = sphi 0, %s305
      %s307 = sphi 0, %s305
      %s308 = sphi 0, %s307
      %s322 = sphi 0, %s308
      %s326 = sphi 0, %s326
      %s328 = sphi 0, %s326
      %s329 = sphi 0, %s328
      %s343 = sphi 0, %s329
      %s347 = sphi 0, %s347
      %s349 = sphi 0, %s347
      %s350 = sphi 0, %s349
      %s364 = sphi 0, %s350
      %s370 = sphi 0, %s372
      %s373 = sphi 0, %s370
      %s374 = sphi 0, %s373
      %s390 = sphi 0, %s374
    $region4: #{tpu_custom_call.1} parent=1 // loop_header_branch
      %33 = sbr.rel (%p31) target = $region8
    $region5: #{tpu_custom_call.1} parent=1 // loop_body
      %s35 = ssub.s32 %s30, 1
      %s36 = ssub.s32 %s30, 2
      %s37 = sadd.s32 %s30, 1
      %s38 = ssub.s32 %s30, %s37
      %p39 = scmp.eq.s32.totalorder %s38, 0
      %s41 = sadd.s32 %s40, 1
      %s42 = scalar_select %p39, %s40, %s41
      %p45 = pneg %p39
      %p46 = scmp.eq.s32.totalorder %s30, 1
      %p47 = por %p45, %p46
      %p48 = scmp.ne.s32.totalorder %s40, %s43
      %p49 = scmp.eq.s32.totalorder %s30, 0
      %p50 = por %p48, %p49
      %p51 = scmp.ne.s32.totalorder %s40, %s43
      %p52 = scmp.eq.s32.totalorder %s35, 1
      %p53 = por %p51, %p52
      %p54 = scmp.ne.s32.totalorder %s43, %s44
      %p55 = scmp.eq.s32.totalorder %s35, 0
      %p56 = por %p54, %p55
      %p57 = scmp.ne.s32.totalorder %s43, %s44
      %p58 = scmp.eq.s32.totalorder %s36, 1
      %p59 = por %p57, %p58
      %p61 = scmp.ne.s32.totalorder %s44, %s60
      %p62 = scmp.eq.s32.totalorder %s36, 0
      %p63 = por %p61, %p62
      %s64 = ssub.s32 %s30, %s37
      %p65 = scmp.eq.s32.totalorder %s64, 0
      %s67 = sadd.s32 %s66, 1
      %s68 = scalar_select %p65, %s66, %s67
      %p71 = pneg %p65
      %p72 = scmp.eq.s32.totalorder %s30, 1
      %p73 = por %p71, %p72
      %p74 = scmp.ne.s32.totalorder %s66, %s69
      %p75 = scmp.eq.s32.totalorder %s30, 0
      %p76 = por %p74, %p75
      %p77 = scmp.ne.s32.totalorder %s66, %s69
      %p78 = scmp.eq.s32.totalorder %s35, 1
      %p79 = por %p77, %p78
      %p80 = scmp.ne.s32.totalorder %s69, %s70
      %p81 = scmp.eq.s32.totalorder %s35, 0
      %p82 = por %p80, %p81
      %p83 = scmp.ne.s32.totalorder %s69, %s70
      %p84 = scmp.eq.s32.totalorder %s36, 1
      %p85 = por %p83, %p84
      %p87 = scmp.ne.s32.totalorder %s70, %s86
      %p88 = scmp.eq.s32.totalorder %s36, 0
      %p89 = por %p87, %p88
      %s90 = ssub.s32 %s30, %s37
      %p91 = scmp.eq.s32.totalorder %s90, 0
      %s93 = sadd.s32 %s92, 1
      %s94 = scalar_select %p91, %s92, %s93
      %p97 = pneg %p91
      %p98 = scmp.eq.s32.totalorder %s30, 1
      %p99 = por %p97, %p98
      %p100 = scmp.ne.s32.totalorder %s92, %s95
      %p101 = scmp.eq.s32.totalorder %s30, 0
      %p102 = por %p100, %p101
      %p103 = scmp.ne.s32.totalorder %s92, %s95
      %p104 = scmp.eq.s32.totalorder %s35, 1
      %p105 = por %p103, %p104
      %p106 = scmp.ne.s32.totalorder %s95, %s96
      %p107 = scmp.eq.s32.totalorder %s35, 0
      %p108 = por %p106, %p107
      %p109 = scmp.ne.s32.totalorder %s95, %s96
      %p110 = scmp.eq.s32.totalorder %s36, 1
      %p111 = por %p109, %p110
      %p113 = scmp.ne.s32.totalorder %s96, %s112
      %p114 = scmp.eq.s32.totalorder %s36, 0
      %p115 = por %p113, %p114
      %s117 = sadd.s32 %s116, 1
      %p120 = scmp.eq.s32.totalorder %s30, 1
      %p121 = scmp.ne.s32.totalorder %s116, %s118
      %p122 = scmp.eq.s32.totalorder %s30, 0
      %p123 = por %p121, %p122
      %p124 = scmp.ne.s32.totalorder %s116, %s118
      %p125 = scmp.eq.s32.totalorder %s35, 1
      %p126 = por %p124, %p125
      %p127 = scmp.ne.s32.totalorder %s118, %s119
      %p128 = scmp.eq.s32.totalorder %s35, 0
      %p129 = por %p127, %p128
      %p130 = scmp.ne.s32.totalorder %s118, %s119
      %p131 = scmp.eq.s32.totalorder %s36, 1
      %p132 = por %p130, %p131
      %p134 = scmp.ne.s32.totalorder %s119, %s133
      %p135 = scmp.eq.s32.totalorder %s36, 0
      %p136 = por %p134, %p135
      %s138 = sadd.s32 %s137, 1
      %p141 = scmp.eq.s32.totalorder %s30, 1
      %p142 = scmp.ne.s32.totalorder %s137, %s139
      %p143 = scmp.eq.s32.totalorder %s30, 0
      %p144 = por %p142, %p143
      %p145 = scmp.ne.s32.totalorder %s137, %s139
      %p146 = scmp.eq.s32.totalorder %s35, 1
      %p147 = por %p145, %p146
      %p148 = scmp.ne.s32.totalorder %s139, %s140
      %p149 = scmp.eq.s32.totalorder %s35, 0
      %p150 = por %p148, %p149
      %p151 = scmp.ne.s32.totalorder %s139, %s140
      %p152 = scmp.eq.s32.totalorder %s36, 1
      %p153 = por %p151, %p152
      %p155 = scmp.ne.s32.totalorder %s140, %s154
      %p156 = scmp.eq.s32.totalorder %s36, 0
      %p157 = por %p155, %p156
      %s159 = sadd.s32 %s158, 1
      %p162 = scmp.eq.s32.totalorder %s30, 1
      %p163 = scmp.ne.s32.totalorder %s158, %s160
      %p164 = scmp.eq.s32.totalorder %s30, 0
      %p165 = por %p163, %p164
      %p166 = scmp.ne.s32.totalorder %s158, %s160
      %p167 = scmp.eq.s32.totalorder %s35, 1
      %p168 = por %p166, %p167
      %p169 = scmp.ne.s32.totalorder %s160, %s161
      %p170 = scmp.eq.s32.totalorder %s35, 0
      %p171 = por %p169, %p170
      %p172 = scmp.ne.s32.totalorder %s160, %s161
      %p173 = scmp.eq.s32.totalorder %s36, 1
      %p174 = por %p172, %p173
      %p176 = scmp.ne.s32.totalorder %s161, %s175
      %p177 = scmp.eq.s32.totalorder %s36, 0
      %p178 = por %p176, %p177
      %s180 = sadd.s32 %s179, 1
      %p183 = scmp.eq.s32.totalorder %s30, 1
      %p184 = scmp.ne.s32.totalorder %s179, %s181
      %p185 = scmp.eq.s32.totalorder %s30, 0
      %p186 = por %p184, %p185
      %p187 = scmp.ne.s32.totalorder %s179, %s181
      %p188 = scmp.eq.s32.totalorder %s35, 1
      %p189 = por %p187, %p188
      %p190 = scmp.ne.s32.totalorder %s181, %s182
      %p191 = scmp.eq.s32.totalorder %s35, 0
      %p192 = por %p190, %p191
      %p193 = scmp.ne.s32.totalorder %s181, %s182
      %p194 = scmp.eq.s32.totalorder %s36, 1
      %p195 = por %p193, %p194
      %p197 = scmp.ne.s32.totalorder %s182, %s196
      %p198 = scmp.eq.s32.totalorder %s36, 0
      %p199 = por %p197, %p198
      %s201 = sadd.s32 %s200, 1
      %p204 = scmp.eq.s32.totalorder %s30, 1
      %p205 = scmp.ne.s32.totalorder %s200, %s202
      %p206 = scmp.eq.s32.totalorder %s30, 0
      %p207 = por %p205, %p206
      %p208 = scmp.ne.s32.totalorder %s200, %s202
      %p209 = scmp.eq.s32.totalorder %s35, 1
      %p210 = por %p208, %p209
      %p211 = scmp.ne.s32.totalorder %s202, %s203
      %p212 = scmp.eq.s32.totalorder %s35, 0
      %p213 = por %p211, %p212
      %p214 = scmp.ne.s32.totalorder %s202, %s203
      %p215 = scmp.eq.s32.totalorder %s36, 1
      %p216 = por %p214, %p215
      %p218 = scmp.ne.s32.totalorder %s203, %s217
      %p219 = scmp.eq.s32.totalorder %s36, 0
      %p220 = por %p218, %p219
      %s222 = sadd.s32 %s221, 1
      %p225 = scmp.eq.s32.totalorder %s30, 1
      %p226 = scmp.ne.s32.totalorder %s221, %s223
      %p227 = scmp.eq.s32.totalorder %s30, 0
      %p228 = por %p226, %p227
      %p229 = scmp.ne.s32.totalorder %s221, %s223
      %p230 = scmp.eq.s32.totalorder %s35, 1
      %p231 = por %p229, %p230
      %p232 = scmp.ne.s32.totalorder %s223, %s224
      %p233 = scmp.eq.s32.totalorder %s35, 0
      %p234 = por %p232, %p233
      %p235 = scmp.ne.s32.totalorder %s223, %s224
      %p236 = scmp.eq.s32.totalorder %s36, 1
      %p237 = por %p235, %p236
      %p239 = scmp.ne.s32.totalorder %s224, %s238
      %p240 = scmp.eq.s32.totalorder %s36, 0
      %p241 = por %p239, %p240
      %s243 = sadd.s32 %s242, 1
      %p246 = scmp.eq.s32.totalorder %s30, 1
      %p247 = scmp.ne.s32.totalorder %s242, %s244
      %p248 = scmp.eq.s32.totalorder %s30, 0
      %p249 = por %p247, %p248
      %p250 = scmp.ne.s32.totalorder %s242, %s244
      %p251 = scmp.eq.s32.totalorder %s35, 1
      %p252 = por %p250, %p251
      %p253 = scmp.ne.s32.totalorder %s244, %s245
      %p254 = scmp.eq.s32.totalorder %s35, 0
      %p255 = por %p253, %p254
      %p256 = scmp.ne.s32.totalorder %s244, %s245
      %p257 = scmp.eq.s32.totalorder %s36, 1
      %p258 = por %p256, %p257
      %p260 = scmp.ne.s32.totalorder %s245, %s259
      %p261 = scmp.eq.s32.totalorder %s36, 0
      %p262 = por %p260, %p261
      %s264 = sadd.s32 %s263, 1
      %p267 = scmp.eq.s32.totalorder %s30, 1
      %p268 = scmp.ne.s32.totalorder %s263, %s265
      %p269 = scmp.eq.s32.totalorder %s30, 0
      %p270 = por %p268, %p269
      %p271 = scmp.ne.s32.totalorder %s263, %s265
      %p272 = scmp.eq.s32.totalorder %s35, 1
      %p273 = por %p271, %p272
      %p274 = scmp.ne.s32.totalorder %s265, %s266
      %p275 = scmp.eq.s32.totalorder %s35, 0
      %p276 = por %p274, %p275
      %p277 = scmp.ne.s32.totalorder %s265, %s266
      %p278 = scmp.eq.s32.totalorder %s36, 1
      %p279 = por %p277, %p278
      %p281 = scmp.ne.s32.totalorder %s266, %s280
      %p282 = scmp.eq.s32.totalorder %s36, 0
      %p283 = por %p281, %p282
      %s285 = sadd.s32 %s284, 1
      %p288 = scmp.eq.s32.totalorder %s30, 1
      %p289 = scmp.ne.s32.totalorder %s284, %s286
      %p290 = scmp.eq.s32.totalorder %s30, 0
      %p291 = por %p289, %p290
      %p292 = scmp.ne.s32.totalorder %s284, %s286
      %p293 = scmp.eq.s32.totalorder %s35, 1
      %p294 = por %p292, %p293
      %p295 = scmp.ne.s32.totalorder %s286, %s287
      %p296 = scmp.eq.s32.totalorder %s35, 0
      %p297 = por %p295, %p296
      %p298 = scmp.ne.s32.totalorder %s286, %s287
      %p299 = scmp.eq.s32.totalorder %s36, 1
      %p300 = por %p298, %p299
      %p302 = scmp.ne.s32.totalorder %s287, %s301
      %p303 = scmp.eq.s32.totalorder %s36, 0
      %p304 = por %p302, %p303
      %s306 = sadd.s32 %s305, 1
      %p309 = scmp.eq.s32.totalorder %s30, 1
      %p310 = scmp.ne.s32.totalorder %s305, %s307
      %p311 = scmp.eq.s32.totalorder %s30, 0
      %p312 = por %p310, %p311
      %p313 = scmp.ne.s32.totalorder %s305, %s307
      %p314 = scmp.eq.s32.totalorder %s35, 1
      %p315 = por %p313, %p314
      %p316 = scmp.ne.s32.totalorder %s307, %s308
      %p317 = scmp.eq.s32.totalorder %s35, 0
      %p318 = por %p316, %p317
      %p319 = scmp.ne.s32.totalorder %s307, %s308
      %p320 = scmp.eq.s32.totalorder %s36, 1
      %p321 = por %p319, %p320
      %p323 = scmp.ne.s32.totalorder %s308, %s322
      %p324 = scmp.eq.s32.totalorder %s36, 0
      %p325 = por %p323, %p324
      %s327 = sadd.s32 %s326, 1
      %p330 = scmp.eq.s32.totalorder %s30, 1
      %p331 = scmp.ne.s32.totalorder %s326, %s328
      %p332 = scmp.eq.s32.totalorder %s30, 0
      %p333 = por %p331, %p332
      %p334 = scmp.ne.s32.totalorder %s326, %s328
      %p335 = scmp.eq.s32.totalorder %s35, 1
      %p336 = por %p334, %p335
      %p337 = scmp.ne.s32.totalorder %s328, %s329
      %p338 = scmp.eq.s32.totalorder %s35, 0
      %p339 = por %p337, %p338
      %p340 = scmp.ne.s32.totalorder %s328, %s329
      %p341 = scmp.eq.s32.totalorder %s36, 1
      %p342 = por %p340, %p341
      %p344 = scmp.ne.s32.totalorder %s329, %s343
      %p345 = scmp.eq.s32.totalorder %s36, 0
      %p346 = por %p344, %p345
      %s348 = sadd.s32 %s347, 1
      %p351 = scmp.eq.s32.totalorder %s30, 1
      %p352 = scmp.ne.s32.totalorder %s347, %s349
      %p353 = scmp.eq.s32.totalorder %s30, 0
      %p354 = por %p352, %p353
      %p355 = scmp.ne.s32.totalorder %s347, %s349
      %p356 = scmp.eq.s32.totalorder %s35, 1
      %p357 = por %p355, %p356
      %p358 = scmp.ne.s32.totalorder %s349, %s350
      %p359 = scmp.eq.s32.totalorder %s35, 0
      %p360 = por %p358, %p359
      %p361 = scmp.ne.s32.totalorder %s349, %s350
      %p362 = scmp.eq.s32.totalorder %s36, 1
      %p363 = por %p361, %p362
      %p365 = scmp.ne.s32.totalorder %s350, %s364
      %p366 = scmp.eq.s32.totalorder %s36, 0
      %p367 = por %p365, %p366
      %s368 = ssub.s32 %s30, %s37
      %p369 = scmp.eq.s32.totalorder %s368, 0
      %s371 = sadd.s32 %s370, 1
      %s372 = scalar_select %p369, %s370, %s371
      %p375 = pneg %p369
      %p376 = scmp.eq.s32.totalorder %s30, 1
      %p377 = por %p375, %p376
      %p378 = scmp.ne.s32.totalorder %s370, %s373
      %p379 = scmp.eq.s32.totalorder %s30, 0
      %p380 = por %p378, %p379
      %p381 = scmp.ne.s32.totalorder %s370, %s373
      %p382 = scmp.eq.s32.totalorder %s35, 1
      %p383 = por %p381, %p382
      %p384 = scmp.ne.s32.totalorder %s373, %s374
      %p385 = scmp.eq.s32.totalorder %s35, 0
      %p386 = por %p384, %p385
      %p387 = scmp.ne.s32.totalorder %s373, %s374
      %p388 = scmp.eq.s32.totalorder %s36, 1
      %p389 = por %p387, %p388
      %p391 = scmp.ne.s32.totalorder %s374, %s390
      %p392 = scmp.eq.s32.totalorder %s36, 0
      %p393 = por %p391, %p392
      %p394 = scmp.le.s32.totalorder 1, %s30
      %p395 = scmp.lt.s32.totalorder %s30, 3
      %p396 = pnand %p394, %p395
      %p397 = pneg %p396
      // Predicated region
      $region9: #{tpu_custom_call.1} parent=5 // pred_check
        _
      $region10: #{tpu_custom_call.1} parent=5 // pred_check_branch
        %399 = sbr.rel (%p396) target = $region12
      $region11: #{tpu_custom_call.1} parent=5 // pred_region
        %s400 = ssub.s32 %s30, 1
        // Predicated region
        $region13: #{tpu_custom_call.1} parent=11 // pred_check
          %p401 = pneg %p129
        $region14: #{tpu_custom_call.1} parent=11 // pred_check_branch
          %403 = sbr.rel (%p401) target = $region16
        $region15: #{tpu_custom_call.1} parent=11 // pred_region
          _
        $region16: #{tpu_custom_call.1} parent=11 // pred_fallthru
          _
        // Predicated region
        $region17: #{tpu_custom_call.1} parent=11 // pred_check
          %p404 = pneg %p150
        $region18: #{tpu_custom_call.1} parent=11 // pred_check_branch
          %406 = sbr.rel (%p404) target = $region20
        $region19: #{tpu_custom_call.1} parent=11 // pred_region
          _
        $region20: #{tpu_custom_call.1} parent=11 // pred_fallthru
          _
        // Predicated region
        $region21: #{tpu_custom_call.1} parent=11 // pred_check
          %p407 = pneg %p171
        $region22: #{tpu_custom_call.1} parent=11 // pred_check_branch
          %409 = sbr.rel (%p407) target = $region24
        $region23: #{tpu_custom_call.1} parent=11 // pred_region
          %s411 = ssub.s32 512, 512
          %412 = vsyncadd [#allocation8], %s411
          %s413 = sshll.u32 [#allocation7], 4
          %s414 = int_to_ptr.vmem [resolvable:$true] %s413
          %419 = dma.hbm_to_vmem [thread:$0]  %s5, 512, %s414, [#allocation8], 128, 128, 8
        $region24: #{tpu_custom_call.1} parent=11 // pred_fallthru
          _
        // Predicated region
        $region25: #{tpu_custom_call.1} parent=11 // pred_check
          %p420 = pneg %p192
        $region26: #{tpu_custom_call.1} parent=11 // pred_check_branch
          %422 = sbr.rel (%p420) target = $region28
        $region27: #{tpu_custom_call.1} parent=11 // pred_region
          _
        $region28: #{tpu_custom_call.1} parent=11 // pred_fallthru
          _
        // Predicated region
        $region29: #{tpu_custom_call.1} parent=11 // pred_check
          %p423 = pneg %p213
        $region30: #{tpu_custom_call.1} parent=11 // pred_check_branch
          %425 = sbr.rel (%p423) target = $region32
        $region31: #{tpu_custom_call.1} parent=11 // pred_region
          %s427 = ssub.s32 512, 512
          %428 = vsyncadd [#allocation8], %s427
          %s429 = sshll.u32 [#allocation9], 4
          %s430 = int_to_ptr.vmem [resolvable:$true] %s429
          %435 = dma.hbm_to_vmem [thread:$0]  %s7, 512, %s430, [#allocation8], 128, 128, 8
        $region32: #{tpu_custom_call.1} parent=11 // pred_fallthru
          _
        // Predicated region
        $region33: #{tpu_custom_call.1} parent=11 // pred_check
          %p436 = pneg %p234
        $region34: #{tpu_custom_call.1} parent=11 // pred_check_branch
          %438 = sbr.rel (%p436) target = $region36
        $region35: #{tpu_custom_call.1} parent=11 // pred_region
          _
        $region36: #{tpu_custom_call.1} parent=11 // pred_fallthru
          _
        // Predicated region
        $region37: #{tpu_custom_call.1} parent=11 // pred_check
          %p439 = pneg %p255
        $region38: #{tpu_custom_call.1} parent=11 // pred_check_branch
          %441 = sbr.rel (%p439) target = $region40
        $region39: #{tpu_custom_call.1} parent=11 // pred_region
          %s443 = ssub.s32 512, 512
          %444 = vsyncadd [#allocation11], %s443
          %s445 = sshll.u32 [#allocation10], 4
          %s446 = int_to_ptr.vmem [resolvable:$true] %s445
          %451 = dma.hbm_to_vmem [thread:$0]  %s9, 512, %s446, [#allocation11], 128, 128, 8
        $region40: #{tpu_custom_call.1} parent=11 // pred_fallthru
          _
        // Predicated region
        $region41: #{tpu_custom_call.1} parent=11 // pred_check
          %p452 = pneg %p276
        $region42: #{tpu_custom_call.1} parent=11 // pred_check_branch
          %454 = sbr.rel (%p452) target = $region44
        $region43: #{tpu_custom_call.1} parent=11 // pred_region
          %s456 = ssub.s32 512, 512
          %457 = vsyncadd [#allocation11], %s456
          %s458 = sshll.u32 [#allocation12], 4
          %s459 = int_to_ptr.vmem [resolvable:$true] %s458
          %464 = dma.hbm_to_vmem [thread:$0]  %s10, 512, %s459, [#allocation11], 128, 128, 8
        $region44: #{tpu_custom_call.1} parent=11 // pred_fallthru
          _
        // Predicated region
        $region45: #{tpu_custom_call.1} parent=11 // pred_check
          %p465 = pneg %p297
        $region46: #{tpu_custom_call.1} parent=11 // pred_check_branch
          %467 = sbr.rel (%p465) target = $region48
        $region47: #{tpu_custom_call.1} parent=11 // pred_region
          %s469 = ssub.s32 512, 512
          %470 = vsyncadd [#allocation14], %s469
          %s471 = sshll.u32 [#allocation13], 4
          %s472 = int_to_ptr.vmem [resolvable:$true] %s471
          %477 = dma.hbm_to_vmem [thread:$0]  %s11, 512, %s472, [#allocation14], 128, 128, 8
        $region48: #{tpu_custom_call.1} parent=11 // pred_fallthru
          _
        // Predicated region
        $region49: #{tpu_custom_call.1} parent=11 // pred_check
          %p478 = pneg %p318
        $region50: #{tpu_custom_call.1} parent=11 // pred_check_branch
          %480 = sbr.rel (%p478) target = $region52
        $region51: #{tpu_custom_call.1} parent=11 // pred_region
          %s482 = ssub.s32 512, 512
          %483 = vsyncadd [#allocation14], %s482
          %s484 = sshll.u32 [#allocation15], 4
          %s485 = int_to_ptr.vmem [resolvable:$true] %s484
          %490 = dma.hbm_to_vmem [thread:$0]  %s12, 512, %s485, [#allocation14], 128, 128, 8
        $region52: #{tpu_custom_call.1} parent=11 // pred_fallthru
          _
        // Predicated region
        $region53: #{tpu_custom_call.1} parent=11 // pred_check
          %p491 = pneg %p339
        $region54: #{tpu_custom_call.1} parent=11 // pred_check_branch
          %493 = sbr.rel (%p491) target = $region56
        $region55: #{tpu_custom_call.1} parent=11 // pred_region
          _
        $region56: #{tpu_custom_call.1} parent=11 // pred_fallthru
          _
        // Predicated region
        $region57: #{tpu_custom_call.1} parent=11 // pred_check
          %p494 = pneg %p360
        $region58: #{tpu_custom_call.1} parent=11 // pred_check_branch
          %496 = sbr.rel (%p494) target = $region60
        $region59: #{tpu_custom_call.1} parent=11 // pred_region
          _
        $region60: #{tpu_custom_call.1} parent=11 // pred_fallthru
          _
      $region12: #{tpu_custom_call.1} parent=5 // pred_fallthru
        _
      %p497 = scmp.lt.s32.totalorder %s30, 2
      // Predicated region
      $region61: #{tpu_custom_call.1} parent=5 // pred_check
        %p498 = pneg %p497
      $region62: #{tpu_custom_call.1} parent=5 // pred_check_branch
        %500 = sbr.rel (%p498) target = $region64
      $region63: #{tpu_custom_call.1} parent=5 // pred_region
        // Predicated region
        $region65: #{tpu_custom_call.1} parent=63 // pred_check
          %p501 = pneg %p50
        $region66: #{tpu_custom_call.1} parent=63 // pred_check_branch
          %503 = sbr.rel (%p501) target = $region68
        $region67: #{tpu_custom_call.1} parent=63 // pred_region
          %s504 = sand.u32 %s40, 1
          %s505 = scalar_lea.sflag [#allocation3], %s504
          %s506 = sand.u32 %s40, 1
          %s507 = smul.addr %s506, 128
          %s508 = scalar_lea.vmem [#allocation2], %s507
          %s509 = smul.u32 8, %s30
          %s511 = ssub.s32 2048, 2048
          %512 = vsyncadd %s505, %s511
          %s513 = smul.addr %s509, 2
          %s514 = smul.addr %s513, 128
          %s515 = scalar_lea.hbm %s0, %s514
          %s516 = sshll.u32 %s508, 4
          %s517 = int_to_ptr.vmem [resolvable:$true] %s516
          %522 = dma.hbm_to_vmem [thread:$0]  %s515, 2048, %s517, %s505, 128, 128, 8
        $region68: #{tpu_custom_call.1} parent=63 // pred_fallthru
          _
        // Predicated region
        $region69: #{tpu_custom_call.1} parent=63 // pred_check
          %p523 = pneg %p76
        $region70: #{tpu_custom_call.1} parent=63 // pred_check_branch
          %525 = sbr.rel (%p523) target = $region72
        $region71: #{tpu_custom_call.1} parent=63 // pred_region
          %s526 = sand.u32 %s30, 1
          %s527 = scalar_lea.sflag [#allocation5], %s526
          %s528 = sand.u32 %s66, 1
          %s529 = smul.addr %s528, 128
          %s530 = scalar_lea.vmem [#allocation4], %s529
          %s531 = smul.u32 8, %s30
          %s533 = ssub.s32 2048, 2048
          %534 = vsyncadd %s527, %s533
          %s535 = smul.addr %s531, 2
          %s536 = smul.addr %s535, 128
          %s537 = scalar_lea.hbm %s1, %s536
          %s538 = sshll.u32 %s530, 4
          %s539 = int_to_ptr.vmem [resolvable:$true] %s538
          %544 = dma.hbm_to_vmem [thread:$0]  %s537, 2048, %s539, %s527, 128, 128, 8
        $region72: #{tpu_custom_call.1} parent=63 // pred_fallthru
          _
        // Predicated region
        $region73: #{tpu_custom_call.1} parent=63 // pred_check
          %p545 = pneg %p102
        $region74: #{tpu_custom_call.1} parent=63 // pred_check_branch
          %547 = sbr.rel (%p545) target = $region76
        $region75: #{tpu_custom_call.1} parent=63 // pred_region
          %s548 = sand.u32 %s30, 1
          %s549 = scalar_lea.sflag [#allocation5], %s548
          %s550 = sand.u32 %s92, 1
          %s551 = smul.addr %s550, 128
          %s552 = scalar_lea.vmem [#allocation6], %s551
          %s553 = smul.u32 8, %s30
          %s555 = ssub.s32 2048, 2048
          %556 = vsyncadd %s549, %s555
          %s557 = smul.addr %s553, 2
          %s558 = smul.addr %s557, 128
          %s559 = scalar_lea.hbm %s2, %s558
          %s560 = sshll.u32 %s552, 4
          %s561 = int_to_ptr.vmem [resolvable:$true] %s560
          %566 = dma.hbm_to_vmem [thread:$0]  %s559, 2048, %s561, %s549, 128, 128, 8
        $region76: #{tpu_custom_call.1} parent=63 // pred_fallthru
          _
      $region64: #{tpu_custom_call.1} parent=5 // pred_fallthru
        _
      %p567 = scmp.le.s32.totalorder 1, %s30
      %p568 = scmp.lt.s32.totalorder %s30, 3
      %p569 = pnand %p567, %p568
      %p570 = pneg %p569
      // Predicated region
      $region77: #{tpu_custom_call.1} parent=5 // pred_check
        _
      $region78: #{tpu_custom_call.1} parent=5 // pred_check_branch
        %572 = sbr.rel (%p569) target = $region80
      $region79: #{tpu_custom_call.1} parent=5 // pred_region
        %s573 = ssub.s32 %s30, 1
        %s574 = sand.u32 %s43, 1
        %s575 = scalar_lea.sflag [#allocation3], %s574
        %s576 = sand.u32 %s43, 1
        %s577 = smul.addr %s576, 128
        %s578 = scalar_lea.vmem [#allocation2], %s577
        // Predicated region
        $region81: #{tpu_custom_call.1} parent=79 // pred_check
          %p579 = pneg %p56
        $region82: #{tpu_custom_call.1} parent=79 // pred_check_branch
          %581 = sbr.rel (%p579) target = $region84
        $region83: #{tpu_custom_call.1} parent=79 // pred_region
          %582 = dma.done %s575, 2048
        $region84: #{tpu_custom_call.1} parent=79 // pred_fallthru
          _
        %s583 = sand.u32 %s35, 1
        %s584 = scalar_lea.sflag [#allocation5], %s583
        %s585 = sand.u32 %s69, 1
        %s586 = smul.addr %s585, 128
        %s587 = scalar_lea.vmem [#allocation4], %s586
        // Predicated region
        $region85: #{tpu_custom_call.1} parent=79 // pred_check
          %p588 = pneg %p82
        $region86: #{tpu_custom_call.1} parent=79 // pred_check_branch
          %590 = sbr.rel (%p588) target = $region88
        $region87: #{tpu_custom_call.1} parent=79 // pred_region
          %591 = dma.done %s584, 2048
        $region88: #{tpu_custom_call.1} parent=79 // pred_fallthru
          _
        %s592 = sand.u32 %s35, 1
        %s593 = scalar_lea.sflag [#allocation5], %s592
        %s594 = sand.u32 %s95, 1
        %s595 = smul.addr %s594, 128
        %s596 = scalar_lea.vmem [#allocation6], %s595
        // Predicated region
        $region89: #{tpu_custom_call.1} parent=79 // pred_check
          %p597 = pneg %p108
        $region90: #{tpu_custom_call.1} parent=79 // pred_check_branch
          %599 = sbr.rel (%p597) target = $region92
        $region91: #{tpu_custom_call.1} parent=79 // pred_region
          %600 = dma.done %s593, 2048
        $region92: #{tpu_custom_call.1} parent=79 // pred_fallthru
          _
        // Predicated region
        $region93: #{tpu_custom_call.1} parent=79 // pred_check
          %p601 = pneg %p171
        $region94: #{tpu_custom_call.1} parent=79 // pred_check_branch
          %603 = sbr.rel (%p601) target = $region96
        $region95: #{tpu_custom_call.1} parent=79 // pred_region
          %604 = dma.done [#allocation8], 512
        $region96: #{tpu_custom_call.1} parent=79 // pred_fallthru
          _
        // Predicated region
        $region97: #{tpu_custom_call.1} parent=79 // pred_check
          %p605 = pneg %p213
        $region98: #{tpu_custom_call.1} parent=79 // pred_check_branch
          %607 = sbr.rel (%p605) target = $region100
        $region99: #{tpu_custom_call.1} parent=79 // pred_region
          %608 = dma.done [#allocation8], 512
        $region100: #{tpu_custom_call.1} parent=79 // pred_fallthru
          _
        // Predicated region
        $region101: #{tpu_custom_call.1} parent=79 // pred_check
          %p609 = pneg %p255
        $region102: #{tpu_custom_call.1} parent=79 // pred_check_branch
          %611 = sbr.rel (%p609) target = $region104
        $region103: #{tpu_custom_call.1} parent=79 // pred_region
          %612 = dma.done [#allocation11], 512
        $region104: #{tpu_custom_call.1} parent=79 // pred_fallthru
          _
        // Predicated region
        $region105: #{tpu_custom_call.1} parent=79 // pred_check
          %p613 = pneg %p276
        $region106: #{tpu_custom_call.1} parent=79 // pred_check_branch
          %615 = sbr.rel (%p613) target = $region108
        $region107: #{tpu_custom_call.1} parent=79 // pred_region
          %616 = dma.done [#allocation11], 512
        $region108: #{tpu_custom_call.1} parent=79 // pred_fallthru
          _
        // Predicated region
        $region109: #{tpu_custom_call.1} parent=79 // pred_check
          %p617 = pneg %p297
        $region110: #{tpu_custom_call.1} parent=79 // pred_check_branch
          %619 = sbr.rel (%p617) target = $region112
        $region111: #{tpu_custom_call.1} parent=79 // pred_region
          %620 = dma.done [#allocation14], 512
        $region112: #{tpu_custom_call.1} parent=79 // pred_fallthru
          _
        // Predicated region
        $region113: #{tpu_custom_call.1} parent=79 // pred_check
          %p621 = pneg %p318
        $region114: #{tpu_custom_call.1} parent=79 // pred_check_branch
          %623 = sbr.rel (%p621) target = $region116
        $region115: #{tpu_custom_call.1} parent=79 // pred_region
          %624 = dma.done [#allocation14], 512
        $region116: #{tpu_custom_call.1} parent=79 // pred_fallthru
          _
        %s625 = sand.u32 %s43, 1
        %s626 = scalar_lea.sflag [#allocation3], %s625
        %s627 = sand.u32 %s43, 1
        %s628 = smul.addr %s627, 128
        %s629 = scalar_lea.vmem [#allocation2], %s628
        %p630 = pneg %p56
        %p631 = pneg %p53
        %s632 = sand.u32 %s35, 1
        %s633 = scalar_lea.sflag [#allocation5], %s632
        %s634 = sand.u32 %s69, 1
        %s635 = smul.addr %s634, 128
        %s636 = scalar_lea.vmem [#allocation4], %s635
        %p637 = pneg %p82
        %p638 = pneg %p79
        %s639 = sand.u32 %s35, 1
        %s640 = scalar_lea.sflag [#allocation5], %s639
        %s641 = sand.u32 %s95, 1
        %s642 = smul.addr %s641, 128
        %s643 = scalar_lea.vmem [#allocation6], %s642
        %p644 = pneg %p108
        %p645 = pneg %p105
        %p646 = pneg %p129
        %p647 = pneg %p126
        %p648 = pneg %p150
        %p649 = pneg %p147
        %p650 = pneg %p171
        %p651 = pneg %p168
        %p652 = pneg %p192
        %p653 = pneg %p189
        %p654 = pneg %p213
        %p655 = pneg %p210
        %p656 = pneg %p234
        %p657 = pneg %p231
        %p658 = pneg %p255
        %p659 = pneg %p252
        %p660 = pneg %p276
        %p661 = pneg %p273
        %p662 = pneg %p297
        %p663 = pneg %p294
        %p664 = pneg %p318
        %p665 = pneg %p315
        %p666 = pneg %p339
        %p667 = pneg %p336
        %p668 = pneg %p360
        %p669 = pneg %p357
        %p670 = pneg %p386
        %p671 = pneg %p383
        %s672 = smul.u32 16, %s35
        %p673 = scmp.lt.s32.totalorder %s672, 31
        %s674 = scalar_select %p673, %s672, 31
        %s675 = smul.addr %s674, 8
        %s676 = scalar_lea.vmem %s15, %s675
        %s677 = smul.u32 8, %s35
        %s678 = smul.u32 8, %s35
        %s679 = smul.u32 8, %s35
        %s680 = smul.u32 16, %s35
        %p681 = scmp.lt.s32.totalorder %s680, 31
        %s682 = scalar_select %p681, %s680, 31
        %s683 = smul.addr %s682, 8
        %s684 = scalar_lea.vmem %s15, %s683
        %s685 = smul.u32 16, %s35
        %v686 = vld [vmem:[%s578] sm:$0xff]
        %v687 = vld [vmem:[%s578 + $0x8] sm:$0xff]
        %v688 = vld [vmem:[%s578 + $0x10] sm:$0xff]
        %v689 = vld [vmem:[%s578 + $0x18] sm:$0xff]
        %v690 = vld [vmem:[%s578 + $0x20] sm:$0xff]
        %v691 = vld [vmem:[%s578 + $0x28] sm:$0xff]
        %v692 = vld [vmem:[%s578 + $0x30] sm:$0xff]
        %v693 = vld [vmem:[%s578 + $0x38] sm:$0xff]
        %v694 = vld [vmem:[%s578 + $0x40] sm:$0xff]
        %v695 = vld [vmem:[%s578 + $0x48] sm:$0xff]
        %v696 = vld [vmem:[%s578 + $0x50] sm:$0xff]
        %v697 = vld [vmem:[%s578 + $0x58] sm:$0xff]
        %v698 = vld [vmem:[%s578 + $0x60] sm:$0xff]
        %v699 = vld [vmem:[%s578 + $0x68] sm:$0xff]
        %v700 = vld [vmem:[%s578 + $0x70] sm:$0xff]
        %v701 = vld [vmem:[%s578 + $0x78] sm:$0xff]
        %v702 = vld [vmem:[%s587] sm:$0xff]
        %v703 = vld [vmem:[%s587 + $0x8] sm:$0xff]
        %v704 = vld [vmem:[%s587 + $0x10] sm:$0xff]
        %v705 = vld [vmem:[%s587 + $0x18] sm:$0xff]
        %v706 = vld [vmem:[%s587 + $0x20] sm:$0xff]
        %v707 = vld [vmem:[%s587 + $0x28] sm:$0xff]
        %v708 = vld [vmem:[%s587 + $0x30] sm:$0xff]
        %v709 = vld [vmem:[%s587 + $0x38] sm:$0xff]
        %v710 = vld [vmem:[%s587 + $0x40] sm:$0xff]
        %v711 = vld [vmem:[%s587 + $0x48] sm:$0xff]
        %v712 = vld [vmem:[%s587 + $0x50] sm:$0xff]
        %v713 = vld [vmem:[%s587 + $0x58] sm:$0xff]
        %v714 = vld [vmem:[%s587 + $0x60] sm:$0xff]
        %v715 = vld [vmem:[%s587 + $0x68] sm:$0xff]
        %v716 = vld [vmem:[%s587 + $0x70] sm:$0xff]
        %v717 = vld [vmem:[%s587 + $0x78] sm:$0xff]
        %v718 = vld [vmem:[%s596] sm:$0xff]
        %v719 = vld [vmem:[%s596 + $0x8] sm:$0xff]
        %v720 = vld [vmem:[%s596 + $0x10] sm:$0xff]
        %v721 = vld [vmem:[%s596 + $0x18] sm:$0xff]
        %v722 = vld [vmem:[%s596 + $0x20] sm:$0xff]
        %v723 = vld [vmem:[%s596 + $0x28] sm:$0xff]
        %v724 = vld [vmem:[%s596 + $0x30] sm:$0xff]
        %v725 = vld [vmem:[%s596 + $0x38] sm:$0xff]
        %v726 = vld [vmem:[%s596 + $0x40] sm:$0xff]
        %v727 = vld [vmem:[%s596 + $0x48] sm:$0xff]
        %v728 = vld [vmem:[%s596 + $0x50] sm:$0xff]
        %v729 = vld [vmem:[%s596 + $0x58] sm:$0xff]
        %v730 = vld [vmem:[%s596 + $0x60] sm:$0xff]
        %v731 = vld [vmem:[%s596 + $0x68] sm:$0xff]
        %v732 = vld [vmem:[%s596 + $0x70] sm:$0xff]
        %v733 = vld [vmem:[%s596 + $0x78] sm:$0xff]
        %v734 = vld [vmem:[%s3] sm:$0x1]
        %v735 = vld [vmem:[%s4] sm:$0x1]
        %vm736 = vcmask 261120
        %v737 = vsel %vm736, %v686, 0.0
        %738 = vadd.xlane.f32.xlu0 %v737
        %v739 = vpop.xlane.xlu0 %738
        %v740 = vsel %vm736, %v687, 0.0
        %741 = vadd.xlane.f32.xlu0 %v740
        %v742 = vpop.xlane.xlu0 %741
        %v743 = vsel %vm736, %v688, 0.0
        %744 = vadd.xlane.f32.xlu0 %v743
        %v745 = vpop.xlane.xlu0 %744
        %v746 = vsel %vm736, %v689, 0.0
        %747 = vadd.xlane.f32.xlu0 %v746
        %v748 = vpop.xlane.xlu0 %747
        %v749 = vsel %vm736, %v690, 0.0
        %750 = vadd.xlane.f32.xlu0 %v749
        %v751 = vpop.xlane.xlu0 %750
        %v752 = vsel %vm736, %v691, 0.0
        %753 = vadd.xlane.f32.xlu0 %v752
        %v754 = vpop.xlane.xlu0 %753
        %v755 = vsel %vm736, %v692, 0.0
        %756 = vadd.xlane.f32.xlu0 %v755
        %v757 = vpop.xlane.xlu0 %756
        %v758 = vsel %vm736, %v693, 0.0
        %759 = vadd.xlane.f32.xlu0 %v758
        %v760 = vpop.xlane.xlu0 %759
        %v761 = vsel %vm736, %v694, 0.0
        %762 = vadd.xlane.f32.xlu0 %v761
        %v763 = vpop.xlane.xlu0 %762
        %v764 = vsel %vm736, %v695, 0.0
        %765 = vadd.xlane.f32.xlu0 %v764
        %v766 = vpop.xlane.xlu0 %765
        %v767 = vsel %vm736, %v696, 0.0
        %768 = vadd.xlane.f32.xlu0 %v767
        %v769 = vpop.xlane.xlu0 %768
        %v770 = vsel %vm736, %v697, 0.0
        %771 = vadd.xlane.f32.xlu0 %v770
        %v772 = vpop.xlane.xlu0 %771
        %v773 = vsel %vm736, %v698, 0.0
        %774 = vadd.xlane.f32.xlu0 %v773
        %v775 = vpop.xlane.xlu0 %774
        %v776 = vsel %vm736, %v699, 0.0
        %777 = vadd.xlane.f32.xlu0 %v776
        %v778 = vpop.xlane.xlu0 %777
        %v779 = vsel %vm736, %v700, 0.0
        %780 = vadd.xlane.f32.xlu0 %v779
        %v781 = vpop.xlane.xlu0 %780
        %v782 = vsel %vm736, %v701, 0.0
        %783 = vadd.xlane.f32.xlu0 %v782
        %v784 = vpop.xlane.xlu0 %783
        %v785 = vrcp.pop 32.0
        %v786 = vmul.f32 %v739, %v785
        %v787 = vmul.f32 %v742, %v785
        %v788 = vmul.f32 %v745, %v785
        %v789 = vmul.f32 %v748, %v785
        %v790 = vmul.f32 %v751, %v785
        %v791 = vmul.f32 %v754, %v785
        %v792 = vmul.f32 %v757, %v785
        %v793 = vmul.f32 %v760, %v785
        %v794 = vmul.f32 %v763, %v785
        %v795 = vmul.f32 %v766, %v785
        %v796 = vmul.f32 %v769, %v785
        %v797 = vmul.f32 %v772, %v785
        %v798 = vmul.f32 %v775, %v785
        %v799 = vmul.f32 %v778, %v785
        %v800 = vmul.f32 %v781, %v785
        %v801 = vmul.f32 %v784, %v785
        %v802 = vsub.f32 %v686, %v786
        %v803 = vsub.f32 %v687, %v787
        %v804 = vsub.f32 %v688, %v788
        %v805 = vsub.f32 %v689, %v789
        %v806 = vsub.f32 %v690, %v790
        %v807 = vsub.f32 %v691, %v791
        %v808 = vsub.f32 %v692, %v792
        %v809 = vsub.f32 %v693, %v793
        %v810 = vsub.f32 %v694, %v794
        %v811 = vsub.f32 %v695, %v795
        %v812 = vsub.f32 %v696, %v796
        %v813 = vsub.f32 %v697, %v797
        %v814 = vsub.f32 %v698, %v798
        %v815 = vsub.f32 %v699, %v799
        %v816 = vsub.f32 %v700, %v800
        %v817 = vsub.f32 %v701, %v801
        %v818 = vmul.f32 %v802, %v802
        %v819 = vmul.f32 %v803, %v803
        %v820 = vmul.f32 %v804, %v804
        %v821 = vmul.f32 %v805, %v805
        %v822 = vmul.f32 %v806, %v806
        %v823 = vmul.f32 %v807, %v807
        %v824 = vmul.f32 %v808, %v808
        %v825 = vmul.f32 %v809, %v809
        %v826 = vmul.f32 %v810, %v810
        %v827 = vmul.f32 %v811, %v811
        %v828 = vmul.f32 %v812, %v812
        %v829 = vmul.f32 %v813, %v813
        %v830 = vmul.f32 %v814, %v814
        %v831 = vmul.f32 %v815, %v815
        %v832 = vmul.f32 %v816, %v816
        %v833 = vmul.f32 %v817, %v817
        %v834 = vsel %vm736, %v818, 0.0
        %835 = vadd.xlane.f32.xlu0 %v834
        %v836 = vpop.xlane.xlu0 %835
        %v837 = vsel %vm736, %v819, 0.0
        %838 = vadd.xlane.f32.xlu0 %v837
        %v839 = vpop.xlane.xlu0 %838
        %v840 = vsel %vm736, %v820, 0.0
        %841 = vadd.xlane.f32.xlu0 %v840
        %v842 = vpop.xlane.xlu0 %841
        %v843 = vsel %vm736, %v821, 0.0
        %844 = vadd.xlane.f32.xlu0 %v843
        %v845 = vpop.xlane.xlu0 %844
        %v846 = vsel %vm736, %v822, 0.0
        %847 = vadd.xlane.f32.xlu0 %v846
        %v848 = vpop.xlane.xlu0 %847
        %v849 = vsel %vm736, %v823, 0.0
        %850 = vadd.xlane.f32.xlu0 %v849
        %v851 = vpop.xlane.xlu0 %850
        %v852 = vsel %vm736, %v824, 0.0
        %853 = vadd.xlane.f32.xlu0 %v852
        %v854 = vpop.xlane.xlu0 %853
        %v855 = vsel %vm736, %v825, 0.0
        %856 = vadd.xlane.f32.xlu0 %v855
        %v857 = vpop.xlane.xlu0 %856
        %v858 = vsel %vm736, %v826, 0.0
        %859 = vadd.xlane.f32.xlu0 %v858
        %v860 = vpop.xlane.xlu0 %859
        %v861 = vsel %vm736, %v827, 0.0
        %862 = vadd.xlane.f32.xlu0 %v861
        %v863 = vpop.xlane.xlu0 %862
        %v864 = vsel %vm736, %v828, 0.0
        %865 = vadd.xlane.f32.xlu0 %v864
        %v866 = vpop.xlane.xlu0 %865
        %v867 = vsel %vm736, %v829, 0.0
        %868 = vadd.xlane.f32.xlu0 %v867
        %v869 = vpop.xlane.xlu0 %868
        %v870 = vsel %vm736, %v830, 0.0
        %871 = vadd.xlane.f32.xlu0 %v870
        %v872 = vpop.xlane.xlu0 %871
        %v873 = vsel %vm736, %v831, 0.0
        %874 = vadd.xlane.f32.xlu0 %v873
        %v875 = vpop.xlane.xlu0 %874
        %v876 = vsel %vm736, %v832, 0.0
        %877 = vadd.xlane.f32.xlu0 %v876
        %v878 = vpop.xlane.xlu0 %877
        %v879 = vsel %vm736, %v833, 0.0
        %880 = vadd.xlane.f32.xlu0 %v879
        %v881 = vpop.xlane.xlu0 %880
        %v882 = vmul.f32 %v836, %v785
        %v883 = vmul.f32 %v839, %v785
        %v884 = vmul.f32 %v842, %v785
        %v885 = vmul.f32 %v845, %v785
        %v886 = vmul.f32 %v848, %v785
        %v887 = vmul.f32 %v851, %v785
        %v888 = vmul.f32 %v854, %v785
        %v889 = vmul.f32 %v857, %v785
        %v890 = vmul.f32 %v860, %v785
        %v891 = vmul.f32 %v863, %v785
        %v892 = vmul.f32 %v866, %v785
        %v893 = vmul.f32 %v869, %v785
        %v894 = vmul.f32 %v872, %v785
        %v895 = vmul.f32 %v875, %v785
        %v896 = vmul.f32 %v878, %v785
        %v897 = vmul.f32 %v881, %v785
        %v898 = vadd.f32 %v882, 1e-06
        %v899 = vadd.f32 %v883, 1e-06
        %v900 = vadd.f32 %v884, 1e-06
        %v901 = vadd.f32 %v885, 1e-06
        %v902 = vadd.f32 %v886, 1e-06
        %v903 = vadd.f32 %v887, 1e-06
        %v904 = vadd.f32 %v888, 1e-06
        %v905 = vadd.f32 %v889, 1e-06
        %v906 = vadd.f32 %v890, 1e-06
        %v907 = vadd.f32 %v891, 1e-06
        %v908 = vadd.f32 %v892, 1e-06
        %v909 = vadd.f32 %v893, 1e-06
        %v910 = vadd.f32 %v894, 1e-06
        %v911 = vadd.f32 %v895, 1e-06
        %v912 = vadd.f32 %v896, 1e-06
        %v913 = vadd.f32 %v897, 1e-06
        %v914 = vrsqrt.pop %v898
        %v915 = vrsqrt.pop %v899
        %v916 = vrsqrt.pop %v900
        %v917 = vrsqrt.pop %v901
        %v918 = vrsqrt.pop %v902
        %v919 = vrsqrt.pop %v903
        %v920 = vrsqrt.pop %v904
        %v921 = vrsqrt.pop %v905
        %v922 = vrsqrt.pop %v906
        %v923 = vrsqrt.pop %v907
        %v924 = vrsqrt.pop %v908
        %v925 = vrsqrt.pop %v909
        %v926 = vrsqrt.pop %v910
        %v927 = vrsqrt.pop %v911
        %v928 = vrsqrt.pop %v912
        %v929 = vrsqrt.pop %v913
        %v930 = vmul.f32 %v802, %v914
        %v931 = vmul.f32 %v803, %v915
        %v932 = vmul.f32 %v804, %v916
        %v933 = vmul.f32 %v805, %v917
        %v934 = vmul.f32 %v806, %v918
        %v935 = vmul.f32 %v807, %v919
        %v936 = vmul.f32 %v808, %v920
        %v937 = vmul.f32 %v809, %v921
        %v938 = vmul.f32 %v810, %v922
        %v939 = vmul.f32 %v811, %v923
        %v940 = vmul.f32 %v812, %v924
        %v941 = vmul.f32 %v813, %v925
        %v942 = vmul.f32 %v814, %v926
        %v943 = vmul.f32 %v815, %v927
        %v944 = vmul.f32 %v816, %v928
        %v945 = vmul.f32 %v817, %v929
        %v947 = vlaneseq
        %v948 = vshrl.u32 %v947, 7
        %v949 = vsub.s32 0, %v948
        %v950 = vrot.slane %v734, %v949
        %v952 = vmul.f32 %v930, %v950
        %v953 = vmul.f32 %v931, %v950
        %v954 = vmul.f32 %v932, %v950
        %v955 = vmul.f32 %v933, %v950
        %v956 = vmul.f32 %v934, %v950
        %v957 = vmul.f32 %v935, %v950
        %v958 = vmul.f32 %v936, %v950
        %v959 = vmul.f32 %v937, %v950
        %v960 = vmul.f32 %v938, %v950
        %v961 = vmul.f32 %v939, %v950
        %v962 = vmul.f32 %v940, %v950
        %v963 = vmul.f32 %v941, %v950
        %v964 = vmul.f32 %v942, %v950
        %v965 = vmul.f32 %v943, %v950
        %v966 = vmul.f32 %v944, %v950
        %v967 = vmul.f32 %v945, %v950
        %v969 = vlaneseq
        %v970 = vshrl.u32 %v969, 7
        %v971 = vsub.s32 0, %v970
        %v972 = vrot.slane %v735, %v971
        %v974 = vadd.f32 %v952, %v972
        %v975 = vadd.f32 %v953, %v972
        %v976 = vadd.f32 %v954, %v972
        %v977 = vadd.f32 %v955, %v972
        %v978 = vadd.f32 %v956, %v972
        %v979 = vadd.f32 %v957, %v972
        %v980 = vadd.f32 %v958, %v972
        %v981 = vadd.f32 %v959, %v972
        %v982 = vadd.f32 %v960, %v972
        %v983 = vadd.f32 %v961, %v972
        %v984 = vadd.f32 %v962, %v972
        %v985 = vadd.f32 %v963, %v972
        %v986 = vadd.f32 %v964, %v972
        %v987 = vadd.f32 %v965, %v972
        %v988 = vadd.f32 %v966, %v972
        %v989 = vadd.f32 %v967, %v972
        %v990 = vld [vmem:[#allocation7] sm:$0xff]
        %v991 = vld [vmem:[#allocation7 + $0x8] sm:$0xff]
        %v992 = vld [vmem:[#allocation7 + $0x10] sm:$0xff]
        %v993 = vld [vmem:[#allocation7 + $0x18] sm:$0xff]
        %v994 = vld [vmem:[%s6] sm:$0x1]
        %v996 = vlaneseq
        %v997 = vshrl.u32 %v996, 7
        %v998 = vsub.s32 0, %v997
        %v999 = vrot.slane %v994, %v998
        %v1002 = vsel %vm736, %v974, 0
        %v1005 = vsel %vm736, %v975, 0
        %v1008 = vsel %vm736, %v976, 0
        %v1011 = vsel %vm736, %v977, 0
        %v1014 = vsel %vm736, %v978, 0
        %v1017 = vsel %vm736, %v979, 0
        %v1020 = vsel %vm736, %v980, 0
        %v1023 = vsel %vm736, %v981, 0
        %v1026 = vsel %vm736, %v982, 0
        %v1029 = vsel %vm736, %v983, 0
        %v1032 = vsel %vm736, %v984, 0
        %v1035 = vsel %vm736, %v985, 0
        %v1038 = vsel %vm736, %v986, 0
        %v1041 = vsel %vm736, %v987, 0
        %v1044 = vsel %vm736, %v988, 0
        %v1047 = vsel %vm736, %v989, 0
        %1049 = vmatprep.subr.mxu0 0.0
        %1050 = vmatpush1.msra.mxu0 0.0
        %1051 = vmatprep.subr.mxu0 0.0
        %1052 = vmatpush1.msra.mxu0 0.0
        %1053 = vmatprep.subr.mxu0 0.0
        %1054 = vmatpush1.msra.mxu0 0.0
        %1055 = vmatprep.subr.mxu0 0.0
        %1056 = vmatpush1.msra.mxu0 0.0
        %1057 = vmatprep.subr.mxu0 0.0
        %1058 = vmatpush1.msra.mxu0 0.0
        %1059 = vmatprep.subr.mxu0 0.0
        %1060 = vmatpush1.msra.mxu0 0.0
        %1061 = vmatprep.subr.mxu0 0.0
        %1062 = vmatpush1.msra.mxu0 0.0
        %1063 = vmatprep.subr.mxu0 0.0
        %1064 = vmatpush1.msra.mxu0 0.0
        %1065 = vmatprep.subr.mxu0 0.0
        %1066 = vmatpush1.msra.mxu0 0.0
        %1067 = vmatprep.subr.mxu0 0.0
        %1068 = vmatpush1.msra.mxu0 0.0
        %1069 = vmatprep.subr.mxu0 0.0
        %1070 = vmatpush1.msra.mxu0 0.0
        %1071 = vmatprep.subr.mxu0 0.0
        %1072 = vmatpush1.msra.mxu0 0.0
        %1073 = vmatprep.subr.mxu0 0.0
        %1074 = vmatpush1.msra.mxu0 %v993
        %1075 = vmatprep.subr.mxu0 0.0
        %1076 = vmatpush1.msra.mxu0 %v992
        %1077 = vmatprep.subr.mxu0 0.0
        %1078 = vmatpush1.msra.mxu0 %v991
        %1079 = vmatprep.subr.mxu0 0.0
        %1080 = vmatpush1.msra.mxu0 %v990
        %1081 = vmatprep.subr.mxu0 0.0
        %1082 = vmatpush2.msra.mxu0 0.0
        %1083 = vmatprep.subr.mxu0 0.0
        %1084 = vmatpush2.msra.mxu0 0.0
        %1085 = vmatprep.subr.mxu0 0.0
        %1086 = vmatpush2.msra.mxu0 0.0
        %1087 = vmatprep.subr.mxu0 0.0
        %1088 = vmatpush2.msra.mxu0 0.0
        %1089 = vmatprep.subr.mxu0 0.0
        %1090 = vmatpush2.msra.mxu0 0.0
        %1091 = vmatprep.subr.mxu0 0.0
        %1092 = vmatpush2.msra.mxu0 0.0
        %1093 = vmatprep.subr.mxu0 0.0
        %1094 = vmatpush2.msra.mxu0 0.0
        %1095 = vmatprep.subr.mxu0 0.0
        %1096 = vmatpush2.msra.mxu0 0.0
        %1097 = vmatprep.subr.mxu0 0.0
        %1098 = vmatpush2.msra.mxu0 0.0
        %1099 = vmatprep.subr.mxu0 0.0
        %1100 = vmatpush2.msra.mxu0 0.0
        %1101 = vmatprep.subr.mxu0 0.0
        %1102 = vmatpush2.msra.mxu0 0.0
        %1103 = vmatprep.subr.mxu0 0.0
        %1104 = vmatpush2.msra.mxu0 0.0
        %1105 = vmatprep.subr.mxu0 0.0
        %1106 = vmatpush2.msra.mxu0 0.0
        %1107 = vmatprep.subr.mxu0 0.0
        %1108 = vmatpush2.msra.mxu0 0.0
        %1109 = vmatprep.subr.mxu0 0.0
        %1110 = vmatpush2.msra.mxu0 0.0
        %1111 = vmatprep.subr.mxu0 0.0
        %1112 = vmatpush2.msra.mxu0 0.0
        %1113 = vmatprep.mubr.f32.mxu0 0.0
        %1114 = vmatmul.mubr.f32.gmra.mxu0 %v1002
        %v1115 = vpop.f32.mrf.mxu0
        %v1116 = vadd.f32 %v999, %v1115
        %v1117 = vpop.f32.mrf.mxu0
        %1118 = vmatprep.mubr.f32.mxu0 0.0
        %1119 = vmatmul.mubr.f32.gmra.mxu0 %v1005
        %v1120 = vpop.f32.mrf.mxu0
        %v1121 = vadd.f32 %v999, %v1120
        %v1122 = vpop.f32.mrf.mxu0
        %1123 = vmatprep.mubr.f32.mxu0 0.0
        %1124 = vmatmul.mubr.f32.gmra.mxu0 %v1008
        %v1125 = vpop.f32.mrf.mxu0
        %v1126 = vadd.f32 %v999, %v1125
        %v1127 = vpop.f32.mrf.mxu0
        %1128 = vmatprep.mubr.f32.mxu0 0.0
        %1129 = vmatmul.mubr.f32.gmra.mxu0 %v1011
        %v1130 = vpop.f32.mrf.mxu0
        %v1131 = vadd.f32 %v999, %v1130
        %v1132 = vpop.f32.mrf.mxu0
        %1133 = vmatprep.mubr.f32.mxu0 0.0
        %1134 = vmatmul.mubr.f32.gmra.mxu0 %v1014
        %v1135 = vpop.f32.mrf.mxu0
        %v1136 = vadd.f32 %v999, %v1135
        %v1137 = vpop.f32.mrf.mxu0
        %1138 = vmatprep.mubr.f32.mxu0 0.0
        %1139 = vmatmul.mubr.f32.gmra.mxu0 %v1017
        %v1140 = vpop.f32.mrf.mxu0
        %v1141 = vadd.f32 %v999, %v1140
        %v1142 = vpop.f32.mrf.mxu0
        %1143 = vmatprep.mubr.f32.mxu0 0.0
        %1144 = vmatmul.mubr.f32.gmra.mxu0 %v1020
        %v1145 = vpop.f32.mrf.mxu0
        %v1146 = vadd.f32 %v999, %v1145
        %v1147 = vpop.f32.mrf.mxu0
        %1148 = vmatprep.mubr.f32.mxu0 0.0
        %1149 = vmatmul.mubr.f32.gmra.mxu0 %v1023
        %v1150 = vpop.f32.mrf.mxu0
        %v1151 = vadd.f32 %v999, %v1150
        %v1152 = vpop.f32.mrf.mxu0
        %1153 = vmatprep.mubr.f32.mxu0 0.0
        %1154 = vmatmul.mubr.f32.gmra.mxu0 %v1026
        %v1155 = vpop.f32.mrf.mxu0
        %v1156 = vadd.f32 %v999, %v1155
        %v1157 = vpop.f32.mrf.mxu0
        %1158 = vmatprep.mubr.f32.mxu0 0.0
        %1159 = vmatmul.mubr.f32.gmra.mxu0 %v1029
        %v1160 = vpop.f32.mrf.mxu0
        %v1161 = vadd.f32 %v999, %v1160
        %v1162 = vpop.f32.mrf.mxu0
        %1163 = vmatprep.mubr.f32.mxu0 0.0
        %1164 = vmatmul.mubr.f32.gmra.mxu0 %v1032
        %v1165 = vpop.f32.mrf.mxu0
        %v1166 = vadd.f32 %v999, %v1165
        %v1167 = vpop.f32.mrf.mxu0
        %1168 = vmatprep.mubr.f32.mxu0 0.0
        %1169 = vmatmul.mubr.f32.gmra.mxu0 %v1035
        %v1170 = vpop.f32.mrf.mxu0
        %v1171 = vadd.f32 %v999, %v1170
        %v1172 = vpop.f32.mrf.mxu0
        %1173 = vmatprep.mubr.f32.mxu0 0.0
        %1174 = vmatmul.mubr.f32.gmra.mxu0 %v1038
        %v1175 = vpop.f32.mrf.mxu0
        %v1176 = vadd.f32 %v999, %v1175
        %v1177 = vpop.f32.mrf.mxu0
        %1178 = vmatprep.mubr.f32.mxu0 0.0
        %1179 = vmatmul.mubr.f32.gmra.mxu0 %v1041
        %v1180 = vpop.f32.mrf.mxu0
        %v1181 = vadd.f32 %v999, %v1180
        %v1182 = vpop.f32.mrf.mxu0
        %1183 = vmatprep.mubr.f32.mxu0 0.0
        %1184 = vmatmul.mubr.f32.gmra.mxu0 %v1044
        %v1185 = vpop.f32.mrf.mxu0
        %v1186 = vadd.f32 %v999, %v1185
        %v1187 = vpop.f32.mrf.mxu0
        %1188 = vmatprep.mubr.f32.mxu0 0.0
        %1189 = vmatmul.mubr.f32.gmra.mxu0 %v1047
        %v1190 = vpop.f32.mrf.mxu0
        %v1191 = vadd.f32 %v999, %v1190
        %v1192 = vpop.f32.mrf.mxu0
        %1193 = vdwg.mxu0
        %v1194 = vxor.u32 %v1116, 2147483648
        %v1195 = vxor.u32 %v1121, 2147483648
        %v1196 = vxor.u32 %v1126, 2147483648
        %v1197 = vxor.u32 %v1131, 2147483648
        %v1198 = vxor.u32 %v1136, 2147483648
        %v1199 = vxor.u32 %v1141, 2147483648
        %v1200 = vxor.u32 %v1146, 2147483648
        %v1201 = vxor.u32 %v1151, 2147483648
        %v1202 = vxor.u32 %v1156, 2147483648
        %v1203 = vxor.u32 %v1161, 2147483648
        %v1204 = vxor.u32 %v1166, 2147483648
        %v1205 = vxor.u32 %v1171, 2147483648
        %v1206 = vxor.u32 %v1176, 2147483648
        %v1207 = vxor.u32 %v1181, 2147483648
        %v1208 = vxor.u32 %v1186, 2147483648
        %v1209 = vxor.u32 %v1191, 2147483648
        %v1210 = vmul.f32 %v1194, 1.442695
        %v1211 = vpow.pop %v1210
        %v1212 = vmul.f32 %v1195, 1.442695
        %v1213 = vpow.pop %v1212
        %v1214 = vmul.f32 %v1196, 1.442695
        %v1215 = vpow.pop %v1214
        %v1216 = vmul.f32 %v1197, 1.442695
        %v1217 = vpow.pop %v1216
        %v1218 = vmul.f32 %v1198, 1.442695
        %v1219 = vpow.pop %v1218
        %v1220 = vmul.f32 %v1199, 1.442695
        %v1221 = vpow.pop %v1220
        %v1222 = vmul.f32 %v1200, 1.442695
        %v1223 = vpow.pop %v1222
        %v1224 = vmul.f32 %v1201, 1.442695
        %v1225 = vpow.pop %v1224
        %v1226 = vmul.f32 %v1202, 1.442695
        %v1227 = vpow.pop %v1226
        %v1228 = vmul.f32 %v1203, 1.442695
        %v1229 = vpow.pop %v1228
        %v1230 = vmul.f32 %v1204, 1.442695
        %v1231 = vpow.pop %v1230
        %v1232 = vmul.f32 %v1205, 1.442695
        %v1233 = vpow.pop %v1232
        %v1234 = vmul.f32 %v1206, 1.442695
        %v1235 = vpow.pop %v1234
        %v1236 = vmul.f32 %v1207, 1.442695
        %v1237 = vpow.pop %v1236
        %v1238 = vmul.f32 %v1208, 1.442695
        %v1239 = vpow.pop %v1238
        %v1240 = vmul.f32 %v1209, 1.442695
        %v1241 = vpow.pop %v1240
        %v1242 = vadd.f32 %v1211, 1.0
        %v1243 = vadd.f32 %v1213, 1.0
        %v1244 = vadd.f32 %v1215, 1.0
        %v1245 = vadd.f32 %v1217, 1.0
        %v1246 = vadd.f32 %v1219, 1.0
        %v1247 = vadd.f32 %v1221, 1.0
        %v1248 = vadd.f32 %v1223, 1.0
        %v1249 = vadd.f32 %v1225, 1.0
        %v1250 = vadd.f32 %v1227, 1.0
        %v1251 = vadd.f32 %v1229, 1.0
        %v1252 = vadd.f32 %v1231, 1.0
        %v1253 = vadd.f32 %v1233, 1.0
        %v1254 = vadd.f32 %v1235, 1.0
        %v1255 = vadd.f32 %v1237, 1.0
        %v1256 = vadd.f32 %v1239, 1.0
        %v1257 = vadd.f32 %v1241, 1.0
        %v1258 = vrcp.pop %v1242
        %v1259 = vmul.f32 1.0, %v1258
        %v1260 = vrcp.pop %v1243
        %v1261 = vmul.f32 1.0, %v1260
        %v1262 = vrcp.pop %v1244
        %v1263 = vmul.f32 1.0, %v1262
        %v1264 = vrcp.pop %v1245
        %v1265 = vmul.f32 1.0, %v1264
        %v1266 = vrcp.pop %v1246
        %v1267 = vmul.f32 1.0, %v1266
        %v1268 = vrcp.pop %v1247
        %v1269 = vmul.f32 1.0, %v1268
        %v1270 = vrcp.pop %v1248
        %v1271 = vmul.f32 1.0, %v1270
        %v1272 = vrcp.pop %v1249
        %v1273 = vmul.f32 1.0, %v1272
        %v1274 = vrcp.pop %v1250
        %v1275 = vmul.f32 1.0, %v1274
        %v1276 = vrcp.pop %v1251
        %v1277 = vmul.f32 1.0, %v1276
        %v1278 = vrcp.pop %v1252
        %v1279 = vmul.f32 1.0, %v1278
        %v1280 = vrcp.pop %v1253
        %v1281 = vmul.f32 1.0, %v1280
        %v1282 = vrcp.pop %v1254
        %v1283 = vmul.f32 1.0, %v1282
        %v1284 = vrcp.pop %v1255
        %v1285 = vmul.f32 1.0, %v1284
        %v1286 = vrcp.pop %v1256
        %v1287 = vmul.f32 1.0, %v1286
        %v1288 = vrcp.pop %v1257
        %v1289 = vmul.f32 1.0, %v1288
        %v1290 = vld [vmem:[#allocation9] sm:$0xff]
        %v1291 = vld [vmem:[#allocation9 + $0x8] sm:$0xff]
        %v1292 = vld [vmem:[#allocation9 + $0x10] sm:$0xff]
        %v1293 = vld [vmem:[#allocation9 + $0x18] sm:$0xff]
        %v1294 = vld [vmem:[%s8] sm:$0x1]
        %v1296 = vlaneseq
        %v1297 = vshrl.u32 %v1296, 7
        %v1298 = vsub.s32 0, %v1297
        %v1299 = vrot.slane %v1294, %v1298
        %1301 = vmatprep.subr.mxu0 0.0
        %1302 = vmatpush1.msra.mxu0 0.0
        %1303 = vmatprep.subr.mxu0 0.0
        %1304 = vmatpush1.msra.mxu0 0.0
        %1305 = vmatprep.subr.mxu0 0.0
        %1306 = vmatpush1.msra.mxu0 0.0
        %1307 = vmatprep.subr.mxu0 0.0
        %1308 = vmatpush1.msra.mxu0 0.0
        %1309 = vmatprep.subr.mxu0 0.0
        %1310 = vmatpush1.msra.mxu0 0.0
        %1311 = vmatprep.subr.mxu0 0.0
        %1312 = vmatpush1.msra.mxu0 0.0
        %1313 = vmatprep.subr.mxu0 0.0
        %1314 = vmatpush1.msra.mxu0 0.0
        %1315 = vmatprep.subr.mxu0 0.0
        %1316 = vmatpush1.msra.mxu0 0.0
        %1317 = vmatprep.subr.mxu0 0.0
        %1318 = vmatpush1.msra.mxu0 0.0
        %1319 = vmatprep.subr.mxu0 0.0
        %1320 = vmatpush1.msra.mxu0 0.0
        %1321 = vmatprep.subr.mxu0 0.0
        %1322 = vmatpush1.msra.mxu0 0.0
        %1323 = vmatprep.subr.mxu0 0.0
        %1324 = vmatpush1.msra.mxu0 0.0
        %1325 = vmatprep.subr.mxu0 0.0
        %1326 = vmatpush1.msra.mxu0 %v1293
        %1327 = vmatprep.subr.mxu0 0.0
        %1328 = vmatpush1.msra.mxu0 %v1292
        %1329 = vmatprep.subr.mxu0 0.0
        %1330 = vmatpush1.msra.mxu0 %v1291
        %1331 = vmatprep.subr.mxu0 0.0
        %1332 = vmatpush1.msra.mxu0 %v1290
        %1333 = vmatprep.subr.mxu0 0.0
        %1334 = vmatpush2.msra.mxu0 0.0
        %1335 = vmatprep.subr.mxu0 0.0
        %1336 = vmatpush2.msra.mxu0 0.0
        %1337 = vmatprep.subr.mxu0 0.0
        %1338 = vmatpush2.msra.mxu0 0.0
        %1339 = vmatprep.subr.mxu0 0.0
        %1340 = vmatpush2.msra.mxu0 0.0
        %1341 = vmatprep.subr.mxu0 0.0
        %1342 = vmatpush2.msra.mxu0 0.0
        %1343 = vmatprep.subr.mxu0 0.0
        %1344 = vmatpush2.msra.mxu0 0.0
        %1345 = vmatprep.subr.mxu0 0.0
        %1346 = vmatpush2.msra.mxu0 0.0
        %1347 = vmatprep.subr.mxu0 0.0
        %1348 = vmatpush2.msra.mxu0 0.0
        %1349 = vmatprep.subr.mxu0 0.0
        %1350 = vmatpush2.msra.mxu0 0.0
        %1351 = vmatprep.subr.mxu0 0.0
        %1352 = vmatpush2.msra.mxu0 0.0
        %1353 = vmatprep.subr.mxu0 0.0
        %1354 = vmatpush2.msra.mxu0 0.0
        %1355 = vmatprep.subr.mxu0 0.0
        %1356 = vmatpush2.msra.mxu0 0.0
        %1357 = vmatprep.subr.mxu0 0.0
        %1358 = vmatpush2.msra.mxu0 0.0
        %1359 = vmatprep.subr.mxu0 0.0
        %1360 = vmatpush2.msra.mxu0 0.0
        %1361 = vmatprep.subr.mxu0 0.0
        %1362 = vmatpush2.msra.mxu0 0.0
        %1363 = vmatprep.subr.mxu0 0.0
        %1364 = vmatpush2.msra.mxu0 0.0
        %1365 = vmatprep.mubr.f32.mxu0 0.0
        %1366 = vmatmul.mubr.f32.gmra.mxu0 %v1002
        %v1367 = vpop.f32.mrf.mxu0
        %v1368 = vadd.f32 %v1299, %v1367
        %v1369 = vpop.f32.mrf.mxu0
        %1370 = vmatprep.mubr.f32.mxu0 0.0
        %1371 = vmatmul.mubr.f32.gmra.mxu0 %v1005
        %v1372 = vpop.f32.mrf.mxu0
        %v1373 = vadd.f32 %v1299, %v1372
        %v1374 = vpop.f32.mrf.mxu0
        %1375 = vmatprep.mubr.f32.mxu0 0.0
        %1376 = vmatmul.mubr.f32.gmra.mxu0 %v1008
        %v1377 = vpop.f32.mrf.mxu0
        %v1378 = vadd.f32 %v1299, %v1377
        %v1379 = vpop.f32.mrf.mxu0
        %1380 = vmatprep.mubr.f32.mxu0 0.0
        %1381 = vmatmul.mubr.f32.gmra.mxu0 %v1011
        %v1382 = vpop.f32.mrf.mxu0
        %v1383 = vadd.f32 %v1299, %v1382
        %v1384 = vpop.f32.mrf.mxu0
        %1385 = vmatprep.mubr.f32.mxu0 0.0
        %1386 = vmatmul.mubr.f32.gmra.mxu0 %v1014
        %v1387 = vpop.f32.mrf.mxu0
        %v1388 = vadd.f32 %v1299, %v1387
        %v1389 = vpop.f32.mrf.mxu0
        %1390 = vmatprep.mubr.f32.mxu0 0.0
        %1391 = vmatmul.mubr.f32.gmra.mxu0 %v1017
        %v1392 = vpop.f32.mrf.mxu0
        %v1393 = vadd.f32 %v1299, %v1392
        %v1394 = vpop.f32.mrf.mxu0
        %1395 = vmatprep.mubr.f32.mxu0 0.0
        %1396 = vmatmul.mubr.f32.gmra.mxu0 %v1020
        %v1397 = vpop.f32.mrf.mxu0
        %v1398 = vadd.f32 %v1299, %v1397
        %v1399 = vpop.f32.mrf.mxu0
        %1400 = vmatprep.mubr.f32.mxu0 0.0
        %1401 = vmatmul.mubr.f32.gmra.mxu0 %v1023
        %v1402 = vpop.f32.mrf.mxu0
        %v1403 = vadd.f32 %v1299, %v1402
        %v1404 = vpop.f32.mrf.mxu0
        %1405 = vmatprep.mubr.f32.mxu0 0.0
        %1406 = vmatmul.mubr.f32.gmra.mxu0 %v1026
        %v1407 = vpop.f32.mrf.mxu0
        %v1408 = vadd.f32 %v1299, %v1407
        %v1409 = vpop.f32.mrf.mxu0
        %1410 = vmatprep.mubr.f32.mxu0 0.0
        %1411 = vmatmul.mubr.f32.gmra.mxu0 %v1029
        %v1412 = vpop.f32.mrf.mxu0
        %v1413 = vadd.f32 %v1299, %v1412
        %v1414 = vpop.f32.mrf.mxu0
        %1415 = vmatprep.mubr.f32.mxu0 0.0
        %1416 = vmatmul.mubr.f32.gmra.mxu0 %v1032
        %v1417 = vpop.f32.mrf.mxu0
        %v1418 = vadd.f32 %v1299, %v1417
        %v1419 = vpop.f32.mrf.mxu0
        %1420 = vmatprep.mubr.f32.mxu0 0.0
        %1421 = vmatmul.mubr.f32.gmra.mxu0 %v1035
        %v1422 = vpop.f32.mrf.mxu0
        %v1423 = vadd.f32 %v1299, %v1422
        %v1424 = vpop.f32.mrf.mxu0
        %1425 = vmatprep.mubr.f32.mxu0 0.0
        %1426 = vmatmul.mubr.f32.gmra.mxu0 %v1038
        %v1427 = vpop.f32.mrf.mxu0
        %v1428 = vadd.f32 %v1299, %v1427
        %v1429 = vpop.f32.mrf.mxu0
        %1430 = vmatprep.mubr.f32.mxu0 0.0
        %1431 = vmatmul.mubr.f32.gmra.mxu0 %v1041
        %v1432 = vpop.f32.mrf.mxu0
        %v1433 = vadd.f32 %v1299, %v1432
        %v1434 = vpop.f32.mrf.mxu0
        %1435 = vmatprep.mubr.f32.mxu0 0.0
        %1436 = vmatmul.mubr.f32.gmra.mxu0 %v1044
        %v1437 = vpop.f32.mrf.mxu0
        %v1438 = vadd.f32 %v1299, %v1437
        %v1439 = vpop.f32.mrf.mxu0
        %1440 = vmatprep.mubr.f32.mxu0 0.0
        %1441 = vmatmul.mubr.f32.gmra.mxu0 %v1047
        %v1442 = vpop.f32.mrf.mxu0
        %v1443 = vadd.f32 %v1299, %v1442
        %v1444 = vpop.f32.mrf.mxu0
        %1445 = vdwg.mxu0
        %v1446 = vmul.f32 %v1259, %v1368
        %v1447 = vmul.f32 %v1261, %v1373
        %v1448 = vmul.f32 %v1263, %v1378
        %v1449 = vmul.f32 %v1265, %v1383
        %v1450 = vmul.f32 %v1267, %v1388
        %v1451 = vmul.f32 %v1269, %v1393
        %v1452 = vmul.f32 %v1271, %v1398
        %v1453 = vmul.f32 %v1273, %v1403
        %v1454 = vmul.f32 %v1275, %v1408
        %v1455 = vmul.f32 %v1277, %v1413
        %v1456 = vmul.f32 %v1279, %v1418
        %v1457 = vmul.f32 %v1281, %v1423
        %v1458 = vmul.f32 %v1283, %v1428
        %v1459 = vmul.f32 %v1285, %v1433
        %v1460 = vmul.f32 %v1287, %v1438
        %v1461 = vmul.f32 %v1289, %v1443
        %v1462 = vld [vmem:[#allocation10] sm:$0xff]
        %v1463 = vld [vmem:[#allocation10 + $0x8] sm:$0xff]
        %v1464 = vld [vmem:[#allocation10 + $0x10] sm:$0xff]
        %v1465 = vld [vmem:[#allocation10 + $0x18] sm:$0xff]
        %v1467 = vsel %vm736, %v1446, 0
        %v1470 = vsel %vm736, %v1447, 0
        %v1473 = vsel %vm736, %v1448, 0
        %v1476 = vsel %vm736, %v1449, 0
        %v1479 = vsel %vm736, %v1450, 0
        %v1482 = vsel %vm736, %v1451, 0
        %v1485 = vsel %vm736, %v1452, 0
        %v1488 = vsel %vm736, %v1453, 0
        %v1491 = vsel %vm736, %v1454, 0
        %v1494 = vsel %vm736, %v1455, 0
        %v1497 = vsel %vm736, %v1456, 0
        %v1500 = vsel %vm736, %v1457, 0
        %v1503 = vsel %vm736, %v1458, 0
        %v1506 = vsel %vm736, %v1459, 0
        %v1509 = vsel %vm736, %v1460, 0
        %v1512 = vsel %vm736, %v1461, 0
        %1514 = vmatprep.subr.mxu0 0.0
        %1515 = vmatpush1.msra.mxu0 0.0
        %1516 = vmatprep.subr.mxu0 0.0
        %1517 = vmatpush1.msra.mxu0 0.0
        %1518 = vmatprep.subr.mxu0 0.0
        %1519 = vmatpush1.msra.mxu0 0.0
        %1520 = vmatprep.subr.mxu0 0.0
        %1521 = vmatpush1.msra.mxu0 0.0
        %1522 = vmatprep.subr.mxu0 0.0
        %1523 = vmatpush1.msra.mxu0 0.0
        %1524 = vmatprep.subr.mxu0 0.0
        %1525 = vmatpush1.msra.mxu0 0.0
        %1526 = vmatprep.subr.mxu0 0.0
        %1527 = vmatpush1.msra.mxu0 0.0
        %1528 = vmatprep.subr.mxu0 0.0
        %1529 = vmatpush1.msra.mxu0 0.0
        %1530 = vmatprep.subr.mxu0 0.0
        %1531 = vmatpush1.msra.mxu0 0.0
        %1532 = vmatprep.subr.mxu0 0.0
        %1533 = vmatpush1.msra.mxu0 0.0
        %1534 = vmatprep.subr.mxu0 0.0
        %1535 = vmatpush1.msra.mxu0 0.0
        %1536 = vmatprep.subr.mxu0 0.0
        %1537 = vmatpush1.msra.mxu0 0.0
        %1538 = vmatprep.subr.mxu0 0.0
        %1539 = vmatpush1.msra.mxu0 %v1465
        %1540 = vmatprep.subr.mxu0 0.0
        %1541 = vmatpush1.msra.mxu0 %v1464
        %1542 = vmatprep.subr.mxu0 0.0
        %1543 = vmatpush1.msra.mxu0 %v1463
        %1544 = vmatprep.subr.mxu0 0.0
        %1545 = vmatpush1.msra.mxu0 %v1462
        %1546 = vmatprep.subr.mxu0 0.0
        %1547 = vmatpush2.msra.mxu0 0.0
        %1548 = vmatprep.subr.mxu0 0.0
        %1549 = vmatpush2.msra.mxu0 0.0
        %1550 = vmatprep.subr.mxu0 0.0
        %1551 = vmatpush2.msra.mxu0 0.0
        %1552 = vmatprep.subr.mxu0 0.0
        %1553 = vmatpush2.msra.mxu0 0.0
        %1554 = vmatprep.subr.mxu0 0.0
        %1555 = vmatpush2.msra.mxu0 0.0
        %1556 = vmatprep.subr.mxu0 0.0
        %1557 = vmatpush2.msra.mxu0 0.0
        %1558 = vmatprep.subr.mxu0 0.0
        %1559 = vmatpush2.msra.mxu0 0.0
        %1560 = vmatprep.subr.mxu0 0.0
        %1561 = vmatpush2.msra.mxu0 0.0
        %1562 = vmatprep.subr.mxu0 0.0
        %1563 = vmatpush2.msra.mxu0 0.0
        %1564 = vmatprep.subr.mxu0 0.0
        %1565 = vmatpush2.msra.mxu0 0.0
        %1566 = vmatprep.subr.mxu0 0.0
        %1567 = vmatpush2.msra.mxu0 0.0
        %1568 = vmatprep.subr.mxu0 0.0
        %1569 = vmatpush2.msra.mxu0 0.0
        %1570 = vmatprep.subr.mxu0 0.0
        %1571 = vmatpush2.msra.mxu0 0.0
        %1572 = vmatprep.subr.mxu0 0.0
        %1573 = vmatpush2.msra.mxu0 0.0
        %1574 = vmatprep.subr.mxu0 0.0
        %1575 = vmatpush2.msra.mxu0 0.0
        %1576 = vmatprep.subr.mxu0 0.0
        %1577 = vmatpush2.msra.mxu0 0.0
        %1578 = vmatprep.mubr.f32.mxu0 0.0
        %1579 = vmatmul.mubr.f32.gmra.mxu0 %v1467
        %v1580 = vpop.f32.mrf.mxu0
        %v1581 = vadd.f32 0.0, %v1580
        %v1582 = vpop.f32.mrf.mxu0
        %1583 = vmatprep.mubr.f32.mxu0 0.0
        %1584 = vmatmul.mubr.f32.gmra.mxu0 %v1470
        %v1585 = vpop.f32.mrf.mxu0
        %v1586 = vadd.f32 0.0, %v1585
        %v1587 = vpop.f32.mrf.mxu0
        %1588 = vmatprep.mubr.f32.mxu0 0.0
        %1589 = vmatmul.mubr.f32.gmra.mxu0 %v1473
        %v1590 = vpop.f32.mrf.mxu0
        %v1591 = vadd.f32 0.0, %v1590
        %v1592 = vpop.f32.mrf.mxu0
        %1593 = vmatprep.mubr.f32.mxu0 0.0
        %1594 = vmatmul.mubr.f32.gmra.mxu0 %v1476
        %v1595 = vpop.f32.mrf.mxu0
        %v1596 = vadd.f32 0.0, %v1595
        %v1597 = vpop.f32.mrf.mxu0
        %1598 = vmatprep.mubr.f32.mxu0 0.0
        %1599 = vmatmul.mubr.f32.gmra.mxu0 %v1479
        %v1600 = vpop.f32.mrf.mxu0
        %v1601 = vadd.f32 0.0, %v1600
        %v1602 = vpop.f32.mrf.mxu0
        %1603 = vmatprep.mubr.f32.mxu0 0.0
        %1604 = vmatmul.mubr.f32.gmra.mxu0 %v1482
        %v1605 = vpop.f32.mrf.mxu0
        %v1606 = vadd.f32 0.0, %v1605
        %v1607 = vpop.f32.mrf.mxu0
        %1608 = vmatprep.mubr.f32.mxu0 0.0
        %1609 = vmatmul.mubr.f32.gmra.mxu0 %v1485
        %v1610 = vpop.f32.mrf.mxu0
        %v1611 = vadd.f32 0.0, %v1610
        %v1612 = vpop.f32.mrf.mxu0
        %1613 = vmatprep.mubr.f32.mxu0 0.0
        %1614 = vmatmul.mubr.f32.gmra.mxu0 %v1488
        %v1615 = vpop.f32.mrf.mxu0
        %v1616 = vadd.f32 0.0, %v1615
        %v1617 = vpop.f32.mrf.mxu0
        %1618 = vmatprep.mubr.f32.mxu0 0.0
        %1619 = vmatmul.mubr.f32.gmra.mxu0 %v1491
        %v1620 = vpop.f32.mrf.mxu0
        %v1621 = vadd.f32 0.0, %v1620
        %v1622 = vpop.f32.mrf.mxu0
        %1623 = vmatprep.mubr.f32.mxu0 0.0
        %1624 = vmatmul.mubr.f32.gmra.mxu0 %v1494
        %v1625 = vpop.f32.mrf.mxu0
        %v1626 = vadd.f32 0.0, %v1625
        %v1627 = vpop.f32.mrf.mxu0
        %1628 = vmatprep.mubr.f32.mxu0 0.0
        %1629 = vmatmul.mubr.f32.gmra.mxu0 %v1497
        %v1630 = vpop.f32.mrf.mxu0
        %v1631 = vadd.f32 0.0, %v1630
        %v1632 = vpop.f32.mrf.mxu0
        %1633 = vmatprep.mubr.f32.mxu0 0.0
        %1634 = vmatmul.mubr.f32.gmra.mxu0 %v1500
        %v1635 = vpop.f32.mrf.mxu0
        %v1636 = vadd.f32 0.0, %v1635
        %v1637 = vpop.f32.mrf.mxu0
        %1638 = vmatprep.mubr.f32.mxu0 0.0
        %1639 = vmatmul.mubr.f32.gmra.mxu0 %v1503
        %v1640 = vpop.f32.mrf.mxu0
        %v1641 = vadd.f32 0.0, %v1640
        %v1642 = vpop.f32.mrf.mxu0
        %1643 = vmatprep.mubr.f32.mxu0 0.0
        %1644 = vmatmul.mubr.f32.gmra.mxu0 %v1506
        %v1645 = vpop.f32.mrf.mxu0
        %v1646 = vadd.f32 0.0, %v1645
        %v1647 = vpop.f32.mrf.mxu0
        %1648 = vmatprep.mubr.f32.mxu0 0.0
        %1649 = vmatmul.mubr.f32.gmra.mxu0 %v1509
        %v1650 = vpop.f32.mrf.mxu0
        %v1651 = vadd.f32 0.0, %v1650
        %v1652 = vpop.f32.mrf.mxu0
        %1653 = vmatprep.mubr.f32.mxu0 0.0
        %1654 = vmatmul.mubr.f32.gmra.mxu0 %v1512
        %v1655 = vpop.f32.mrf.mxu0
        %v1656 = vadd.f32 0.0, %v1655
        %v1657 = vpop.f32.mrf.mxu0
        %1658 = vdwg.mxu0
        %v1659 = vld [vmem:[#allocation12] sm:$0xff]
        %v1660 = vld [vmem:[#allocation12 + $0x8] sm:$0xff]
        %v1661 = vld [vmem:[#allocation12 + $0x10] sm:$0xff]
        %v1662 = vld [vmem:[#allocation12 + $0x18] sm:$0xff]
        %v1664 = vsel %vm736, %v702, 0
        %v1667 = vsel %vm736, %v703, 0
        %v1670 = vsel %vm736, %v704, 0
        %v1673 = vsel %vm736, %v705, 0
        %v1676 = vsel %vm736, %v706, 0
        %v1679 = vsel %vm736, %v707, 0
        %v1682 = vsel %vm736, %v708, 0
        %v1685 = vsel %vm736, %v709, 0
        %v1688 = vsel %vm736, %v710, 0
        %v1691 = vsel %vm736, %v711, 0
        %v1694 = vsel %vm736, %v712, 0
        %v1697 = vsel %vm736, %v713, 0
        %v1700 = vsel %vm736, %v714, 0
        %v1703 = vsel %vm736, %v715, 0
        %v1706 = vsel %vm736, %v716, 0
        %v1709 = vsel %vm736, %v717, 0
        %1711 = vmatprep.subr.mxu0 0.0
        %1712 = vmatpush1.msra.mxu0 0.0
        %1713 = vmatprep.subr.mxu0 0.0
        %1714 = vmatpush1.msra.mxu0 0.0
        %1715 = vmatprep.subr.mxu0 0.0
        %1716 = vmatpush1.msra.mxu0 0.0
        %1717 = vmatprep.subr.mxu0 0.0
        %1718 = vmatpush1.msra.mxu0 0.0
        %1719 = vmatprep.subr.mxu0 0.0
        %1720 = vmatpush1.msra.mxu0 0.0
        %1721 = vmatprep.subr.mxu0 0.0
        %1722 = vmatpush1.msra.mxu0 0.0
        %1723 = vmatprep.subr.mxu0 0.0
        %1724 = vmatpush1.msra.mxu0 0.0
        %1725 = vmatprep.subr.mxu0 0.0
        %1726 = vmatpush1.msra.mxu0 0.0
        %1727 = vmatprep.subr.mxu0 0.0
        %1728 = vmatpush1.msra.mxu0 0.0
        %1729 = vmatprep.subr.mxu0 0.0
        %1730 = vmatpush1.msra.mxu0 0.0
        %1731 = vmatprep.subr.mxu0 0.0
        %1732 = vmatpush1.msra.mxu0 0.0
        %1733 = vmatprep.subr.mxu0 0.0
        %1734 = vmatpush1.msra.mxu0 0.0
        %1735 = vmatprep.subr.mxu0 0.0
        %1736 = vmatpush1.msra.mxu0 %v1662
        %1737 = vmatprep.subr.mxu0 0.0
        %1738 = vmatpush1.msra.mxu0 %v1661
        %1739 = vmatprep.subr.mxu0 0.0
        %1740 = vmatpush1.msra.mxu0 %v1660
        %1741 = vmatprep.subr.mxu0 0.0
        %1742 = vmatpush1.msra.mxu0 %v1659
        %1743 = vmatprep.subr.mxu0 0.0
        %1744 = vmatpush2.msra.mxu0 0.0
        %1745 = vmatprep.subr.mxu0 0.0
        %1746 = vmatpush2.msra.mxu0 0.0
        %1747 = vmatprep.subr.mxu0 0.0
        %1748 = vmatpush2.msra.mxu0 0.0
        %1749 = vmatprep.subr.mxu0 0.0
        %1750 = vmatpush2.msra.mxu0 0.0
        %1751 = vmatprep.subr.mxu0 0.0
        %1752 = vmatpush2.msra.mxu0 0.0
        %1753 = vmatprep.subr.mxu0 0.0
        %1754 = vmatpush2.msra.mxu0 0.0
        %1755 = vmatprep.subr.mxu0 0.0
        %1756 = vmatpush2.msra.mxu0 0.0
        %1757 = vmatprep.subr.mxu0 0.0
        %1758 = vmatpush2.msra.mxu0 0.0
        %1759 = vmatprep.subr.mxu0 0.0
        %1760 = vmatpush2.msra.mxu0 0.0
        %1761 = vmatprep.subr.mxu0 0.0
        %1762 = vmatpush2.msra.mxu0 0.0
        %1763 = vmatprep.subr.mxu0 0.0
        %1764 = vmatpush2.msra.mxu0 0.0
        %1765 = vmatprep.subr.mxu0 0.0
        %1766 = vmatpush2.msra.mxu0 0.0
        %1767 = vmatprep.subr.mxu0 0.0
        %1768 = vmatpush2.msra.mxu0 0.0
        %1769 = vmatprep.subr.mxu0 0.0
        %1770 = vmatpush2.msra.mxu0 0.0
        %1771 = vmatprep.subr.mxu0 0.0
        %1772 = vmatpush2.msra.mxu0 0.0
        %1773 = vmatprep.subr.mxu0 0.0
        %1774 = vmatpush2.msra.mxu0 0.0
        %1775 = vmatprep.mubr.f32.mxu0 0.0
        %1776 = vmatmul.mubr.f32.gmra.mxu0 %v1664
        %v1777 = vpop.f32.mrf.mxu0
        %v1778 = vadd.f32 0.0, %v1777
        %v1779 = vpop.f32.mrf.mxu0
        %1780 = vmatprep.mubr.f32.mxu0 0.0
        %1781 = vmatmul.mubr.f32.gmra.mxu0 %v1667
        %v1782 = vpop.f32.mrf.mxu0
        %v1783 = vadd.f32 0.0, %v1782
        %v1784 = vpop.f32.mrf.mxu0
        %1785 = vmatprep.mubr.f32.mxu0 0.0
        %1786 = vmatmul.mubr.f32.gmra.mxu0 %v1670
        %v1787 = vpop.f32.mrf.mxu0
        %v1788 = vadd.f32 0.0, %v1787
        %v1789 = vpop.f32.mrf.mxu0
        %1790 = vmatprep.mubr.f32.mxu0 0.0
        %1791 = vmatmul.mubr.f32.gmra.mxu0 %v1673
        %v1792 = vpop.f32.mrf.mxu0
        %v1793 = vadd.f32 0.0, %v1792
        %v1794 = vpop.f32.mrf.mxu0
        %1795 = vmatprep.mubr.f32.mxu0 0.0
        %1796 = vmatmul.mubr.f32.gmra.mxu0 %v1676
        %v1797 = vpop.f32.mrf.mxu0
        %v1798 = vadd.f32 0.0, %v1797
        %v1799 = vpop.f32.mrf.mxu0
        %1800 = vmatprep.mubr.f32.mxu0 0.0
        %1801 = vmatmul.mubr.f32.gmra.mxu0 %v1679
        %v1802 = vpop.f32.mrf.mxu0
        %v1803 = vadd.f32 0.0, %v1802
        %v1804 = vpop.f32.mrf.mxu0
        %1805 = vmatprep.mubr.f32.mxu0 0.0
        %1806 = vmatmul.mubr.f32.gmra.mxu0 %v1682
        %v1807 = vpop.f32.mrf.mxu0
        %v1808 = vadd.f32 0.0, %v1807
        %v1809 = vpop.f32.mrf.mxu0
        %1810 = vmatprep.mubr.f32.mxu0 0.0
        %1811 = vmatmul.mubr.f32.gmra.mxu0 %v1685
        %v1812 = vpop.f32.mrf.mxu0
        %v1813 = vadd.f32 0.0, %v1812
        %v1814 = vpop.f32.mrf.mxu0
        %1815 = vmatprep.mubr.f32.mxu0 0.0
        %1816 = vmatmul.mubr.f32.gmra.mxu0 %v1688
        %v1817 = vpop.f32.mrf.mxu0
        %v1818 = vadd.f32 0.0, %v1817
        %v1819 = vpop.f32.mrf.mxu0
        %1820 = vmatprep.mubr.f32.mxu0 0.0
        %1821 = vmatmul.mubr.f32.gmra.mxu0 %v1691
        %v1822 = vpop.f32.mrf.mxu0
        %v1823 = vadd.f32 0.0, %v1822
        %v1824 = vpop.f32.mrf.mxu0
        %1825 = vmatprep.mubr.f32.mxu0 0.0
        %1826 = vmatmul.mubr.f32.gmra.mxu0 %v1694
        %v1827 = vpop.f32.mrf.mxu0
        %v1828 = vadd.f32 0.0, %v1827
        %v1829 = vpop.f32.mrf.mxu0
        %1830 = vmatprep.mubr.f32.mxu0 0.0
        %1831 = vmatmul.mubr.f32.gmra.mxu0 %v1697
        %v1832 = vpop.f32.mrf.mxu0
        %v1833 = vadd.f32 0.0, %v1832
        %v1834 = vpop.f32.mrf.mxu0
        %1835 = vmatprep.mubr.f32.mxu0 0.0
        %1836 = vmatmul.mubr.f32.gmra.mxu0 %v1700
        %v1837 = vpop.f32.mrf.mxu0
        %v1838 = vadd.f32 0.0, %v1837
        %v1839 = vpop.f32.mrf.mxu0
        %1840 = vmatprep.mubr.f32.mxu0 0.0
        %1841 = vmatmul.mubr.f32.gmra.mxu0 %v1703
        %v1842 = vpop.f32.mrf.mxu0
        %v1843 = vadd.f32 0.0, %v1842
        %v1844 = vpop.f32.mrf.mxu0
        %1845 = vmatprep.mubr.f32.mxu0 0.0
        %1846 = vmatmul.mubr.f32.gmra.mxu0 %v1706
        %v1847 = vpop.f32.mrf.mxu0
        %v1848 = vadd.f32 0.0, %v1847
        %v1849 = vpop.f32.mrf.mxu0
        %1850 = vmatprep.mubr.f32.mxu0 0.0
        %1851 = vmatmul.mubr.f32.gmra.mxu0 %v1709
        %v1852 = vpop.f32.mrf.mxu0
        %v1853 = vadd.f32 0.0, %v1852
        %v1854 = vpop.f32.mrf.mxu0
        %1855 = vdwg.mxu0
        %v1856 = vld [vmem:[#allocation13] sm:$0xff]
        %v1857 = vld [vmem:[#allocation13 + $0x8] sm:$0xff]
        %v1858 = vld [vmem:[#allocation13 + $0x10] sm:$0xff]
        %v1859 = vld [vmem:[#allocation13 + $0x18] sm:$0xff]
        %v1861 = vsel %vm736, %v718, 0
        %v1864 = vsel %vm736, %v719, 0
        %v1867 = vsel %vm736, %v720, 0
        %v1870 = vsel %vm736, %v721, 0
        %v1873 = vsel %vm736, %v722, 0
        %v1876 = vsel %vm736, %v723, 0
        %v1879 = vsel %vm736, %v724, 0
        %v1882 = vsel %vm736, %v725, 0
        %v1885 = vsel %vm736, %v726, 0
        %v1888 = vsel %vm736, %v727, 0
        %v1891 = vsel %vm736, %v728, 0
        %v1894 = vsel %vm736, %v729, 0
        %v1897 = vsel %vm736, %v730, 0
        %v1900 = vsel %vm736, %v731, 0
        %v1903 = vsel %vm736, %v732, 0
        %v1906 = vsel %vm736, %v733, 0
        %1908 = vmatprep.subr.mxu0 0.0
        %1909 = vmatpush1.msra.mxu0 0.0
        %1910 = vmatprep.subr.mxu0 0.0
        %1911 = vmatpush1.msra.mxu0 0.0
        %1912 = vmatprep.subr.mxu0 0.0
        %1913 = vmatpush1.msra.mxu0 0.0
        %1914 = vmatprep.subr.mxu0 0.0
        %1915 = vmatpush1.msra.mxu0 0.0
        %1916 = vmatprep.subr.mxu0 0.0
        %1917 = vmatpush1.msra.mxu0 0.0
        %1918 = vmatprep.subr.mxu0 0.0
        %1919 = vmatpush1.msra.mxu0 0.0
        %1920 = vmatprep.subr.mxu0 0.0
        %1921 = vmatpush1.msra.mxu0 0.0
        %1922 = vmatprep.subr.mxu0 0.0
        %1923 = vmatpush1.msra.mxu0 0.0
        %1924 = vmatprep.subr.mxu0 0.0
        %1925 = vmatpush1.msra.mxu0 0.0
        %1926 = vmatprep.subr.mxu0 0.0
        %1927 = vmatpush1.msra.mxu0 0.0
        %1928 = vmatprep.subr.mxu0 0.0
        %1929 = vmatpush1.msra.mxu0 0.0
        %1930 = vmatprep.subr.mxu0 0.0
        %1931 = vmatpush1.msra.mxu0 0.0
        %1932 = vmatprep.subr.mxu0 0.0
        %1933 = vmatpush1.msra.mxu0 %v1859
        %1934 = vmatprep.subr.mxu0 0.0
        %1935 = vmatpush1.msra.mxu0 %v1858
        %1936 = vmatprep.subr.mxu0 0.0
        %1937 = vmatpush1.msra.mxu0 %v1857
        %1938 = vmatprep.subr.mxu0 0.0
        %1939 = vmatpush1.msra.mxu0 %v1856
        %1940 = vmatprep.subr.mxu0 0.0
        %1941 = vmatpush2.msra.mxu0 0.0
        %1942 = vmatprep.subr.mxu0 0.0
        %1943 = vmatpush2.msra.mxu0 0.0
        %1944 = vmatprep.subr.mxu0 0.0
        %1945 = vmatpush2.msra.mxu0 0.0
        %1946 = vmatprep.subr.mxu0 0.0
        %1947 = vmatpush2.msra.mxu0 0.0
        %1948 = vmatprep.subr.mxu0 0.0
        %1949 = vmatpush2.msra.mxu0 0.0
        %1950 = vmatprep.subr.mxu0 0.0
        %1951 = vmatpush2.msra.mxu0 0.0
        %1952 = vmatprep.subr.mxu0 0.0
        %1953 = vmatpush2.msra.mxu0 0.0
        %1954 = vmatprep.subr.mxu0 0.0
        %1955 = vmatpush2.msra.mxu0 0.0
        %1956 = vmatprep.subr.mxu0 0.0
        %1957 = vmatpush2.msra.mxu0 0.0
        %1958 = vmatprep.subr.mxu0 0.0
        %1959 = vmatpush2.msra.mxu0 0.0
        %1960 = vmatprep.subr.mxu0 0.0
        %1961 = vmatpush2.msra.mxu0 0.0
        %1962 = vmatprep.subr.mxu0 0.0
        %1963 = vmatpush2.msra.mxu0 0.0
        %1964 = vmatprep.subr.mxu0 0.0
        %1965 = vmatpush2.msra.mxu0 0.0
        %1966 = vmatprep.subr.mxu0 0.0
        %1967 = vmatpush2.msra.mxu0 0.0
        %1968 = vmatprep.subr.mxu0 0.0
        %1969 = vmatpush2.msra.mxu0 0.0
        %1970 = vmatprep.subr.mxu0 0.0
        %1971 = vmatpush2.msra.mxu0 0.0
        %1972 = vmatprep.mubr.f32.mxu0 0.0
        %1973 = vmatmul.mubr.f32.gmra.mxu0 %v1861
        %v1974 = vpop.f32.mrf.mxu0
        %v1975 = vadd.f32 0.0, %v1974
        %v1976 = vpop.f32.mrf.mxu0
        %1977 = vmatprep.mubr.f32.mxu0 0.0
        %1978 = vmatmul.mubr.f32.gmra.mxu0 %v1864
        %v1979 = vpop.f32.mrf.mxu0
        %v1980 = vadd.f32 0.0, %v1979
        %v1981 = vpop.f32.mrf.mxu0
        %1982 = vmatprep.mubr.f32.mxu0 0.0
        %1983 = vmatmul.mubr.f32.gmra.mxu0 %v1867
        %v1984 = vpop.f32.mrf.mxu0
        %v1985 = vadd.f32 0.0, %v1984
        %v1986 = vpop.f32.mrf.mxu0
        %1987 = vmatprep.mubr.f32.mxu0 0.0
        %1988 = vmatmul.mubr.f32.gmra.mxu0 %v1870
        %v1989 = vpop.f32.mrf.mxu0
        %v1990 = vadd.f32 0.0, %v1989
        %v1991 = vpop.f32.mrf.mxu0
        %1992 = vmatprep.mubr.f32.mxu0 0.0
        %1993 = vmatmul.mubr.f32.gmra.mxu0 %v1873
        %v1994 = vpop.f32.mrf.mxu0
        %v1995 = vadd.f32 0.0, %v1994
        %v1996 = vpop.f32.mrf.mxu0
        %1997 = vmatprep.mubr.f32.mxu0 0.0
        %1998 = vmatmul.mubr.f32.gmra.mxu0 %v1876
        %v1999 = vpop.f32.mrf.mxu0
        %v2000 = vadd.f32 0.0, %v1999
        %v2001 = vpop.f32.mrf.mxu0
        %2002 = vmatprep.mubr.f32.mxu0 0.0
        %2003 = vmatmul.mubr.f32.gmra.mxu0 %v1879
        %v2004 = vpop.f32.mrf.mxu0
        %v2005 = vadd.f32 0.0, %v2004
        %v2006 = vpop.f32.mrf.mxu0
        %2007 = vmatprep.mubr.f32.mxu0 0.0
        %2008 = vmatmul.mubr.f32.gmra.mxu0 %v1882
        %v2009 = vpop.f32.mrf.mxu0
        %v2010 = vadd.f32 0.0, %v2009
        %v2011 = vpop.f32.mrf.mxu0
        %2012 = vmatprep.mubr.f32.mxu0 0.0
        %2013 = vmatmul.mubr.f32.gmra.mxu0 %v1885
        %v2014 = vpop.f32.mrf.mxu0
        %v2015 = vadd.f32 0.0, %v2014
        %v2016 = vpop.f32.mrf.mxu0
        %2017 = vmatprep.mubr.f32.mxu0 0.0
        %2018 = vmatmul.mubr.f32.gmra.mxu0 %v1888
        %v2019 = vpop.f32.mrf.mxu0
        %v2020 = vadd.f32 0.0, %v2019
        %v2021 = vpop.f32.mrf.mxu0
        %2022 = vmatprep.mubr.f32.mxu0 0.0
        %2023 = vmatmul.mubr.f32.gmra.mxu0 %v1891
        %v2024 = vpop.f32.mrf.mxu0
        %v2025 = vadd.f32 0.0, %v2024
        %v2026 = vpop.f32.mrf.mxu0
        %2027 = vmatprep.mubr.f32.mxu0 0.0
        %2028 = vmatmul.mubr.f32.gmra.mxu0 %v1894
        %v2029 = vpop.f32.mrf.mxu0
        %v2030 = vadd.f32 0.0, %v2029
        %v2031 = vpop.f32.mrf.mxu0
        %2032 = vmatprep.mubr.f32.mxu0 0.0
        %2033 = vmatmul.mubr.f32.gmra.mxu0 %v1897
        %v2034 = vpop.f32.mrf.mxu0
        %v2035 = vadd.f32 0.0, %v2034
        %v2036 = vpop.f32.mrf.mxu0
        %2037 = vmatprep.mubr.f32.mxu0 0.0
        %2038 = vmatmul.mubr.f32.gmra.mxu0 %v1900
        %v2039 = vpop.f32.mrf.mxu0
        %v2040 = vadd.f32 0.0, %v2039
        %v2041 = vpop.f32.mrf.mxu0
        %2042 = vmatprep.mubr.f32.mxu0 0.0
        %2043 = vmatmul.mubr.f32.gmra.mxu0 %v1903
        %v2044 = vpop.f32.mrf.mxu0
        %v2045 = vadd.f32 0.0, %v2044
        %v2046 = vpop.f32.mrf.mxu0
        %2047 = vmatprep.mubr.f32.mxu0 0.0
        %2048 = vmatmul.mubr.f32.gmra.mxu0 %v1906
        %v2049 = vpop.f32.mrf.mxu0
        %v2050 = vadd.f32 0.0, %v2049
        %v2051 = vpop.f32.mrf.mxu0
        %2052 = vdwg.mxu0
        %2069 = vrot.lane.b32.xlu0 %v1581, 112
        %v2070 = vpop.permute.xlu0 %2069
        %2071 = vrot.lane.b32.xlu0 %v1586, 112
        %v2072 = vpop.permute.xlu0 %2071
        %2073 = vrot.lane.b32.xlu0 %v1591, 112
        %v2074 = vpop.permute.xlu0 %2073
        %2075 = vrot.lane.b32.xlu0 %v1596, 112
        %v2076 = vpop.permute.xlu0 %2075
        %2077 = vrot.lane.b32.xlu0 %v1601, 112
        %v2078 = vpop.permute.xlu0 %2077
        %2079 = vrot.lane.b32.xlu0 %v1606, 112
        %v2080 = vpop.permute.xlu0 %2079
        %2081 = vrot.lane.b32.xlu0 %v1611, 112
        %v2082 = vpop.permute.xlu0 %2081
        %2083 = vrot.lane.b32.xlu0 %v1616, 112
        %v2084 = vpop.permute.xlu0 %2083
        %2085 = vrot.lane.b32.xlu0 %v1621, 112
        %v2086 = vpop.permute.xlu0 %2085
        %2087 = vrot.lane.b32.xlu0 %v1626, 112
        %v2088 = vpop.permute.xlu0 %2087
        %2089 = vrot.lane.b32.xlu0 %v1631, 112
        %v2090 = vpop.permute.xlu0 %2089
        %2091 = vrot.lane.b32.xlu0 %v1636, 112
        %v2092 = vpop.permute.xlu0 %2091
        %2093 = vrot.lane.b32.xlu0 %v1641, 112
        %v2094 = vpop.permute.xlu0 %2093
        %2095 = vrot.lane.b32.xlu0 %v1646, 112
        %v2096 = vpop.permute.xlu0 %2095
        %2097 = vrot.lane.b32.xlu0 %v1651, 112
        %v2098 = vpop.permute.xlu0 %2097
        %2099 = vrot.lane.b32.xlu0 %v1656, 112
        %v2100 = vpop.permute.xlu0 %2099
        %2117 = vrot.lane.b32.xlu0 %v1778, 112
        %v2118 = vpop.permute.xlu0 %2117
        %2119 = vrot.lane.b32.xlu0 %v1783, 112
        %v2120 = vpop.permute.xlu0 %2119
        %2121 = vrot.lane.b32.xlu0 %v1788, 112
        %v2122 = vpop.permute.xlu0 %2121
        %2123 = vrot.lane.b32.xlu0 %v1793, 112
        %v2124 = vpop.permute.xlu0 %2123
        %2125 = vrot.lane.b32.xlu0 %v1798, 112
        %v2126 = vpop.permute.xlu0 %2125
        %2127 = vrot.lane.b32.xlu0 %v1803, 112
        %v2128 = vpop.permute.xlu0 %2127
        %2129 = vrot.lane.b32.xlu0 %v1808, 112
        %v2130 = vpop.permute.xlu0 %2129
        %2131 = vrot.lane.b32.xlu0 %v1813, 112
        %v2132 = vpop.permute.xlu0 %2131
        %2133 = vrot.lane.b32.xlu0 %v1818, 112
        %v2134 = vpop.permute.xlu0 %2133
        %2135 = vrot.lane.b32.xlu0 %v1823, 112
        %v2136 = vpop.permute.xlu0 %2135
        %2137 = vrot.lane.b32.xlu0 %v1828, 112
        %v2138 = vpop.permute.xlu0 %2137
        %2139 = vrot.lane.b32.xlu0 %v1833, 112
        %v2140 = vpop.permute.xlu0 %2139
        %2141 = vrot.lane.b32.xlu0 %v1838, 112
        %v2142 = vpop.permute.xlu0 %2141
        %2143 = vrot.lane.b32.xlu0 %v1843, 112
        %v2144 = vpop.permute.xlu0 %2143
        %2145 = vrot.lane.b32.xlu0 %v1848, 112
        %v2146 = vpop.permute.xlu0 %2145
        %2147 = vrot.lane.b32.xlu0 %v1853, 112
        %v2148 = vpop.permute.xlu0 %2147
        %2165 = vrot.lane.b32.xlu0 %v1975, 112
        %v2166 = vpop.permute.xlu0 %2165
        %2167 = vrot.lane.b32.xlu0 %v1980, 112
        %v2168 = vpop.permute.xlu0 %2167
        %2169 = vrot.lane.b32.xlu0 %v1985, 112
        %v2170 = vpop.permute.xlu0 %2169
        %2171 = vrot.lane.b32.xlu0 %v1990, 112
        %v2172 = vpop.permute.xlu0 %2171
        %2173 = vrot.lane.b32.xlu0 %v1995, 112
        %v2174 = vpop.permute.xlu0 %2173
        %2175 = vrot.lane.b32.xlu0 %v2000, 112
        %v2176 = vpop.permute.xlu0 %2175
        %2177 = vrot.lane.b32.xlu0 %v2005, 112
        %v2178 = vpop.permute.xlu0 %2177
        %2179 = vrot.lane.b32.xlu0 %v2010, 112
        %v2180 = vpop.permute.xlu0 %2179
        %2181 = vrot.lane.b32.xlu0 %v2015, 112
        %v2182 = vpop.permute.xlu0 %2181
        %2183 = vrot.lane.b32.xlu0 %v2020, 112
        %v2184 = vpop.permute.xlu0 %2183
        %2185 = vrot.lane.b32.xlu0 %v2025, 112
        %v2186 = vpop.permute.xlu0 %2185
        %2187 = vrot.lane.b32.xlu0 %v2030, 112
        %v2188 = vpop.permute.xlu0 %2187
        %2189 = vrot.lane.b32.xlu0 %v2035, 112
        %v2190 = vpop.permute.xlu0 %2189
        %2191 = vrot.lane.b32.xlu0 %v2040, 112
        %v2192 = vpop.permute.xlu0 %2191
        %2193 = vrot.lane.b32.xlu0 %v2045, 112
        %v2194 = vpop.permute.xlu0 %2193
        %2195 = vrot.lane.b32.xlu0 %v2050, 112
        %v2196 = vpop.permute.xlu0 %2195
        %vm2213 = vcmask 130048
        %v2214 = vsel %vm2213, %v1581, 0
        %v2216 = vsel %vm2213, %v1586, 0
        %v2218 = vsel %vm2213, %v1778, 0
        %v2220 = vsel %vm2213, %v1783, 0
        %2222 = vmatprep.subr.mxu0 0.0
        %2223 = vmatpush1.xpose.msra.mxu0 0.0
        %2224 = vmatprep.subr.mxu0 0.0
        %2225 = vmatpush1.xpose.msra.mxu0 0.0
        %2226 = vmatprep.subr.mxu0 0.0
        %2227 = vmatpush1.xpose.msra.mxu0 0.0
        %2228 = vmatprep.subr.mxu0 0.0
        %2229 = vmatpush1.xpose.msra.mxu0 0.0
        %2230 = vmatprep.subr.mxu0 0.0
        %2231 = vmatpush1.xpose.msra.mxu0 0.0
        %2232 = vmatprep.subr.mxu0 0.0
        %2233 = vmatpush1.xpose.msra.mxu0 0.0
        %2234 = vmatprep.subr.mxu0 0.0
        %2235 = vmatpush1.xpose.msra.mxu0 0.0
        %2236 = vmatprep.subr.mxu0 0.0
        %2237 = vmatpush1.xpose.msra.mxu0 0.0
        %2238 = vmatprep.subr.mxu0 0.0
        %2239 = vmatpush1.xpose.msra.mxu0 0.0
        %2240 = vmatprep.subr.mxu0 0.0
        %2241 = vmatpush1.xpose.msra.mxu0 0.0
        %2242 = vmatprep.subr.mxu0 0.0
        %2243 = vmatpush1.xpose.msra.mxu0 0.0
        %2244 = vmatprep.subr.mxu0 0.0
        %2245 = vmatpush1.xpose.msra.mxu0 0.0
        %2246 = vmatprep.subr.mxu0 0.0
        %2247 = vmatpush1.xpose.msra.mxu0 0.0
        %2248 = vmatprep.subr.mxu0 0.0
        %2249 = vmatpush1.xpose.msra.mxu0 0.0
        %2250 = vmatprep.subr.mxu0 0.0
        %2251 = vmatpush1.xpose.msra.mxu0 %v2220
        %2252 = vmatprep.subr.mxu0 0.0
        %2253 = vmatpush1.xpose.msra.mxu0 %v2218
        %2254 = vmatprep.subr.mxu0 0.0
        %2255 = vmatpush2.xpose.msra.mxu0 0.0
        %2256 = vmatprep.subr.mxu0 0.0
        %2257 = vmatpush2.xpose.msra.mxu0 0.0
        %2258 = vmatprep.subr.mxu0 0.0
        %2259 = vmatpush2.xpose.msra.mxu0 0.0
        %2260 = vmatprep.subr.mxu0 0.0
        %2261 = vmatpush2.xpose.msra.mxu0 0.0
        %2262 = vmatprep.subr.mxu0 0.0
        %2263 = vmatpush2.xpose.msra.mxu0 0.0
        %2264 = vmatprep.subr.mxu0 0.0
        %2265 = vmatpush2.xpose.msra.mxu0 0.0
        %2266 = vmatprep.subr.mxu0 0.0
        %2267 = vmatpush2.xpose.msra.mxu0 0.0
        %2268 = vmatprep.subr.mxu0 0.0
        %2269 = vmatpush2.xpose.msra.mxu0 0.0
        %2270 = vmatprep.subr.mxu0 0.0
        %2271 = vmatpush2.xpose.msra.mxu0 0.0
        %2272 = vmatprep.subr.mxu0 0.0
        %2273 = vmatpush2.xpose.msra.mxu0 0.0
        %2274 = vmatprep.subr.mxu0 0.0
        %2275 = vmatpush2.xpose.msra.mxu0 0.0
        %2276 = vmatprep.subr.mxu0 0.0
        %2277 = vmatpush2.xpose.msra.mxu0 0.0
        %2278 = vmatprep.subr.mxu0 0.0
        %2279 = vmatpush2.xpose.msra.mxu0 0.0
        %2280 = vmatprep.subr.mxu0 0.0
        %2281 = vmatpush2.xpose.msra.mxu0 0.0
        %2282 = vmatprep.subr.mxu0 0.0
        %2283 = vmatpush2.xpose.msra.mxu0 0.0
        %2284 = vmatprep.subr.mxu0 0.0
        %2285 = vmatpush2.xpose.msra.mxu0 0.0
        %2286 = vmatprep.mubr.f32.mxu0 0.0
        %2287 = vmatmul.mubr.f32.gmra.mxu0 %v2214
        %v2288 = vpop.f32.mrf.mxu0
        %v2289 = vadd.f32 0.0, %v2288
        %v2290 = vpop.f32.mrf.mxu0
        %2291 = vmatprep.mubr.f32.mxu0 0.0
        %2292 = vmatmul.mubr.f32.gmra.mxu0 %v2216
        %v2293 = vpop.f32.mrf.mxu0
        %v2294 = vadd.f32 0.0, %v2293
        %v2295 = vpop.f32.mrf.mxu0
        %2296 = vdwg.mxu0
        %v2297 = vsel %vm2213, %v1591, 0
        %v2299 = vsel %vm2213, %v1596, 0
        %v2301 = vsel %vm2213, %v1788, 0
        %v2303 = vsel %vm2213, %v1793, 0
        %2305 = vmatprep.subr.mxu0 0.0
        %2306 = vmatpush1.xpose.msra.mxu0 0.0
        %2307 = vmatprep.subr.mxu0 0.0
        %2308 = vmatpush1.xpose.msra.mxu0 0.0
        %2309 = vmatprep.subr.mxu0 0.0
        %2310 = vmatpush1.xpose.msra.mxu0 0.0
        %2311 = vmatprep.subr.mxu0 0.0
        %2312 = vmatpush1.xpose.msra.mxu0 0.0
        %2313 = vmatprep.subr.mxu0 0.0
        %2314 = vmatpush1.xpose.msra.mxu0 0.0
        %2315 = vmatprep.subr.mxu0 0.0
        %2316 = vmatpush1.xpose.msra.mxu0 0.0
        %2317 = vmatprep.subr.mxu0 0.0
        %2318 = vmatpush1.xpose.msra.mxu0 0.0
        %2319 = vmatprep.subr.mxu0 0.0
        %2320 = vmatpush1.xpose.msra.mxu0 0.0
        %2321 = vmatprep.subr.mxu0 0.0
        %2322 = vmatpush1.xpose.msra.mxu0 0.0
        %2323 = vmatprep.subr.mxu0 0.0
        %2324 = vmatpush1.xpose.msra.mxu0 0.0
        %2325 = vmatprep.subr.mxu0 0.0
        %2326 = vmatpush1.xpose.msra.mxu0 0.0
        %2327 = vmatprep.subr.mxu0 0.0
        %2328 = vmatpush1.xpose.msra.mxu0 0.0
        %2329 = vmatprep.subr.mxu0 0.0
        %2330 = vmatpush1.xpose.msra.mxu0 0.0
        %2331 = vmatprep.subr.mxu0 0.0
        %2332 = vmatpush1.xpose.msra.mxu0 0.0
        %2333 = vmatprep.subr.mxu0 0.0
        %2334 = vmatpush1.xpose.msra.mxu0 %v2303
        %2335 = vmatprep.subr.mxu0 0.0
        %2336 = vmatpush1.xpose.msra.mxu0 %v2301
        %2337 = vmatprep.subr.mxu0 0.0
        %2338 = vmatpush2.xpose.msra.mxu0 0.0
        %2339 = vmatprep.subr.mxu0 0.0
        %2340 = vmatpush2.xpose.msra.mxu0 0.0
        %2341 = vmatprep.subr.mxu0 0.0
        %2342 = vmatpush2.xpose.msra.mxu0 0.0
        %2343 = vmatprep.subr.mxu0 0.0
        %2344 = vmatpush2.xpose.msra.mxu0 0.0
        %2345 = vmatprep.subr.mxu0 0.0
        %2346 = vmatpush2.xpose.msra.mxu0 0.0
        %2347 = vmatprep.subr.mxu0 0.0
        %2348 = vmatpush2.xpose.msra.mxu0 0.0
        %2349 = vmatprep.subr.mxu0 0.0
        %2350 = vmatpush2.xpose.msra.mxu0 0.0
        %2351 = vmatprep.subr.mxu0 0.0
        %2352 = vmatpush2.xpose.msra.mxu0 0.0
        %2353 = vmatprep.subr.mxu0 0.0
        %2354 = vmatpush2.xpose.msra.mxu0 0.0
        %2355 = vmatprep.subr.mxu0 0.0
        %2356 = vmatpush2.xpose.msra.mxu0 0.0
        %2357 = vmatprep.subr.mxu0 0.0
        %2358 = vmatpush2.xpose.msra.mxu0 0.0
        %2359 = vmatprep.subr.mxu0 0.0
        %2360 = vmatpush2.xpose.msra.mxu0 0.0
        %2361 = vmatprep.subr.mxu0 0.0
        %2362 = vmatpush2.xpose.msra.mxu0 0.0
        %2363 = vmatprep.subr.mxu0 0.0
        %2364 = vmatpush2.xpose.msra.mxu0 0.0
        %2365 = vmatprep.subr.mxu0 0.0
        %2366 = vmatpush2.xpose.msra.mxu0 0.0
        %2367 = vmatprep.subr.mxu0 0.0
        %2368 = vmatpush2.xpose.msra.mxu0 0.0
        %2369 = vmatprep.mubr.f32.mxu0 0.0
        %2370 = vmatmul.mubr.f32.gmra.mxu0 %v2297
        %v2371 = vpop.f32.mrf.mxu0
        %v2372 = vadd.f32 0.0, %v2371
        %v2373 = vpop.f32.mrf.mxu0
        %2374 = vmatprep.mubr.f32.mxu0 0.0
        %2375 = vmatmul.mubr.f32.gmra.mxu0 %v2299
        %v2376 = vpop.f32.mrf.mxu0
        %v2377 = vadd.f32 0.0, %v2376
        %v2378 = vpop.f32.mrf.mxu0
        %2379 = vdwg.mxu0
        %v2380 = vsel %vm2213, %v1601, 0
        %v2382 = vsel %vm2213, %v1606, 0
        %v2384 = vsel %vm2213, %v1798, 0
        %v2386 = vsel %vm2213, %v1803, 0
        %2388 = vmatprep.subr.mxu0 0.0
        %2389 = vmatpush1.xpose.msra.mxu0 0.0
        %2390 = vmatprep.subr.mxu0 0.0
        %2391 = vmatpush1.xpose.msra.mxu0 0.0
        %2392 = vmatprep.subr.mxu0 0.0
        %2393 = vmatpush1.xpose.msra.mxu0 0.0
        %2394 = vmatprep.subr.mxu0 0.0
        %2395 = vmatpush1.xpose.msra.mxu0 0.0
        %2396 = vmatprep.subr.mxu0 0.0
        %2397 = vmatpush1.xpose.msra.mxu0 0.0
        %2398 = vmatprep.subr.mxu0 0.0
        %2399 = vmatpush1.xpose.msra.mxu0 0.0
        %2400 = vmatprep.subr.mxu0 0.0
        %2401 = vmatpush1.xpose.msra.mxu0 0.0
        %2402 = vmatprep.subr.mxu0 0.0
        %2403 = vmatpush1.xpose.msra.mxu0 0.0
        %2404 = vmatprep.subr.mxu0 0.0
        %2405 = vmatpush1.xpose.msra.mxu0 0.0
        %2406 = vmatprep.subr.mxu0 0.0
        %2407 = vmatpush1.xpose.msra.mxu0 0.0
        %2408 = vmatprep.subr.mxu0 0.0
        %2409 = vmatpush1.xpose.msra.mxu0 0.0
        %2410 = vmatprep.subr.mxu0 0.0
        %2411 = vmatpush1.xpose.msra.mxu0 0.0
        %2412 = vmatprep.subr.mxu0 0.0
        %2413 = vmatpush1.xpose.msra.mxu0 0.0
        %2414 = vmatprep.subr.mxu0 0.0
        %2415 = vmatpush1.xpose.msra.mxu0 0.0
        %2416 = vmatprep.subr.mxu0 0.0
        %2417 = vmatpush1.xpose.msra.mxu0 %v2386
        %2418 = vmatprep.subr.mxu0 0.0
        %2419 = vmatpush1.xpose.msra.mxu0 %v2384
        %2420 = vmatprep.subr.mxu0 0.0
        %2421 = vmatpush2.xpose.msra.mxu0 0.0
        %2422 = vmatprep.subr.mxu0 0.0
        %2423 = vmatpush2.xpose.msra.mxu0 0.0
        %2424 = vmatprep.subr.mxu0 0.0
        %2425 = vmatpush2.xpose.msra.mxu0 0.0
        %2426 = vmatprep.subr.mxu0 0.0
        %2427 = vmatpush2.xpose.msra.mxu0 0.0
        %2428 = vmatprep.subr.mxu0 0.0
        %2429 = vmatpush2.xpose.msra.mxu0 0.0
        %2430 = vmatprep.subr.mxu0 0.0
        %2431 = vmatpush2.xpose.msra.mxu0 0.0
        %2432 = vmatprep.subr.mxu0 0.0
        %2433 = vmatpush2.xpose.msra.mxu0 0.0
        %2434 = vmatprep.subr.mxu0 0.0
        %2435 = vmatpush2.xpose.msra.mxu0 0.0
        %2436 = vmatprep.subr.mxu0 0.0
        %2437 = vmatpush2.xpose.msra.mxu0 0.0
        %2438 = vmatprep.subr.mxu0 0.0
        %2439 = vmatpush2.xpose.msra.mxu0 0.0
        %2440 = vmatprep.subr.mxu0 0.0
        %2441 = vmatpush2.xpose.msra.mxu0 0.0
        %2442 = vmatprep.subr.mxu0 0.0
        %2443 = vmatpush2.xpose.msra.mxu0 0.0
        %2444 = vmatprep.subr.mxu0 0.0
        %2445 = vmatpush2.xpose.msra.mxu0 0.0
        %2446 = vmatprep.subr.mxu0 0.0
        %2447 = vmatpush2.xpose.msra.mxu0 0.0
        %2448 = vmatprep.subr.mxu0 0.0
        %2449 = vmatpush2.xpose.msra.mxu0 0.0
        %2450 = vmatprep.subr.mxu0 0.0
        %2451 = vmatpush2.xpose.msra.mxu0 0.0
        %2452 = vmatprep.mubr.f32.mxu0 0.0
        %2453 = vmatmul.mubr.f32.gmra.mxu0 %v2380
        %v2454 = vpop.f32.mrf.mxu0
        %v2455 = vadd.f32 0.0, %v2454
        %v2456 = vpop.f32.mrf.mxu0
        %2457 = vmatprep.mubr.f32.mxu0 0.0
        %2458 = vmatmul.mubr.f32.gmra.mxu0 %v2382
        %v2459 = vpop.f32.mrf.mxu0
        %v2460 = vadd.f32 0.0, %v2459
        %v2461 = vpop.f32.mrf.mxu0
        %2462 = vdwg.mxu0
        %v2463 = vsel %vm2213, %v1611, 0
        %v2465 = vsel %vm2213, %v1616, 0
        %v2467 = vsel %vm2213, %v1808, 0
        %v2469 = vsel %vm2213, %v1813, 0
        %2471 = vmatprep.subr.mxu0 0.0
        %2472 = vmatpush1.xpose.msra.mxu0 0.0
        %2473 = vmatprep.subr.mxu0 0.0
        %2474 = vmatpush1.xpose.msra.mxu0 0.0
        %2475 = vmatprep.subr.mxu0 0.0
        %2476 = vmatpush1.xpose.msra.mxu0 0.0
        %2477 = vmatprep.subr.mxu0 0.0
        %2478 = vmatpush1.xpose.msra.mxu0 0.0
        %2479 = vmatprep.subr.mxu0 0.0
        %2480 = vmatpush1.xpose.msra.mxu0 0.0
        %2481 = vmatprep.subr.mxu0 0.0
        %2482 = vmatpush1.xpose.msra.mxu0 0.0
        %2483 = vmatprep.subr.mxu0 0.0
        %2484 = vmatpush1.xpose.msra.mxu0 0.0
        %2485 = vmatprep.subr.mxu0 0.0
        %2486 = vmatpush1.xpose.msra.mxu0 0.0
        %2487 = vmatprep.subr.mxu0 0.0
        %2488 = vmatpush1.xpose.msra.mxu0 0.0
        %2489 = vmatprep.subr.mxu0 0.0
        %2490 = vmatpush1.xpose.msra.mxu0 0.0
        %2491 = vmatprep.subr.mxu0 0.0
        %2492 = vmatpush1.xpose.msra.mxu0 0.0
        %2493 = vmatprep.subr.mxu0 0.0
        %2494 = vmatpush1.xpose.msra.mxu0 0.0
        %2495 = vmatprep.subr.mxu0 0.0
        %2496 = vmatpush1.xpose.msra.mxu0 0.0
        %2497 = vmatprep.subr.mxu0 0.0
        %2498 = vmatpush1.xpose.msra.mxu0 0.0
        %2499 = vmatprep.subr.mxu0 0.0
        %2500 = vmatpush1.xpose.msra.mxu0 %v2469
        %2501 = vmatprep.subr.mxu0 0.0
        %2502 = vmatpush1.xpose.msra.mxu0 %v2467
        %2503 = vmatprep.subr.mxu0 0.0
        %2504 = vmatpush2.xpose.msra.mxu0 0.0
        %2505 = vmatprep.subr.mxu0 0.0
        %2506 = vmatpush2.xpose.msra.mxu0 0.0
        %2507 = vmatprep.subr.mxu0 0.0
        %2508 = vmatpush2.xpose.msra.mxu0 0.0
        %2509 = vmatprep.subr.mxu0 0.0
        %2510 = vmatpush2.xpose.msra.mxu0 0.0
        %2511 = vmatprep.subr.mxu0 0.0
        %2512 = vmatpush2.xpose.msra.mxu0 0.0
        %2513 = vmatprep.subr.mxu0 0.0
        %2514 = vmatpush2.xpose.msra.mxu0 0.0
        %2515 = vmatprep.subr.mxu0 0.0
        %2516 = vmatpush2.xpose.msra.mxu0 0.0
        %2517 = vmatprep.subr.mxu0 0.0
        %2518 = vmatpush2.xpose.msra.mxu0 0.0
        %2519 = vmatprep.subr.mxu0 0.0
        %2520 = vmatpush2.xpose.msra.mxu0 0.0
        %2521 = vmatprep.subr.mxu0 0.0
        %2522 = vmatpush2.xpose.msra.mxu0 0.0
        %2523 = vmatprep.subr.mxu0 0.0
        %2524 = vmatpush2.xpose.msra.mxu0 0.0
        %2525 = vmatprep.subr.mxu0 0.0
        %2526 = vmatpush2.xpose.msra.mxu0 0.0
        %2527 = vmatprep.subr.mxu0 0.0
        %2528 = vmatpush2.xpose.msra.mxu0 0.0
        %2529 = vmatprep.subr.mxu0 0.0
        %2530 = vmatpush2.xpose.msra.mxu0 0.0
        %2531 = vmatprep.subr.mxu0 0.0
        %2532 = vmatpush2.xpose.msra.mxu0 0.0
        %2533 = vmatprep.subr.mxu0 0.0
        %2534 = vmatpush2.xpose.msra.mxu0 0.0
        %2535 = vmatprep.mubr.f32.mxu0 0.0
        %2536 = vmatmul.mubr.f32.gmra.mxu0 %v2463
        %v2537 = vpop.f32.mrf.mxu0
        %v2538 = vadd.f32 0.0, %v2537
        %v2539 = vpop.f32.mrf.mxu0
        %2540 = vmatprep.mubr.f32.mxu0 0.0
        %2541 = vmatmul.mubr.f32.gmra.mxu0 %v2465
        %v2542 = vpop.f32.mrf.mxu0
        %v2543 = vadd.f32 0.0, %v2542
        %v2544 = vpop.f32.mrf.mxu0
        %2545 = vdwg.mxu0
        %v2546 = vsel %vm2213, %v1621, 0
        %v2548 = vsel %vm2213, %v1626, 0
        %v2550 = vsel %vm2213, %v1818, 0
        %v2552 = vsel %vm2213, %v1823, 0
        %2554 = vmatprep.subr.mxu0 0.0
        %2555 = vmatpush1.xpose.msra.mxu0 0.0
        %2556 = vmatprep.subr.mxu0 0.0
        %2557 = vmatpush1.xpose.msra.mxu0 0.0
        %2558 = vmatprep.subr.mxu0 0.0
        %2559 = vmatpush1.xpose.msra.mxu0 0.0
        %2560 = vmatprep.subr.mxu0 0.0
        %2561 = vmatpush1.xpose.msra.mxu0 0.0
        %2562 = vmatprep.subr.mxu0 0.0
        %2563 = vmatpush1.xpose.msra.mxu0 0.0
        %2564 = vmatprep.subr.mxu0 0.0
        %2565 = vmatpush1.xpose.msra.mxu0 0.0
        %2566 = vmatprep.subr.mxu0 0.0
        %2567 = vmatpush1.xpose.msra.mxu0 0.0
        %2568 = vmatprep.subr.mxu0 0.0
        %2569 = vmatpush1.xpose.msra.mxu0 0.0
        %2570 = vmatprep.subr.mxu0 0.0
        %2571 = vmatpush1.xpose.msra.mxu0 0.0
        %2572 = vmatprep.subr.mxu0 0.0
        %2573 = vmatpush1.xpose.msra.mxu0 0.0
        %2574 = vmatprep.subr.mxu0 0.0
        %2575 = vmatpush1.xpose.msra.mxu0 0.0
        %2576 = vmatprep.subr.mxu0 0.0
        %2577 = vmatpush1.xpose.msra.mxu0 0.0
        %2578 = vmatprep.subr.mxu0 0.0
        %2579 = vmatpush1.xpose.msra.mxu0 0.0
        %2580 = vmatprep.subr.mxu0 0.0
        %2581 = vmatpush1.xpose.msra.mxu0 0.0
        %2582 = vmatprep.subr.mxu0 0.0
        %2583 = vmatpush1.xpose.msra.mxu0 %v2552
        %2584 = vmatprep.subr.mxu0 0.0
        %2585 = vmatpush1.xpose.msra.mxu0 %v2550
        %2586 = vmatprep.subr.mxu0 0.0
        %2587 = vmatpush2.xpose.msra.mxu0 0.0
        %2588 = vmatprep.subr.mxu0 0.0
        %2589 = vmatpush2.xpose.msra.mxu0 0.0
        %2590 = vmatprep.subr.mxu0 0.0
        %2591 = vmatpush2.xpose.msra.mxu0 0.0
        %2592 = vmatprep.subr.mxu0 0.0
        %2593 = vmatpush2.xpose.msra.mxu0 0.0
        %2594 = vmatprep.subr.mxu0 0.0
        %2595 = vmatpush2.xpose.msra.mxu0 0.0
        %2596 = vmatprep.subr.mxu0 0.0
        %2597 = vmatpush2.xpose.msra.mxu0 0.0
        %2598 = vmatprep.subr.mxu0 0.0
        %2599 = vmatpush2.xpose.msra.mxu0 0.0
        %2600 = vmatprep.subr.mxu0 0.0
        %2601 = vmatpush2.xpose.msra.mxu0 0.0
        %2602 = vmatprep.subr.mxu0 0.0
        %2603 = vmatpush2.xpose.msra.mxu0 0.0
        %2604 = vmatprep.subr.mxu0 0.0
        %2605 = vmatpush2.xpose.msra.mxu0 0.0
        %2606 = vmatprep.subr.mxu0 0.0
        %2607 = vmatpush2.xpose.msra.mxu0 0.0
        %2608 = vmatprep.subr.mxu0 0.0
        %2609 = vmatpush2.xpose.msra.mxu0 0.0
        %2610 = vmatprep.subr.mxu0 0.0
        %2611 = vmatpush2.xpose.msra.mxu0 0.0
        %2612 = vmatprep.subr.mxu0 0.0
        %2613 = vmatpush2.xpose.msra.mxu0 0.0
        %2614 = vmatprep.subr.mxu0 0.0
        %2615 = vmatpush2.xpose.msra.mxu0 0.0
        %2616 = vmatprep.subr.mxu0 0.0
        %2617 = vmatpush2.xpose.msra.mxu0 0.0
        %2618 = vmatprep.mubr.f32.mxu0 0.0
        %2619 = vmatmul.mubr.f32.gmra.mxu0 %v2546
        %v2620 = vpop.f32.mrf.mxu0
        %v2621 = vadd.f32 0.0, %v2620
        %v2622 = vpop.f32.mrf.mxu0
        %2623 = vmatprep.mubr.f32.mxu0 0.0
        %2624 = vmatmul.mubr.f32.gmra.mxu0 %v2548
        %v2625 = vpop.f32.mrf.mxu0
        %v2626 = vadd.f32 0.0, %v2625
        %v2627 = vpop.f32.mrf.mxu0
        %2628 = vdwg.mxu0
        %v2629 = vsel %vm2213, %v1631, 0
        %v2631 = vsel %vm2213, %v1636, 0
        %v2633 = vsel %vm2213, %v1828, 0
        %v2635 = vsel %vm2213, %v1833, 0
        %2637 = vmatprep.subr.mxu0 0.0
        %2638 = vmatpush1.xpose.msra.mxu0 0.0
        %2639 = vmatprep.subr.mxu0 0.0
        %2640 = vmatpush1.xpose.msra.mxu0 0.0
        %2641 = vmatprep.subr.mxu0 0.0
        %2642 = vmatpush1.xpose.msra.mxu0 0.0
        %2643 = vmatprep.subr.mxu0 0.0
        %2644 = vmatpush1.xpose.msra.mxu0 0.0
        %2645 = vmatprep.subr.mxu0 0.0
        %2646 = vmatpush1.xpose.msra.mxu0 0.0
        %2647 = vmatprep.subr.mxu0 0.0
        %2648 = vmatpush1.xpose.msra.mxu0 0.0
        %2649 = vmatprep.subr.mxu0 0.0
        %2650 = vmatpush1.xpose.msra.mxu0 0.0
        %2651 = vmatprep.subr.mxu0 0.0
        %2652 = vmatpush1.xpose.msra.mxu0 0.0
        %2653 = vmatprep.subr.mxu0 0.0
        %2654 = vmatpush1.xpose.msra.mxu0 0.0
        %2655 = vmatprep.subr.mxu0 0.0
        %2656 = vmatpush1.xpose.msra.mxu0 0.0
        %2657 = vmatprep.subr.mxu0 0.0
        %2658 = vmatpush1.xpose.msra.mxu0 0.0
        %2659 = vmatprep.subr.mxu0 0.0
        %2660 = vmatpush1.xpose.msra.mxu0 0.0
        %2661 = vmatprep.subr.mxu0 0.0
        %2662 = vmatpush1.xpose.msra.mxu0 0.0
        %2663 = vmatprep.subr.mxu0 0.0
        %2664 = vmatpush1.xpose.msra.mxu0 0.0
        %2665 = vmatprep.subr.mxu0 0.0
        %2666 = vmatpush1.xpose.msra.mxu0 %v2635
        %2667 = vmatprep.subr.mxu0 0.0
        %2668 = vmatpush1.xpose.msra.mxu0 %v2633
        %2669 = vmatprep.subr.mxu0 0.0
        %2670 = vmatpush2.xpose.msra.mxu0 0.0
        %2671 = vmatprep.subr.mxu0 0.0
        %2672 = vmatpush2.xpose.msra.mxu0 0.0
        %2673 = vmatprep.subr.mxu0 0.0
        %2674 = vmatpush2.xpose.msra.mxu0 0.0
        %2675 = vmatprep.subr.mxu0 0.0
        %2676 = vmatpush2.xpose.msra.mxu0 0.0
        %2677 = vmatprep.subr.mxu0 0.0
        %2678 = vmatpush2.xpose.msra.mxu0 0.0
        %2679 = vmatprep.subr.mxu0 0.0
        %2680 = vmatpush2.xpose.msra.mxu0 0.0
        %2681 = vmatprep.subr.mxu0 0.0
        %2682 = vmatpush2.xpose.msra.mxu0 0.0
        %2683 = vmatprep.subr.mxu0 0.0
        %2684 = vmatpush2.xpose.msra.mxu0 0.0
        %2685 = vmatprep.subr.mxu0 0.0
        %2686 = vmatpush2.xpose.msra.mxu0 0.0
        %2687 = vmatprep.subr.mxu0 0.0
        %2688 = vmatpush2.xpose.msra.mxu0 0.0
        %2689 = vmatprep.subr.mxu0 0.0
        %2690 = vmatpush2.xpose.msra.mxu0 0.0
        %2691 = vmatprep.subr.mxu0 0.0
        %2692 = vmatpush2.xpose.msra.mxu0 0.0
        %2693 = vmatprep.subr.mxu0 0.0
        %2694 = vmatpush2.xpose.msra.mxu0 0.0
        %2695 = vmatprep.subr.mxu0 0.0
        %2696 = vmatpush2.xpose.msra.mxu0 0.0
        %2697 = vmatprep.subr.mxu0 0.0
        %2698 = vmatpush2.xpose.msra.mxu0 0.0
        %2699 = vmatprep.subr.mxu0 0.0
        %2700 = vmatpush2.xpose.msra.mxu0 0.0
        %2701 = vmatprep.mubr.f32.mxu0 0.0
        %2702 = vmatmul.mubr.f32.gmra.mxu0 %v2629
        %v2703 = vpop.f32.mrf.mxu0
        %v2704 = vadd.f32 0.0, %v2703
        %v2705 = vpop.f32.mrf.mxu0
        %2706 = vmatprep.mubr.f32.mxu0 0.0
        %2707 = vmatmul.mubr.f32.gmra.mxu0 %v2631
        %v2708 = vpop.f32.mrf.mxu0
        %v2709 = vadd.f32 0.0, %v2708
        %v2710 = vpop.f32.mrf.mxu0
        %2711 = vdwg.mxu0
        %v2712 = vsel %vm2213, %v1641, 0
        %v2714 = vsel %vm2213, %v1646, 0
        %v2716 = vsel %vm2213, %v1838, 0
        %v2718 = vsel %vm2213, %v1843, 0
        %2720 = vmatprep.subr.mxu0 0.0
        %2721 = vmatpush1.xpose.msra.mxu0 0.0
        %2722 = vmatprep.subr.mxu0 0.0
        %2723 = vmatpush1.xpose.msra.mxu0 0.0
        %2724 = vmatprep.subr.mxu0 0.0
        %2725 = vmatpush1.xpose.msra.mxu0 0.0
        %2726 = vmatprep.subr.mxu0 0.0
        %2727 = vmatpush1.xpose.msra.mxu0 0.0
        %2728 = vmatprep.subr.mxu0 0.0
        %2729 = vmatpush1.xpose.msra.mxu0 0.0
        %2730 = vmatprep.subr.mxu0 0.0
        %2731 = vmatpush1.xpose.msra.mxu0 0.0
        %2732 = vmatprep.subr.mxu0 0.0
        %2733 = vmatpush1.xpose.msra.mxu0 0.0
        %2734 = vmatprep.subr.mxu0 0.0
        %2735 = vmatpush1.xpose.msra.mxu0 0.0
        %2736 = vmatprep.subr.mxu0 0.0
        %2737 = vmatpush1.xpose.msra.mxu0 0.0
        %2738 = vmatprep.subr.mxu0 0.0
        %2739 = vmatpush1.xpose.msra.mxu0 0.0
        %2740 = vmatprep.subr.mxu0 0.0
        %2741 = vmatpush1.xpose.msra.mxu0 0.0
        %2742 = vmatprep.subr.mxu0 0.0
        %2743 = vmatpush1.xpose.msra.mxu0 0.0
        %2744 = vmatprep.subr.mxu0 0.0
        %2745 = vmatpush1.xpose.msra.mxu0 0.0
        %2746 = vmatprep.subr.mxu0 0.0
        %2747 = vmatpush1.xpose.msra.mxu0 0.0
        %2748 = vmatprep.subr.mxu0 0.0
        %2749 = vmatpush1.xpose.msra.mxu0 %v2718
        %2750 = vmatprep.subr.mxu0 0.0
        %2751 = vmatpush1.xpose.msra.mxu0 %v2716
        %2752 = vmatprep.subr.mxu0 0.0
        %2753 = vmatpush2.xpose.msra.mxu0 0.0
        %2754 = vmatprep.subr.mxu0 0.0
        %2755 = vmatpush2.xpose.msra.mxu0 0.0
        %2756 = vmatprep.subr.mxu0 0.0
        %2757 = vmatpush2.xpose.msra.mxu0 0.0
        %2758 = vmatprep.subr.mxu0 0.0
        %2759 = vmatpush2.xpose.msra.mxu0 0.0
        %2760 = vmatprep.subr.mxu0 0.0
        %2761 = vmatpush2.xpose.msra.mxu0 0.0
        %2762 = vmatprep.subr.mxu0 0.0
        %2763 = vmatpush2.xpose.msra.mxu0 0.0
        %2764 = vmatprep.subr.mxu0 0.0
        %2765 = vmatpush2.xpose.msra.mxu0 0.0
        %2766 = vmatprep.subr.mxu0 0.0
        %2767 = vmatpush2.xpose.msra.mxu0 0.0
        %2768 = vmatprep.subr.mxu0 0.0
        %2769 = vmatpush2.xpose.msra.mxu0 0.0
        %2770 = vmatprep.subr.mxu0 0.0
        %2771 = vmatpush2.xpose.msra.mxu0 0.0
        %2772 = vmatprep.subr.mxu0 0.0
        %2773 = vmatpush2.xpose.msra.mxu0 0.0
        %2774 = vmatprep.subr.mxu0 0.0
        %2775 = vmatpush2.xpose.msra.mxu0 0.0
        %2776 = vmatprep.subr.mxu0 0.0
        %2777 = vmatpush2.xpose.msra.mxu0 0.0
        %2778 = vmatprep.subr.mxu0 0.0
        %2779 = vmatpush2.xpose.msra.mxu0 0.0
        %2780 = vmatprep.subr.mxu0 0.0
        %2781 = vmatpush2.xpose.msra.mxu0 0.0
        %2782 = vmatprep.subr.mxu0 0.0
        %2783 = vmatpush2.xpose.msra.mxu0 0.0
        %2784 = vmatprep.mubr.f32.mxu0 0.0
        %2785 = vmatmul.mubr.f32.gmra.mxu0 %v2712
        %v2786 = vpop.f32.mrf.mxu0
        %v2787 = vadd.f32 0.0, %v2786
        %v2788 = vpop.f32.mrf.mxu0
        %2789 = vmatprep.mubr.f32.mxu0 0.0
        %2790 = vmatmul.mubr.f32.gmra.mxu0 %v2714
        %v2791 = vpop.f32.mrf.mxu0
        %v2792 = vadd.f32 0.0, %v2791
        %v2793 = vpop.f32.mrf.mxu0
        %2794 = vdwg.mxu0
        %v2795 = vsel %vm2213, %v1651, 0
        %v2797 = vsel %vm2213, %v1656, 0
        %v2799 = vsel %vm2213, %v1848, 0
        %v2801 = vsel %vm2213, %v1853, 0
        %2803 = vmatprep.subr.mxu0 0.0
        %2804 = vmatpush1.xpose.msra.mxu0 0.0
        %2805 = vmatprep.subr.mxu0 0.0
        %2806 = vmatpush1.xpose.msra.mxu0 0.0
        %2807 = vmatprep.subr.mxu0 0.0
        %2808 = vmatpush1.xpose.msra.mxu0 0.0
        %2809 = vmatprep.subr.mxu0 0.0
        %2810 = vmatpush1.xpose.msra.mxu0 0.0
        %2811 = vmatprep.subr.mxu0 0.0
        %2812 = vmatpush1.xpose.msra.mxu0 0.0
        %2813 = vmatprep.subr.mxu0 0.0
        %2814 = vmatpush1.xpose.msra.mxu0 0.0
        %2815 = vmatprep.subr.mxu0 0.0
        %2816 = vmatpush1.xpose.msra.mxu0 0.0
        %2817 = vmatprep.subr.mxu0 0.0
        %2818 = vmatpush1.xpose.msra.mxu0 0.0
        %2819 = vmatprep.subr.mxu0 0.0
        %2820 = vmatpush1.xpose.msra.mxu0 0.0
        %2821 = vmatprep.subr.mxu0 0.0
        %2822 = vmatpush1.xpose.msra.mxu0 0.0
        %2823 = vmatprep.subr.mxu0 0.0
        %2824 = vmatpush1.xpose.msra.mxu0 0.0
        %2825 = vmatprep.subr.mxu0 0.0
        %2826 = vmatpush1.xpose.msra.mxu0 0.0
        %2827 = vmatprep.subr.mxu0 0.0
        %2828 = vmatpush1.xpose.msra.mxu0 0.0
        %2829 = vmatprep.subr.mxu0 0.0
        %2830 = vmatpush1.xpose.msra.mxu0 0.0
        %2831 = vmatprep.subr.mxu0 0.0
        %2832 = vmatpush1.xpose.msra.mxu0 %v2801
        %2833 = vmatprep.subr.mxu0 0.0
        %2834 = vmatpush1.xpose.msra.mxu0 %v2799
        %2835 = vmatprep.subr.mxu0 0.0
        %2836 = vmatpush2.xpose.msra.mxu0 0.0
        %2837 = vmatprep.subr.mxu0 0.0
        %2838 = vmatpush2.xpose.msra.mxu0 0.0
        %2839 = vmatprep.subr.mxu0 0.0
        %2840 = vmatpush2.xpose.msra.mxu0 0.0
        %2841 = vmatprep.subr.mxu0 0.0
        %2842 = vmatpush2.xpose.msra.mxu0 0.0
        %2843 = vmatprep.subr.mxu0 0.0
        %2844 = vmatpush2.xpose.msra.mxu0 0.0
        %2845 = vmatprep.subr.mxu0 0.0
        %2846 = vmatpush2.xpose.msra.mxu0 0.0
        %2847 = vmatprep.subr.mxu0 0.0
        %2848 = vmatpush2.xpose.msra.mxu0 0.0
        %2849 = vmatprep.subr.mxu0 0.0
        %2850 = vmatpush2.xpose.msra.mxu0 0.0
        %2851 = vmatprep.subr.mxu0 0.0
        %2852 = vmatpush2.xpose.msra.mxu0 0.0
        %2853 = vmatprep.subr.mxu0 0.0
        %2854 = vmatpush2.xpose.msra.mxu0 0.0
        %2855 = vmatprep.subr.mxu0 0.0
        %2856 = vmatpush2.xpose.msra.mxu0 0.0
        %2857 = vmatprep.subr.mxu0 0.0
        %2858 = vmatpush2.xpose.msra.mxu0 0.0
        %2859 = vmatprep.subr.mxu0 0.0
        %2860 = vmatpush2.xpose.msra.mxu0 0.0
        %2861 = vmatprep.subr.mxu0 0.0
        %2862 = vmatpush2.xpose.msra.mxu0 0.0
        %2863 = vmatprep.subr.mxu0 0.0
        %2864 = vmatpush2.xpose.msra.mxu0 0.0
        %2865 = vmatprep.subr.mxu0 0.0
        %2866 = vmatpush2.xpose.msra.mxu0 0.0
        %2867 = vmatprep.mubr.f32.mxu0 0.0
        %2868 = vmatmul.mubr.f32.gmra.mxu0 %v2795
        %v2869 = vpop.f32.mrf.mxu0
        %v2870 = vadd.f32 0.0, %v2869
        %v2871 = vpop.f32.mrf.mxu0
        %2872 = vmatprep.mubr.f32.mxu0 0.0
        %2873 = vmatmul.mubr.f32.gmra.mxu0 %v2797
        %v2874 = vpop.f32.mrf.mxu0
        %v2875 = vadd.f32 0.0, %v2874
        %v2876 = vpop.f32.mrf.mxu0
        %2877 = vdwg.mxu0
        %v2878 = vsel %vm2213, %v2070, 0
        %v2880 = vsel %vm2213, %v2072, 0
        %v2882 = vsel %vm2213, %v2118, 0
        %v2884 = vsel %vm2213, %v2120, 0
        %2886 = vmatprep.subr.mxu0 0.0
        %2887 = vmatpush1.xpose.msra.mxu0 0.0
        %2888 = vmatprep.subr.mxu0 0.0
        %2889 = vmatpush1.xpose.msra.mxu0 0.0
        %2890 = vmatprep.subr.mxu0 0.0
        %2891 = vmatpush1.xpose.msra.mxu0 0.0
        %2892 = vmatprep.subr.mxu0 0.0
        %2893 = vmatpush1.xpose.msra.mxu0 0.0
        %2894 = vmatprep.subr.mxu0 0.0
        %2895 = vmatpush1.xpose.msra.mxu0 0.0
        %2896 = vmatprep.subr.mxu0 0.0
        %2897 = vmatpush1.xpose.msra.mxu0 0.0
        %2898 = vmatprep.subr.mxu0 0.0
        %2899 = vmatpush1.xpose.msra.mxu0 0.0
        %2900 = vmatprep.subr.mxu0 0.0
        %2901 = vmatpush1.xpose.msra.mxu0 0.0
        %2902 = vmatprep.subr.mxu0 0.0
        %2903 = vmatpush1.xpose.msra.mxu0 0.0
        %2904 = vmatprep.subr.mxu0 0.0
        %2905 = vmatpush1.xpose.msra.mxu0 0.0
        %2906 = vmatprep.subr.mxu0 0.0
        %2907 = vmatpush1.xpose.msra.mxu0 0.0
        %2908 = vmatprep.subr.mxu0 0.0
        %2909 = vmatpush1.xpose.msra.mxu0 0.0
        %2910 = vmatprep.subr.mxu0 0.0
        %2911 = vmatpush1.xpose.msra.mxu0 0.0
        %2912 = vmatprep.subr.mxu0 0.0
        %2913 = vmatpush1.xpose.msra.mxu0 0.0
        %2914 = vmatprep.subr.mxu0 0.0
        %2915 = vmatpush1.xpose.msra.mxu0 %v2884
        %2916 = vmatprep.subr.mxu0 0.0
        %2917 = vmatpush1.xpose.msra.mxu0 %v2882
        %2918 = vmatprep.subr.mxu0 0.0
        %2919 = vmatpush2.xpose.msra.mxu0 0.0
        %2920 = vmatprep.subr.mxu0 0.0
        %2921 = vmatpush2.xpose.msra.mxu0 0.0
        %2922 = vmatprep.subr.mxu0 0.0
        %2923 = vmatpush2.xpose.msra.mxu0 0.0
        %2924 = vmatprep.subr.mxu0 0.0
        %2925 = vmatpush2.xpose.msra.mxu0 0.0
        %2926 = vmatprep.subr.mxu0 0.0
        %2927 = vmatpush2.xpose.msra.mxu0 0.0
        %2928 = vmatprep.subr.mxu0 0.0
        %2929 = vmatpush2.xpose.msra.mxu0 0.0
        %2930 = vmatprep.subr.mxu0 0.0
        %2931 = vmatpush2.xpose.msra.mxu0 0.0
        %2932 = vmatprep.subr.mxu0 0.0
        %2933 = vmatpush2.xpose.msra.mxu0 0.0
        %2934 = vmatprep.subr.mxu0 0.0
        %2935 = vmatpush2.xpose.msra.mxu0 0.0
        %2936 = vmatprep.subr.mxu0 0.0
        %2937 = vmatpush2.xpose.msra.mxu0 0.0
        %2938 = vmatprep.subr.mxu0 0.0
        %2939 = vmatpush2.xpose.msra.mxu0 0.0
        %2940 = vmatprep.subr.mxu0 0.0
        %2941 = vmatpush2.xpose.msra.mxu0 0.0
        %2942 = vmatprep.subr.mxu0 0.0
        %2943 = vmatpush2.xpose.msra.mxu0 0.0
        %2944 = vmatprep.subr.mxu0 0.0
        %2945 = vmatpush2.xpose.msra.mxu0 0.0
        %2946 = vmatprep.subr.mxu0 0.0
        %2947 = vmatpush2.xpose.msra.mxu0 0.0
        %2948 = vmatprep.subr.mxu0 0.0
        %2949 = vmatpush2.xpose.msra.mxu0 0.0
        %2950 = vmatprep.mubr.f32.mxu0 0.0
        %2951 = vmatmul.mubr.f32.gmra.mxu0 %v2878
        %v2952 = vpop.f32.mrf.mxu0
        %v2953 = vadd.f32 0.0, %v2952
        %v2954 = vpop.f32.mrf.mxu0
        %2955 = vmatprep.mubr.f32.mxu0 0.0
        %2956 = vmatmul.mubr.f32.gmra.mxu0 %v2880
        %v2957 = vpop.f32.mrf.mxu0
        %v2958 = vadd.f32 0.0, %v2957
        %v2959 = vpop.f32.mrf.mxu0
        %2960 = vdwg.mxu0
        %v2961 = vsel %vm2213, %v2074, 0
        %v2963 = vsel %vm2213, %v2076, 0
        %v2965 = vsel %vm2213, %v2122, 0
        %v2967 = vsel %vm2213, %v2124, 0
        %2969 = vmatprep.subr.mxu0 0.0
        %2970 = vmatpush1.xpose.msra.mxu0 0.0
        %2971 = vmatprep.subr.mxu0 0.0
        %2972 = vmatpush1.xpose.msra.mxu0 0.0
        %2973 = vmatprep.subr.mxu0 0.0
        %2974 = vmatpush1.xpose.msra.mxu0 0.0
        %2975 = vmatprep.subr.mxu0 0.0
        %2976 = vmatpush1.xpose.msra.mxu0 0.0
        %2977 = vmatprep.subr.mxu0 0.0
        %2978 = vmatpush1.xpose.msra.mxu0 0.0
        %2979 = vmatprep.subr.mxu0 0.0
        %2980 = vmatpush1.xpose.msra.mxu0 0.0
        %2981 = vmatprep.subr.mxu0 0.0
        %2982 = vmatpush1.xpose.msra.mxu0 0.0
        %2983 = vmatprep.subr.mxu0 0.0
        %2984 = vmatpush1.xpose.msra.mxu0 0.0
        %2985 = vmatprep.subr.mxu0 0.0
        %2986 = vmatpush1.xpose.msra.mxu0 0.0
        %2987 = vmatprep.subr.mxu0 0.0
        %2988 = vmatpush1.xpose.msra.mxu0 0.0
        %2989 = vmatprep.subr.mxu0 0.0
        %2990 = vmatpush1.xpose.msra.mxu0 0.0
        %2991 = vmatprep.subr.mxu0 0.0
        %2992 = vmatpush1.xpose.msra.mxu0 0.0
        %2993 = vmatprep.subr.mxu0 0.0
        %2994 = vmatpush1.xpose.msra.mxu0 0.0
        %2995 = vmatprep.subr.mxu0 0.0
        %2996 = vmatpush1.xpose.msra.mxu0 0.0
        %2997 = vmatprep.subr.mxu0 0.0
        %2998 = vmatpush1.xpose.msra.mxu0 %v2967
        %2999 = vmatprep.subr.mxu0 0.0
        %3000 = vmatpush1.xpose.msra.mxu0 %v2965
        %3001 = vmatprep.subr.mxu0 0.0
        %3002 = vmatpush2.xpose.msra.mxu0 0.0
        %3003 = vmatprep.subr.mxu0 0.0
        %3004 = vmatpush2.xpose.msra.mxu0 0.0
        %3005 = vmatprep.subr.mxu0 0.0
        %3006 = vmatpush2.xpose.msra.mxu0 0.0
        %3007 = vmatprep.subr.mxu0 0.0
        %3008 = vmatpush2.xpose.msra.mxu0 0.0
        %3009 = vmatprep.subr.mxu0 0.0
        %3010 = vmatpush2.xpose.msra.mxu0 0.0
        %3011 = vmatprep.subr.mxu0 0.0
        %3012 = vmatpush2.xpose.msra.mxu0 0.0
        %3013 = vmatprep.subr.mxu0 0.0
        %3014 = vmatpush2.xpose.msra.mxu0 0.0
        %3015 = vmatprep.subr.mxu0 0.0
        %3016 = vmatpush2.xpose.msra.mxu0 0.0
        %3017 = vmatprep.subr.mxu0 0.0
        %3018 = vmatpush2.xpose.msra.mxu0 0.0
        %3019 = vmatprep.subr.mxu0 0.0
        %3020 = vmatpush2.xpose.msra.mxu0 0.0
        %3021 = vmatprep.subr.mxu0 0.0
        %3022 = vmatpush2.xpose.msra.mxu0 0.0
        %3023 = vmatprep.subr.mxu0 0.0
        %3024 = vmatpush2.xpose.msra.mxu0 0.0
        %3025 = vmatprep.subr.mxu0 0.0
        %3026 = vmatpush2.xpose.msra.mxu0 0.0
        %3027 = vmatprep.subr.mxu0 0.0
        %3028 = vmatpush2.xpose.msra.mxu0 0.0
        %3029 = vmatprep.subr.mxu0 0.0
        %3030 = vmatpush2.xpose.msra.mxu0 0.0
        %3031 = vmatprep.subr.mxu0 0.0
        %3032 = vmatpush2.xpose.msra.mxu0 0.0
        %3033 = vmatprep.mubr.f32.mxu0 0.0
        %3034 = vmatmul.mubr.f32.gmra.mxu0 %v2961
        %v3035 = vpop.f32.mrf.mxu0
        %v3036 = vadd.f32 0.0, %v3035
        %v3037 = vpop.f32.mrf.mxu0
        %3038 = vmatprep.mubr.f32.mxu0 0.0
        %3039 = vmatmul.mubr.f32.gmra.mxu0 %v2963
        %v3040 = vpop.f32.mrf.mxu0
        %v3041 = vadd.f32 0.0, %v3040
        %v3042 = vpop.f32.mrf.mxu0
        %3043 = vdwg.mxu0
        %v3044 = vsel %vm2213, %v2078, 0
        %v3046 = vsel %vm2213, %v2080, 0
        %v3048 = vsel %vm2213, %v2126, 0
        %v3050 = vsel %vm2213, %v2128, 0
        %3052 = vmatprep.subr.mxu0 0.0
        %3053 = vmatpush1.xpose.msra.mxu0 0.0
        %3054 = vmatprep.subr.mxu0 0.0
        %3055 = vmatpush1.xpose.msra.mxu0 0.0
        %3056 = vmatprep.subr.mxu0 0.0
        %3057 = vmatpush1.xpose.msra.mxu0 0.0
        %3058 = vmatprep.subr.mxu0 0.0
        %3059 = vmatpush1.xpose.msra.mxu0 0.0
        %3060 = vmatprep.subr.mxu0 0.0
        %3061 = vmatpush1.xpose.msra.mxu0 0.0
        %3062 = vmatprep.subr.mxu0 0.0
        %3063 = vmatpush1.xpose.msra.mxu0 0.0
        %3064 = vmatprep.subr.mxu0 0.0
        %3065 = vmatpush1.xpose.msra.mxu0 0.0
        %3066 = vmatprep.subr.mxu0 0.0
        %3067 = vmatpush1.xpose.msra.mxu0 0.0
        %3068 = vmatprep.subr.mxu0 0.0
        %3069 = vmatpush1.xpose.msra.mxu0 0.0
        %3070 = vmatprep.subr.mxu0 0.0
        %3071 = vmatpush1.xpose.msra.mxu0 0.0
        %3072 = vmatprep.subr.mxu0 0.0
        %3073 = vmatpush1.xpose.msra.mxu0 0.0
        %3074 = vmatprep.subr.mxu0 0.0
        %3075 = vmatpush1.xpose.msra.mxu0 0.0
        %3076 = vmatprep.subr.mxu0 0.0
        %3077 = vmatpush1.xpose.msra.mxu0 0.0
        %3078 = vmatprep.subr.mxu0 0.0
        %3079 = vmatpush1.xpose.msra.mxu0 0.0
        %3080 = vmatprep.subr.mxu0 0.0
        %3081 = vmatpush1.xpose.msra.mxu0 %v3050
        %3082 = vmatprep.subr.mxu0 0.0
        %3083 = vmatpush1.xpose.msra.mxu0 %v3048
        %3084 = vmatprep.subr.mxu0 0.0
        %3085 = vmatpush2.xpose.msra.mxu0 0.0
        %3086 = vmatprep.subr.mxu0 0.0
        %3087 = vmatpush2.xpose.msra.mxu0 0.0
        %3088 = vmatprep.subr.mxu0 0.0
        %3089 = vmatpush2.xpose.msra.mxu0 0.0
        %3090 = vmatprep.subr.mxu0 0.0
        %3091 = vmatpush2.xpose.msra.mxu0 0.0
        %3092 = vmatprep.subr.mxu0 0.0
        %3093 = vmatpush2.xpose.msra.mxu0 0.0
        %3094 = vmatprep.subr.mxu0 0.0
        %3095 = vmatpush2.xpose.msra.mxu0 0.0
        %3096 = vmatprep.subr.mxu0 0.0
        %3097 = vmatpush2.xpose.msra.mxu0 0.0
        %3098 = vmatprep.subr.mxu0 0.0
        %3099 = vmatpush2.xpose.msra.mxu0 0.0
        %3100 = vmatprep.subr.mxu0 0.0
        %3101 = vmatpush2.xpose.msra.mxu0 0.0
        %3102 = vmatprep.subr.mxu0 0.0
        %3103 = vmatpush2.xpose.msra.mxu0 0.0
        %3104 = vmatprep.subr.mxu0 0.0
        %3105 = vmatpush2.xpose.msra.mxu0 0.0
        %3106 = vmatprep.subr.mxu0 0.0
        %3107 = vmatpush2.xpose.msra.mxu0 0.0
        %3108 = vmatprep.subr.mxu0 0.0
        %3109 = vmatpush2.xpose.msra.mxu0 0.0
        %3110 = vmatprep.subr.mxu0 0.0
        %3111 = vmatpush2.xpose.msra.mxu0 0.0
        %3112 = vmatprep.subr.mxu0 0.0
        %3113 = vmatpush2.xpose.msra.mxu0 0.0
        %3114 = vmatprep.subr.mxu0 0.0
        %3115 = vmatpush2.xpose.msra.mxu0 0.0
        %3116 = vmatprep.mubr.f32.mxu0 0.0
        %3117 = vmatmul.mubr.f32.gmra.mxu0 %v3044
        %v3118 = vpop.f32.mrf.mxu0
        %v3119 = vadd.f32 0.0, %v3118
        %v3120 = vpop.f32.mrf.mxu0
        %3121 = vmatprep.mubr.f32.mxu0 0.0
        %3122 = vmatmul.mubr.f32.gmra.mxu0 %v3046
        %v3123 = vpop.f32.mrf.mxu0
        %v3124 = vadd.f32 0.0, %v3123
        %v3125 = vpop.f32.mrf.mxu0
        %3126 = vdwg.mxu0
        %v3127 = vsel %vm2213, %v2082, 0
        %v3129 = vsel %vm2213, %v2084, 0
        %v3131 = vsel %vm2213, %v2130, 0
        %v3133 = vsel %vm2213, %v2132, 0
        %3135 = vmatprep.subr.mxu0 0.0
        %3136 = vmatpush1.xpose.msra.mxu0 0.0
        %3137 = vmatprep.subr.mxu0 0.0
        %3138 = vmatpush1.xpose.msra.mxu0 0.0
        %3139 = vmatprep.subr.mxu0 0.0
        %3140 = vmatpush1.xpose.msra.mxu0 0.0
        %3141 = vmatprep.subr.mxu0 0.0
        %3142 = vmatpush1.xpose.msra.mxu0 0.0
        %3143 = vmatprep.subr.mxu0 0.0
        %3144 = vmatpush1.xpose.msra.mxu0 0.0
        %3145 = vmatprep.subr.mxu0 0.0
        %3146 = vmatpush1.xpose.msra.mxu0 0.0
        %3147 = vmatprep.subr.mxu0 0.0
        %3148 = vmatpush1.xpose.msra.mxu0 0.0
        %3149 = vmatprep.subr.mxu0 0.0
        %3150 = vmatpush1.xpose.msra.mxu0 0.0
        %3151 = vmatprep.subr.mxu0 0.0
        %3152 = vmatpush1.xpose.msra.mxu0 0.0
        %3153 = vmatprep.subr.mxu0 0.0
        %3154 = vmatpush1.xpose.msra.mxu0 0.0
        %3155 = vmatprep.subr.mxu0 0.0
        %3156 = vmatpush1.xpose.msra.mxu0 0.0
        %3157 = vmatprep.subr.mxu0 0.0
        %3158 = vmatpush1.xpose.msra.mxu0 0.0
        %3159 = vmatprep.subr.mxu0 0.0
        %3160 = vmatpush1.xpose.msra.mxu0 0.0
        %3161 = vmatprep.subr.mxu0 0.0
        %3162 = vmatpush1.xpose.msra.mxu0 0.0
        %3163 = vmatprep.subr.mxu0 0.0
        %3164 = vmatpush1.xpose.msra.mxu0 %v3133
        %3165 = vmatprep.subr.mxu0 0.0
        %3166 = vmatpush1.xpose.msra.mxu0 %v3131
        %3167 = vmatprep.subr.mxu0 0.0
        %3168 = vmatpush2.xpose.msra.mxu0 0.0
        %3169 = vmatprep.subr.mxu0 0.0
        %3170 = vmatpush2.xpose.msra.mxu0 0.0
        %3171 = vmatprep.subr.mxu0 0.0
        %3172 = vmatpush2.xpose.msra.mxu0 0.0
        %3173 = vmatprep.subr.mxu0 0.0
        %3174 = vmatpush2.xpose.msra.mxu0 0.0
        %3175 = vmatprep.subr.mxu0 0.0
        %3176 = vmatpush2.xpose.msra.mxu0 0.0
        %3177 = vmatprep.subr.mxu0 0.0
        %3178 = vmatpush2.xpose.msra.mxu0 0.0
        %3179 = vmatprep.subr.mxu0 0.0
        %3180 = vmatpush2.xpose.msra.mxu0 0.0
        %3181 = vmatprep.subr.mxu0 0.0
        %3182 = vmatpush2.xpose.msra.mxu0 0.0
        %3183 = vmatprep.subr.mxu0 0.0
        %3184 = vmatpush2.xpose.msra.mxu0 0.0
        %3185 = vmatprep.subr.mxu0 0.0
        %3186 = vmatpush2.xpose.msra.mxu0 0.0
        %3187 = vmatprep.subr.mxu0 0.0
        %3188 = vmatpush2.xpose.msra.mxu0 0.0
        %3189 = vmatprep.subr.mxu0 0.0
        %3190 = vmatpush2.xpose.msra.mxu0 0.0
        %3191 = vmatprep.subr.mxu0 0.0
        %3192 = vmatpush2.xpose.msra.mxu0 0.0
        %3193 = vmatprep.subr.mxu0 0.0
        %3194 = vmatpush2.xpose.msra.mxu0 0.0
        %3195 = vmatprep.subr.mxu0 0.0
        %3196 = vmatpush2.xpose.msra.mxu0 0.0
        %3197 = vmatprep.subr.mxu0 0.0
        %3198 = vmatpush2.xpose.msra.mxu0 0.0
        %3199 = vmatprep.mubr.f32.mxu0 0.0
        %3200 = vmatmul.mubr.f32.gmra.mxu0 %v3127
        %v3201 = vpop.f32.mrf.mxu0
        %v3202 = vadd.f32 0.0, %v3201
        %v3203 = vpop.f32.mrf.mxu0
        %3204 = vmatprep.mubr.f32.mxu0 0.0
        %3205 = vmatmul.mubr.f32.gmra.mxu0 %v3129
        %v3206 = vpop.f32.mrf.mxu0
        %v3207 = vadd.f32 0.0, %v3206
        %v3208 = vpop.f32.mrf.mxu0
        %3209 = vdwg.mxu0
        %v3210 = vsel %vm2213, %v2086, 0
        %v3212 = vsel %vm2213, %v2088, 0
        %v3214 = vsel %vm2213, %v2134, 0
        %v3216 = vsel %vm2213, %v2136, 0
        %3218 = vmatprep.subr.mxu0 0.0
        %3219 = vmatpush1.xpose.msra.mxu0 0.0
        %3220 = vmatprep.subr.mxu0 0.0
        %3221 = vmatpush1.xpose.msra.mxu0 0.0
        %3222 = vmatprep.subr.mxu0 0.0
        %3223 = vmatpush1.xpose.msra.mxu0 0.0
        %3224 = vmatprep.subr.mxu0 0.0
        %3225 = vmatpush1.xpose.msra.mxu0 0.0
        %3226 = vmatprep.subr.mxu0 0.0
        %3227 = vmatpush1.xpose.msra.mxu0 0.0
        %3228 = vmatprep.subr.mxu0 0.0
        %3229 = vmatpush1.xpose.msra.mxu0 0.0
        %3230 = vmatprep.subr.mxu0 0.0
        %3231 = vmatpush1.xpose.msra.mxu0 0.0
        %3232 = vmatprep.subr.mxu0 0.0
        %3233 = vmatpush1.xpose.msra.mxu0 0.0
        %3234 = vmatprep.subr.mxu0 0.0
        %3235 = vmatpush1.xpose.msra.mxu0 0.0
        %3236 = vmatprep.subr.mxu0 0.0
        %3237 = vmatpush1.xpose.msra.mxu0 0.0
        %3238 = vmatprep.subr.mxu0 0.0
        %3239 = vmatpush1.xpose.msra.mxu0 0.0
        %3240 = vmatprep.subr.mxu0 0.0
        %3241 = vmatpush1.xpose.msra.mxu0 0.0
        %3242 = vmatprep.subr.mxu0 0.0
        %3243 = vmatpush1.xpose.msra.mxu0 0.0
        %3244 = vmatprep.subr.mxu0 0.0
        %3245 = vmatpush1.xpose.msra.mxu0 0.0
        %3246 = vmatprep.subr.mxu0 0.0
        %3247 = vmatpush1.xpose.msra.mxu0 %v3216
        %3248 = vmatprep.subr.mxu0 0.0
        %3249 = vmatpush1.xpose.msra.mxu0 %v3214
        %3250 = vmatprep.subr.mxu0 0.0
        %3251 = vmatpush2.xpose.msra.mxu0 0.0
        %3252 = vmatprep.subr.mxu0 0.0
        %3253 = vmatpush2.xpose.msra.mxu0 0.0
        %3254 = vmatprep.subr.mxu0 0.0
        %3255 = vmatpush2.xpose.msra.mxu0 0.0
        %3256 = vmatprep.subr.mxu0 0.0
        %3257 = vmatpush2.xpose.msra.mxu0 0.0
        %3258 = vmatprep.subr.mxu0 0.0
        %3259 = vmatpush2.xpose.msra.mxu0 0.0
        %3260 = vmatprep.subr.mxu0 0.0
        %3261 = vmatpush2.xpose.msra.mxu0 0.0
        %3262 = vmatprep.subr.mxu0 0.0
        %3263 = vmatpush2.xpose.msra.mxu0 0.0
        %3264 = vmatprep.subr.mxu0 0.0
        %3265 = vmatpush2.xpose.msra.mxu0 0.0
        %3266 = vmatprep.subr.mxu0 0.0
        %3267 = vmatpush2.xpose.msra.mxu0 0.0
        %3268 = vmatprep.subr.mxu0 0.0
        %3269 = vmatpush2.xpose.msra.mxu0 0.0
        %3270 = vmatprep.subr.mxu0 0.0
        %3271 = vmatpush2.xpose.msra.mxu0 0.0
        %3272 = vmatprep.subr.mxu0 0.0
        %3273 = vmatpush2.xpose.msra.mxu0 0.0
        %3274 = vmatprep.subr.mxu0 0.0
        %3275 = vmatpush2.xpose.msra.mxu0 0.0
        %3276 = vmatprep.subr.mxu0 0.0
        %3277 = vmatpush2.xpose.msra.mxu0 0.0
        %3278 = vmatprep.subr.mxu0 0.0
        %3279 = vmatpush2.xpose.msra.mxu0 0.0
        %3280 = vmatprep.subr.mxu0 0.0
        %3281 = vmatpush2.xpose.msra.mxu0 0.0
        %3282 = vmatprep.mubr.f32.mxu0 0.0
        %3283 = vmatmul.mubr.f32.gmra.mxu0 %v3210
        %v3284 = vpop.f32.mrf.mxu0
        %v3285 = vadd.f32 0.0, %v3284
        %v3286 = vpop.f32.mrf.mxu0
        %3287 = vmatprep.mubr.f32.mxu0 0.0
        %3288 = vmatmul.mubr.f32.gmra.mxu0 %v3212
        %v3289 = vpop.f32.mrf.mxu0
        %v3290 = vadd.f32 0.0, %v3289
        %v3291 = vpop.f32.mrf.mxu0
        %3292 = vdwg.mxu0
        %v3293 = vsel %vm2213, %v2090, 0
        %v3295 = vsel %vm2213, %v2092, 0
        %v3297 = vsel %vm2213, %v2138, 0
        %v3299 = vsel %vm2213, %v2140, 0
        %3301 = vmatprep.subr.mxu0 0.0
        %3302 = vmatpush1.xpose.msra.mxu0 0.0
        %3303 = vmatprep.subr.mxu0 0.0
        %3304 = vmatpush1.xpose.msra.mxu0 0.0
        %3305 = vmatprep.subr.mxu0 0.0
        %3306 = vmatpush1.xpose.msra.mxu0 0.0
        %3307 = vmatprep.subr.mxu0 0.0
        %3308 = vmatpush1.xpose.msra.mxu0 0.0
        %3309 = vmatprep.subr.mxu0 0.0
        %3310 = vmatpush1.xpose.msra.mxu0 0.0
        %3311 = vmatprep.subr.mxu0 0.0
        %3312 = vmatpush1.xpose.msra.mxu0 0.0
        %3313 = vmatprep.subr.mxu0 0.0
        %3314 = vmatpush1.xpose.msra.mxu0 0.0
        %3315 = vmatprep.subr.mxu0 0.0
        %3316 = vmatpush1.xpose.msra.mxu0 0.0
        %3317 = vmatprep.subr.mxu0 0.0
        %3318 = vmatpush1.xpose.msra.mxu0 0.0
        %3319 = vmatprep.subr.mxu0 0.0
        %3320 = vmatpush1.xpose.msra.mxu0 0.0
        %3321 = vmatprep.subr.mxu0 0.0
        %3322 = vmatpush1.xpose.msra.mxu0 0.0
        %3323 = vmatprep.subr.mxu0 0.0
        %3324 = vmatpush1.xpose.msra.mxu0 0.0
        %3325 = vmatprep.subr.mxu0 0.0
        %3326 = vmatpush1.xpose.msra.mxu0 0.0
        %3327 = vmatprep.subr.mxu0 0.0
        %3328 = vmatpush1.xpose.msra.mxu0 0.0
        %3329 = vmatprep.subr.mxu0 0.0
        %3330 = vmatpush1.xpose.msra.mxu0 %v3299
        %3331 = vmatprep.subr.mxu0 0.0
        %3332 = vmatpush1.xpose.msra.mxu0 %v3297
        %3333 = vmatprep.subr.mxu0 0.0
        %3334 = vmatpush2.xpose.msra.mxu0 0.0
        %3335 = vmatprep.subr.mxu0 0.0
        %3336 = vmatpush2.xpose.msra.mxu0 0.0
        %3337 = vmatprep.subr.mxu0 0.0
        %3338 = vmatpush2.xpose.msra.mxu0 0.0
        %3339 = vmatprep.subr.mxu0 0.0
        %3340 = vmatpush2.xpose.msra.mxu0 0.0
        %3341 = vmatprep.subr.mxu0 0.0
        %3342 = vmatpush2.xpose.msra.mxu0 0.0
        %3343 = vmatprep.subr.mxu0 0.0
        %3344 = vmatpush2.xpose.msra.mxu0 0.0
        %3345 = vmatprep.subr.mxu0 0.0
        %3346 = vmatpush2.xpose.msra.mxu0 0.0
        %3347 = vmatprep.subr.mxu0 0.0
        %3348 = vmatpush2.xpose.msra.mxu0 0.0
        %3349 = vmatprep.subr.mxu0 0.0
        %3350 = vmatpush2.xpose.msra.mxu0 0.0
        %3351 = vmatprep.subr.mxu0 0.0
        %3352 = vmatpush2.xpose.msra.mxu0 0.0
        %3353 = vmatprep.subr.mxu0 0.0
        %3354 = vmatpush2.xpose.msra.mxu0 0.0
        %3355 = vmatprep.subr.mxu0 0.0
        %3356 = vmatpush2.xpose.msra.mxu0 0.0
        %3357 = vmatprep.subr.mxu0 0.0
        %3358 = vmatpush2.xpose.msra.mxu0 0.0
        %3359 = vmatprep.subr.mxu0 0.0
        %3360 = vmatpush2.xpose.msra.mxu0 0.0
        %3361 = vmatprep.subr.mxu0 0.0
        %3362 = vmatpush2.xpose.msra.mxu0 0.0
        %3363 = vmatprep.subr.mxu0 0.0
        %3364 = vmatpush2.xpose.msra.mxu0 0.0
        %3365 = vmatprep.mubr.f32.mxu0 0.0
        %3366 = vmatmul.mubr.f32.gmra.mxu0 %v3293
        %v3367 = vpop.f32.mrf.mxu0
        %v3368 = vadd.f32 0.0, %v3367
        %v3369 = vpop.f32.mrf.mxu0
        %3370 = vmatprep.mubr.f32.mxu0 0.0
        %3371 = vmatmul.mubr.f32.gmra.mxu0 %v3295
        %v3372 = vpop.f32.mrf.mxu0
        %v3373 = vadd.f32 0.0, %v3372
        %v3374 = vpop.f32.mrf.mxu0
        %3375 = vdwg.mxu0
        %v3376 = vsel %vm2213, %v2094, 0
        %v3378 = vsel %vm2213, %v2096, 0
        %v3380 = vsel %vm2213, %v2142, 0
        %v3382 = vsel %vm2213, %v2144, 0
        %3384 = vmatprep.subr.mxu0 0.0
        %3385 = vmatpush1.xpose.msra.mxu0 0.0
        %3386 = vmatprep.subr.mxu0 0.0
        %3387 = vmatpush1.xpose.msra.mxu0 0.0
        %3388 = vmatprep.subr.mxu0 0.0
        %3389 = vmatpush1.xpose.msra.mxu0 0.0
        %3390 = vmatprep.subr.mxu0 0.0
        %3391 = vmatpush1.xpose.msra.mxu0 0.0
        %3392 = vmatprep.subr.mxu0 0.0
        %3393 = vmatpush1.xpose.msra.mxu0 0.0
        %3394 = vmatprep.subr.mxu0 0.0
        %3395 = vmatpush1.xpose.msra.mxu0 0.0
        %3396 = vmatprep.subr.mxu0 0.0
        %3397 = vmatpush1.xpose.msra.mxu0 0.0
        %3398 = vmatprep.subr.mxu0 0.0
        %3399 = vmatpush1.xpose.msra.mxu0 0.0
        %3400 = vmatprep.subr.mxu0 0.0
        %3401 = vmatpush1.xpose.msra.mxu0 0.0
        %3402 = vmatprep.subr.mxu0 0.0
        %3403 = vmatpush1.xpose.msra.mxu0 0.0
        %3404 = vmatprep.subr.mxu0 0.0
        %3405 = vmatpush1.xpose.msra.mxu0 0.0
        %3406 = vmatprep.subr.mxu0 0.0
        %3407 = vmatpush1.xpose.msra.mxu0 0.0
        %3408 = vmatprep.subr.mxu0 0.0
        %3409 = vmatpush1.xpose.msra.mxu0 0.0
        %3410 = vmatprep.subr.mxu0 0.0
        %3411 = vmatpush1.xpose.msra.mxu0 0.0
        %3412 = vmatprep.subr.mxu0 0.0
        %3413 = vmatpush1.xpose.msra.mxu0 %v3382
        %3414 = vmatprep.subr.mxu0 0.0
        %3415 = vmatpush1.xpose.msra.mxu0 %v3380
        %3416 = vmatprep.subr.mxu0 0.0
        %3417 = vmatpush2.xpose.msra.mxu0 0.0
        %3418 = vmatprep.subr.mxu0 0.0
        %3419 = vmatpush2.xpose.msra.mxu0 0.0
        %3420 = vmatprep.subr.mxu0 0.0
        %3421 = vmatpush2.xpose.msra.mxu0 0.0
        %3422 = vmatprep.subr.mxu0 0.0
        %3423 = vmatpush2.xpose.msra.mxu0 0.0
        %3424 = vmatprep.subr.mxu0 0.0
        %3425 = vmatpush2.xpose.msra.mxu0 0.0
        %3426 = vmatprep.subr.mxu0 0.0
        %3427 = vmatpush2.xpose.msra.mxu0 0.0
        %3428 = vmatprep.subr.mxu0 0.0
        %3429 = vmatpush2.xpose.msra.mxu0 0.0
        %3430 = vmatprep.subr.mxu0 0.0
        %3431 = vmatpush2.xpose.msra.mxu0 0.0
        %3432 = vmatprep.subr.mxu0 0.0
        %3433 = vmatpush2.xpose.msra.mxu0 0.0
        %3434 = vmatprep.subr.mxu0 0.0
        %3435 = vmatpush2.xpose.msra.mxu0 0.0
        %3436 = vmatprep.subr.mxu0 0.0
        %3437 = vmatpush2.xpose.msra.mxu0 0.0
        %3438 = vmatprep.subr.mxu0 0.0
        %3439 = vmatpush2.xpose.msra.mxu0 0.0
        %3440 = vmatprep.subr.mxu0 0.0
        %3441 = vmatpush2.xpose.msra.mxu0 0.0
        %3442 = vmatprep.subr.mxu0 0.0
        %3443 = vmatpush2.xpose.msra.mxu0 0.0
        %3444 = vmatprep.subr.mxu0 0.0
        %3445 = vmatpush2.xpose.msra.mxu0 0.0
        %3446 = vmatprep.subr.mxu0 0.0
        %3447 = vmatpush2.xpose.msra.mxu0 0.0
        %3448 = vmatprep.mubr.f32.mxu0 0.0
        %3449 = vmatmul.mubr.f32.gmra.mxu0 %v3376
        %v3450 = vpop.f32.mrf.mxu0
        %v3451 = vadd.f32 0.0, %v3450
        %v3452 = vpop.f32.mrf.mxu0
        %3453 = vmatprep.mubr.f32.mxu0 0.0
        %3454 = vmatmul.mubr.f32.gmra.mxu0 %v3378
        %v3455 = vpop.f32.mrf.mxu0
        %v3456 = vadd.f32 0.0, %v3455
        %v3457 = vpop.f32.mrf.mxu0
        %3458 = vdwg.mxu0
        %v3459 = vsel %vm2213, %v2098, 0
        %v3461 = vsel %vm2213, %v2100, 0
        %v3463 = vsel %vm2213, %v2146, 0
        %v3465 = vsel %vm2213, %v2148, 0
        %3467 = vmatprep.subr.mxu0 0.0
        %3468 = vmatpush1.xpose.msra.mxu0 0.0
        %3469 = vmatprep.subr.mxu0 0.0
        %3470 = vmatpush1.xpose.msra.mxu0 0.0
        %3471 = vmatprep.subr.mxu0 0.0
        %3472 = vmatpush1.xpose.msra.mxu0 0.0
        %3473 = vmatprep.subr.mxu0 0.0
        %3474 = vmatpush1.xpose.msra.mxu0 0.0
        %3475 = vmatprep.subr.mxu0 0.0
        %3476 = vmatpush1.xpose.msra.mxu0 0.0
        %3477 = vmatprep.subr.mxu0 0.0
        %3478 = vmatpush1.xpose.msra.mxu0 0.0
        %3479 = vmatprep.subr.mxu0 0.0
        %3480 = vmatpush1.xpose.msra.mxu0 0.0
        %3481 = vmatprep.subr.mxu0 0.0
        %3482 = vmatpush1.xpose.msra.mxu0 0.0
        %3483 = vmatprep.subr.mxu0 0.0
        %3484 = vmatpush1.xpose.msra.mxu0 0.0
        %3485 = vmatprep.subr.mxu0 0.0
        %3486 = vmatpush1.xpose.msra.mxu0 0.0
        %3487 = vmatprep.subr.mxu0 0.0
        %3488 = vmatpush1.xpose.msra.mxu0 0.0
        %3489 = vmatprep.subr.mxu0 0.0
        %3490 = vmatpush1.xpose.msra.mxu0 0.0
        %3491 = vmatprep.subr.mxu0 0.0
        %3492 = vmatpush1.xpose.msra.mxu0 0.0
        %3493 = vmatprep.subr.mxu0 0.0
        %3494 = vmatpush1.xpose.msra.mxu0 0.0
        %3495 = vmatprep.subr.mxu0 0.0
        %3496 = vmatpush1.xpose.msra.mxu0 %v3465
        %3497 = vmatprep.subr.mxu0 0.0
        %3498 = vmatpush1.xpose.msra.mxu0 %v3463
        %3499 = vmatprep.subr.mxu0 0.0
        %3500 = vmatpush2.xpose.msra.mxu0 0.0
        %3501 = vmatprep.subr.mxu0 0.0
        %3502 = vmatpush2.xpose.msra.mxu0 0.0
        %3503 = vmatprep.subr.mxu0 0.0
        %3504 = vmatpush2.xpose.msra.mxu0 0.0
        %3505 = vmatprep.subr.mxu0 0.0
        %3506 = vmatpush2.xpose.msra.mxu0 0.0
        %3507 = vmatprep.subr.mxu0 0.0
        %3508 = vmatpush2.xpose.msra.mxu0 0.0
        %3509 = vmatprep.subr.mxu0 0.0
        %3510 = vmatpush2.xpose.msra.mxu0 0.0
        %3511 = vmatprep.subr.mxu0 0.0
        %3512 = vmatpush2.xpose.msra.mxu0 0.0
        %3513 = vmatprep.subr.mxu0 0.0
        %3514 = vmatpush2.xpose.msra.mxu0 0.0
        %3515 = vmatprep.subr.mxu0 0.0
        %3516 = vmatpush2.xpose.msra.mxu0 0.0
        %3517 = vmatprep.subr.mxu0 0.0
        %3518 = vmatpush2.xpose.msra.mxu0 0.0
        %3519 = vmatprep.subr.mxu0 0.0
        %3520 = vmatpush2.xpose.msra.mxu0 0.0
        %3521 = vmatprep.subr.mxu0 0.0
        %3522 = vmatpush2.xpose.msra.mxu0 0.0
        %3523 = vmatprep.subr.mxu0 0.0
        %3524 = vmatpush2.xpose.msra.mxu0 0.0
        %3525 = vmatprep.subr.mxu0 0.0
        %3526 = vmatpush2.xpose.msra.mxu0 0.0
        %3527 = vmatprep.subr.mxu0 0.0
        %3528 = vmatpush2.xpose.msra.mxu0 0.0
        %3529 = vmatprep.subr.mxu0 0.0
        %3530 = vmatpush2.xpose.msra.mxu0 0.0
        %3531 = vmatprep.mubr.f32.mxu0 0.0
        %3532 = vmatmul.mubr.f32.gmra.mxu0 %v3459
        %v3533 = vpop.f32.mrf.mxu0
        %v3534 = vadd.f32 0.0, %v3533
        %v3535 = vpop.f32.mrf.mxu0
        %3536 = vmatprep.mubr.f32.mxu0 0.0
        %3537 = vmatmul.mubr.f32.gmra.mxu0 %v3461
        %v3538 = vpop.f32.mrf.mxu0
        %v3539 = vadd.f32 0.0, %v3538
        %v3540 = vpop.f32.mrf.mxu0
        %3541 = vdwg.mxu0
        %v3542 = vsel %vm2213, %v2289, -inf
        %3543 = vmax.xlane.f32.xlu0 %v3542
        %v3544 = vpop.xlane.xlu0 %3543
        %v3545 = vsel %vm2213, %v2294, -inf
        %3546 = vmax.xlane.f32.xlu0 %v3545
        %v3547 = vpop.xlane.xlu0 %3546
        %v3548 = vsel %vm2213, %v2372, -inf
        %3549 = vmax.xlane.f32.xlu0 %v3548
        %v3550 = vpop.xlane.xlu0 %3549
        %v3551 = vsel %vm2213, %v2377, -inf
        %3552 = vmax.xlane.f32.xlu0 %v3551
        %v3553 = vpop.xlane.xlu0 %3552
        %v3554 = vsel %vm2213, %v2455, -inf
        %3555 = vmax.xlane.f32.xlu0 %v3554
        %v3556 = vpop.xlane.xlu0 %3555
        %v3557 = vsel %vm2213, %v2460, -inf
        %3558 = vmax.xlane.f32.xlu0 %v3557
        %v3559 = vpop.xlane.xlu0 %3558
        %v3560 = vsel %vm2213, %v2538, -inf
        %3561 = vmax.xlane.f32.xlu0 %v3560
        %v3562 = vpop.xlane.xlu0 %3561
        %v3563 = vsel %vm2213, %v2543, -inf
        %3564 = vmax.xlane.f32.xlu0 %v3563
        %v3565 = vpop.xlane.xlu0 %3564
        %v3566 = vsel %vm2213, %v2621, -inf
        %3567 = vmax.xlane.f32.xlu0 %v3566
        %v3568 = vpop.xlane.xlu0 %3567
        %v3569 = vsel %vm2213, %v2626, -inf
        %3570 = vmax.xlane.f32.xlu0 %v3569
        %v3571 = vpop.xlane.xlu0 %3570
        %v3572 = vsel %vm2213, %v2704, -inf
        %3573 = vmax.xlane.f32.xlu0 %v3572
        %v3574 = vpop.xlane.xlu0 %3573
        %v3575 = vsel %vm2213, %v2709, -inf
        %3576 = vmax.xlane.f32.xlu0 %v3575
        %v3577 = vpop.xlane.xlu0 %3576
        %v3578 = vsel %vm2213, %v2787, -inf
        %3579 = vmax.xlane.f32.xlu0 %v3578
        %v3580 = vpop.xlane.xlu0 %3579
        %v3581 = vsel %vm2213, %v2792, -inf
        %3582 = vmax.xlane.f32.xlu0 %v3581
        %v3583 = vpop.xlane.xlu0 %3582
        %v3584 = vsel %vm2213, %v2870, -inf
        %3585 = vmax.xlane.f32.xlu0 %v3584
        %v3586 = vpop.xlane.xlu0 %3585
        %v3587 = vsel %vm2213, %v2875, -inf
        %3588 = vmax.xlane.f32.xlu0 %v3587
        %v3589 = vpop.xlane.xlu0 %3588
        %v3590 = vsel %vm2213, %v2953, -inf
        %3591 = vmax.xlane.f32.xlu0 %v3590
        %v3592 = vpop.xlane.xlu0 %3591
        %v3593 = vsel %vm2213, %v2958, -inf
        %3594 = vmax.xlane.f32.xlu0 %v3593
        %v3595 = vpop.xlane.xlu0 %3594
        %v3596 = vsel %vm2213, %v3036, -inf
        %3597 = vmax.xlane.f32.xlu0 %v3596
        %v3598 = vpop.xlane.xlu0 %3597
        %v3599 = vsel %vm2213, %v3041, -inf
        %3600 = vmax.xlane.f32.xlu0 %v3599
        %v3601 = vpop.xlane.xlu0 %3600
        %v3602 = vsel %vm2213, %v3119, -inf
        %3603 = vmax.xlane.f32.xlu0 %v3602
        %v3604 = vpop.xlane.xlu0 %3603
        %v3605 = vsel %vm2213, %v3124, -inf
        %3606 = vmax.xlane.f32.xlu0 %v3605
        %v3607 = vpop.xlane.xlu0 %3606
        %v3608 = vsel %vm2213, %v3202, -inf
        %3609 = vmax.xlane.f32.xlu0 %v3608
        %v3610 = vpop.xlane.xlu0 %3609
        %v3611 = vsel %vm2213, %v3207, -inf
        %3612 = vmax.xlane.f32.xlu0 %v3611
        %v3613 = vpop.xlane.xlu0 %3612
        %v3614 = vsel %vm2213, %v3285, -inf
        %3615 = vmax.xlane.f32.xlu0 %v3614
        %v3616 = vpop.xlane.xlu0 %3615
        %v3617 = vsel %vm2213, %v3290, -inf
        %3618 = vmax.xlane.f32.xlu0 %v3617
        %v3619 = vpop.xlane.xlu0 %3618
        %v3620 = vsel %vm2213, %v3368, -inf
        %3621 = vmax.xlane.f32.xlu0 %v3620
        %v3622 = vpop.xlane.xlu0 %3621
        %v3623 = vsel %vm2213, %v3373, -inf
        %3624 = vmax.xlane.f32.xlu0 %v3623
        %v3625 = vpop.xlane.xlu0 %3624
        %v3626 = vsel %vm2213, %v3451, -inf
        %3627 = vmax.xlane.f32.xlu0 %v3626
        %v3628 = vpop.xlane.xlu0 %3627
        %v3629 = vsel %vm2213, %v3456, -inf
        %3630 = vmax.xlane.f32.xlu0 %v3629
        %v3631 = vpop.xlane.xlu0 %3630
        %v3632 = vsel %vm2213, %v3534, -inf
        %3633 = vmax.xlane.f32.xlu0 %v3632
        %v3634 = vpop.xlane.xlu0 %3633
        %v3635 = vsel %vm2213, %v3539, -inf
        %3636 = vmax.xlane.f32.xlu0 %v3635
        %v3637 = vpop.xlane.xlu0 %3636
        %v3638 = vsub.f32 %v2289, %v3544
        %v3639 = vsub.f32 %v2294, %v3547
        %v3640 = vsub.f32 %v2372, %v3550
        %v3641 = vsub.f32 %v2377, %v3553
        %v3642 = vsub.f32 %v2455, %v3556
        %v3643 = vsub.f32 %v2460, %v3559
        %v3644 = vsub.f32 %v2538, %v3562
        %v3645 = vsub.f32 %v2543, %v3565
        %v3646 = vsub.f32 %v2621, %v3568
        %v3647 = vsub.f32 %v2626, %v3571
        %v3648 = vsub.f32 %v2704, %v3574
        %v3649 = vsub.f32 %v2709, %v3577
        %v3650 = vsub.f32 %v2787, %v3580
        %v3651 = vsub.f32 %v2792, %v3583
        %v3652 = vsub.f32 %v2870, %v3586
        %v3653 = vsub.f32 %v2875, %v3589
        %v3654 = vsub.f32 %v2953, %v3592
        %v3655 = vsub.f32 %v2958, %v3595
        %v3656 = vsub.f32 %v3036, %v3598
        %v3657 = vsub.f32 %v3041, %v3601
        %v3658 = vsub.f32 %v3119, %v3604
        %v3659 = vsub.f32 %v3124, %v3607
        %v3660 = vsub.f32 %v3202, %v3610
        %v3661 = vsub.f32 %v3207, %v3613
        %v3662 = vsub.f32 %v3285, %v3616
        %v3663 = vsub.f32 %v3290, %v3619
        %v3664 = vsub.f32 %v3368, %v3622
        %v3665 = vsub.f32 %v3373, %v3625
        %v3666 = vsub.f32 %v3451, %v3628
        %v3667 = vsub.f32 %v3456, %v3631
        %v3668 = vsub.f32 %v3534, %v3634
        %v3669 = vsub.f32 %v3539, %v3637
        %v3670 = vmul.f32 %v3638, 1.442695
        %v3671 = vpow.pop %v3670
        %v3672 = vmul.f32 %v3639, 1.442695
        %v3673 = vpow.pop %v3672
        %v3674 = vmul.f32 %v3640, 1.442695
        %v3675 = vpow.pop %v3674
        %v3676 = vmul.f32 %v3641, 1.442695
        %v3677 = vpow.pop %v3676
        %v3678 = vmul.f32 %v3642, 1.442695
        %v3679 = vpow.pop %v3678
        %v3680 = vmul.f32 %v3643, 1.442695
        %v3681 = vpow.pop %v3680
        %v3682 = vmul.f32 %v3644, 1.442695
        %v3683 = vpow.pop %v3682
        %v3684 = vmul.f32 %v3645, 1.442695
        %v3685 = vpow.pop %v3684
        %v3686 = vmul.f32 %v3646, 1.442695
        %v3687 = vpow.pop %v3686
        %v3688 = vmul.f32 %v3647, 1.442695
        %v3689 = vpow.pop %v3688
        %v3690 = vmul.f32 %v3648, 1.442695
        %v3691 = vpow.pop %v3690
        %v3692 = vmul.f32 %v3649, 1.442695
        %v3693 = vpow.pop %v3692
        %v3694 = vmul.f32 %v3650, 1.442695
        %v3695 = vpow.pop %v3694
        %v3696 = vmul.f32 %v3651, 1.442695
        %v3697 = vpow.pop %v3696
        %v3698 = vmul.f32 %v3652, 1.442695
        %v3699 = vpow.pop %v3698
        %v3700 = vmul.f32 %v3653, 1.442695
        %v3701 = vpow.pop %v3700
        %v3702 = vmul.f32 %v3654, 1.442695
        %v3703 = vpow.pop %v3702
        %v3704 = vmul.f32 %v3655, 1.442695
        %v3705 = vpow.pop %v3704
        %v3706 = vmul.f32 %v3656, 1.442695
        %v3707 = vpow.pop %v3706
        %v3708 = vmul.f32 %v3657, 1.442695
        %v3709 = vpow.pop %v3708
        %v3710 = vmul.f32 %v3658, 1.442695
        %v3711 = vpow.pop %v3710
        %v3712 = vmul.f32 %v3659, 1.442695
        %v3713 = vpow.pop %v3712
        %v3714 = vmul.f32 %v3660, 1.442695
        %v3715 = vpow.pop %v3714
        %v3716 = vmul.f32 %v3661, 1.442695
        %v3717 = vpow.pop %v3716
        %v3718 = vmul.f32 %v3662, 1.442695
        %v3719 = vpow.pop %v3718
        %v3720 = vmul.f32 %v3663, 1.442695
        %v3721 = vpow.pop %v3720
        %v3722 = vmul.f32 %v3664, 1.442695
        %v3723 = vpow.pop %v3722
        %v3724 = vmul.f32 %v3665, 1.442695
        %v3725 = vpow.pop %v3724
        %v3726 = vmul.f32 %v3666, 1.442695
        %v3727 = vpow.pop %v3726
        %v3728 = vmul.f32 %v3667, 1.442695
        %v3729 = vpow.pop %v3728
        %v3730 = vmul.f32 %v3668, 1.442695
        %v3731 = vpow.pop %v3730
        %v3732 = vmul.f32 %v3669, 1.442695
        %v3733 = vpow.pop %v3732
        %v3734 = vsel %vm2213, %v3671, 0.0
        %3735 = vadd.xlane.f32.xlu0 %v3734
        %v3736 = vpop.xlane.xlu0 %3735
        %v3737 = vsel %vm2213, %v3673, 0.0
        %3738 = vadd.xlane.f32.xlu0 %v3737
        %v3739 = vpop.xlane.xlu0 %3738
        %v3740 = vsel %vm2213, %v3675, 0.0
        %3741 = vadd.xlane.f32.xlu0 %v3740
        %v3742 = vpop.xlane.xlu0 %3741
        %v3743 = vsel %vm2213, %v3677, 0.0
        %3744 = vadd.xlane.f32.xlu0 %v3743
        %v3745 = vpop.xlane.xlu0 %3744
        %v3746 = vsel %vm2213, %v3679, 0.0
        %3747 = vadd.xlane.f32.xlu0 %v3746
        %v3748 = vpop.xlane.xlu0 %3747
        %v3749 = vsel %vm2213, %v3681, 0.0
        %3750 = vadd.xlane.f32.xlu0 %v3749
        %v3751 = vpop.xlane.xlu0 %3750
        %v3752 = vsel %vm2213, %v3683, 0.0
        %3753 = vadd.xlane.f32.xlu0 %v3752
        %v3754 = vpop.xlane.xlu0 %3753
        %v3755 = vsel %vm2213, %v3685, 0.0
        %3756 = vadd.xlane.f32.xlu0 %v3755
        %v3757 = vpop.xlane.xlu0 %3756
        %v3758 = vsel %vm2213, %v3687, 0.0
        %3759 = vadd.xlane.f32.xlu0 %v3758
        %v3760 = vpop.xlane.xlu0 %3759
        %v3761 = vsel %vm2213, %v3689, 0.0
        %3762 = vadd.xlane.f32.xlu0 %v3761
        %v3763 = vpop.xlane.xlu0 %3762
        %v3764 = vsel %vm2213, %v3691, 0.0
        %3765 = vadd.xlane.f32.xlu0 %v3764
        %v3766 = vpop.xlane.xlu0 %3765
        %v3767 = vsel %vm2213, %v3693, 0.0
        %3768 = vadd.xlane.f32.xlu0 %v3767
        %v3769 = vpop.xlane.xlu0 %3768
        %v3770 = vsel %vm2213, %v3695, 0.0
        %3771 = vadd.xlane.f32.xlu0 %v3770
        %v3772 = vpop.xlane.xlu0 %3771
        %v3773 = vsel %vm2213, %v3697, 0.0
        %3774 = vadd.xlane.f32.xlu0 %v3773
        %v3775 = vpop.xlane.xlu0 %3774
        %v3776 = vsel %vm2213, %v3699, 0.0
        %3777 = vadd.xlane.f32.xlu0 %v3776
        %v3778 = vpop.xlane.xlu0 %3777
        %v3779 = vsel %vm2213, %v3701, 0.0
        %3780 = vadd.xlane.f32.xlu0 %v3779
        %v3781 = vpop.xlane.xlu0 %3780
        %v3782 = vsel %vm2213, %v3703, 0.0
        %3783 = vadd.xlane.f32.xlu0 %v3782
        %v3784 = vpop.xlane.xlu0 %3783
        %v3785 = vsel %vm2213, %v3705, 0.0
        %3786 = vadd.xlane.f32.xlu0 %v3785
        %v3787 = vpop.xlane.xlu0 %3786
        %v3788 = vsel %vm2213, %v3707, 0.0
        %3789 = vadd.xlane.f32.xlu0 %v3788
        %v3790 = vpop.xlane.xlu0 %3789
        %v3791 = vsel %vm2213, %v3709, 0.0
        %3792 = vadd.xlane.f32.xlu0 %v3791
        %v3793 = vpop.xlane.xlu0 %3792
        %v3794 = vsel %vm2213, %v3711, 0.0
        %3795 = vadd.xlane.f32.xlu0 %v3794
        %v3796 = vpop.xlane.xlu0 %3795
        %v3797 = vsel %vm2213, %v3713, 0.0
        %3798 = vadd.xlane.f32.xlu0 %v3797
        %v3799 = vpop.xlane.xlu0 %3798
        %v3800 = vsel %vm2213, %v3715, 0.0
        %3801 = vadd.xlane.f32.xlu0 %v3800
        %v3802 = vpop.xlane.xlu0 %3801
        %v3803 = vsel %vm2213, %v3717, 0.0
        %3804 = vadd.xlane.f32.xlu0 %v3803
        %v3805 = vpop.xlane.xlu0 %3804
        %v3806 = vsel %vm2213, %v3719, 0.0
        %3807 = vadd.xlane.f32.xlu0 %v3806
        %v3808 = vpop.xlane.xlu0 %3807
        %v3809 = vsel %vm2213, %v3721, 0.0
        %3810 = vadd.xlane.f32.xlu0 %v3809
        %v3811 = vpop.xlane.xlu0 %3810
        %v3812 = vsel %vm2213, %v3723, 0.0
        %3813 = vadd.xlane.f32.xlu0 %v3812
        %v3814 = vpop.xlane.xlu0 %3813
        %v3815 = vsel %vm2213, %v3725, 0.0
        %3816 = vadd.xlane.f32.xlu0 %v3815
        %v3817 = vpop.xlane.xlu0 %3816
        %v3818 = vsel %vm2213, %v3727, 0.0
        %3819 = vadd.xlane.f32.xlu0 %v3818
        %v3820 = vpop.xlane.xlu0 %3819
        %v3821 = vsel %vm2213, %v3729, 0.0
        %3822 = vadd.xlane.f32.xlu0 %v3821
        %v3823 = vpop.xlane.xlu0 %3822
        %v3824 = vsel %vm2213, %v3731, 0.0
        %3825 = vadd.xlane.f32.xlu0 %v3824
        %v3826 = vpop.xlane.xlu0 %3825
        %v3827 = vsel %vm2213, %v3733, 0.0
        %3828 = vadd.xlane.f32.xlu0 %v3827
        %v3829 = vpop.xlane.xlu0 %3828
        %v3830 = vrcp.pop 16.0
        %v3831 = vmul.f32 %v3736, %v3830
        %v3832 = vmul.f32 %v3739, %v3830
        %v3833 = vmul.f32 %v3742, %v3830
        %v3834 = vmul.f32 %v3745, %v3830
        %v3835 = vmul.f32 %v3748, %v3830
        %v3836 = vmul.f32 %v3751, %v3830
        %v3837 = vmul.f32 %v3754, %v3830
        %v3838 = vmul.f32 %v3757, %v3830
        %v3839 = vmul.f32 %v3760, %v3830
        %v3840 = vmul.f32 %v3763, %v3830
        %v3841 = vmul.f32 %v3766, %v3830
        %v3842 = vmul.f32 %v3769, %v3830
        %v3843 = vmul.f32 %v3772, %v3830
        %v3844 = vmul.f32 %v3775, %v3830
        %v3845 = vmul.f32 %v3778, %v3830
        %v3846 = vmul.f32 %v3781, %v3830
        %v3847 = vmul.f32 %v3784, %v3830
        %v3848 = vmul.f32 %v3787, %v3830
        %v3849 = vmul.f32 %v3790, %v3830
        %v3850 = vmul.f32 %v3793, %v3830
        %v3851 = vmul.f32 %v3796, %v3830
        %v3852 = vmul.f32 %v3799, %v3830
        %v3853 = vmul.f32 %v3802, %v3830
        %v3854 = vmul.f32 %v3805, %v3830
        %v3855 = vmul.f32 %v3808, %v3830
        %v3856 = vmul.f32 %v3811, %v3830
        %v3857 = vmul.f32 %v3814, %v3830
        %v3858 = vmul.f32 %v3817, %v3830
        %v3859 = vmul.f32 %v3820, %v3830
        %v3860 = vmul.f32 %v3823, %v3830
        %v3861 = vmul.f32 %v3826, %v3830
        %v3862 = vmul.f32 %v3829, %v3830
        %vm3863 = vcmp.ge.f32.partialorder %v3671, %v3831
        %vm3864 = vcmp.ge.f32.partialorder %v3673, %v3832
        %vm3865 = vcmp.ge.f32.partialorder %v3675, %v3833
        %vm3866 = vcmp.ge.f32.partialorder %v3677, %v3834
        %vm3867 = vcmp.ge.f32.partialorder %v3679, %v3835
        %vm3868 = vcmp.ge.f32.partialorder %v3681, %v3836
        %vm3869 = vcmp.ge.f32.partialorder %v3683, %v3837
        %vm3870 = vcmp.ge.f32.partialorder %v3685, %v3838
        %vm3871 = vcmp.ge.f32.partialorder %v3687, %v3839
        %vm3872 = vcmp.ge.f32.partialorder %v3689, %v3840
        %vm3873 = vcmp.ge.f32.partialorder %v3691, %v3841
        %vm3874 = vcmp.ge.f32.partialorder %v3693, %v3842
        %vm3875 = vcmp.ge.f32.partialorder %v3695, %v3843
        %vm3876 = vcmp.ge.f32.partialorder %v3697, %v3844
        %vm3877 = vcmp.ge.f32.partialorder %v3699, %v3845
        %vm3878 = vcmp.ge.f32.partialorder %v3701, %v3846
        %vm3879 = vcmp.ge.f32.partialorder %v3703, %v3847
        %vm3880 = vcmp.ge.f32.partialorder %v3705, %v3848
        %vm3881 = vcmp.ge.f32.partialorder %v3707, %v3849
        %vm3882 = vcmp.ge.f32.partialorder %v3709, %v3850
        %vm3883 = vcmp.ge.f32.partialorder %v3711, %v3851
        %vm3884 = vcmp.ge.f32.partialorder %v3713, %v3852
        %vm3885 = vcmp.ge.f32.partialorder %v3715, %v3853
        %vm3886 = vcmp.ge.f32.partialorder %v3717, %v3854
        %vm3887 = vcmp.ge.f32.partialorder %v3719, %v3855
        %vm3888 = vcmp.ge.f32.partialorder %v3721, %v3856
        %vm3889 = vcmp.ge.f32.partialorder %v3723, %v3857
        %vm3890 = vcmp.ge.f32.partialorder %v3725, %v3858
        %vm3891 = vcmp.ge.f32.partialorder %v3727, %v3859
        %vm3892 = vcmp.ge.f32.partialorder %v3729, %v3860
        %vm3893 = vcmp.ge.f32.partialorder %v3731, %v3861
        %vm3894 = vcmp.ge.f32.partialorder %v3733, %v3862
        %v3895 = vsel %vm3863, %v3671, 0.0
        %v3896 = vsel %vm3864, %v3673, 0.0
        %v3897 = vsel %vm3865, %v3675, 0.0
        %v3898 = vsel %vm3866, %v3677, 0.0
        %v3899 = vsel %vm3867, %v3679, 0.0
        %v3900 = vsel %vm3868, %v3681, 0.0
        %v3901 = vsel %vm3869, %v3683, 0.0
        %v3902 = vsel %vm3870, %v3685, 0.0
        %v3903 = vsel %vm3871, %v3687, 0.0
        %v3904 = vsel %vm3872, %v3689, 0.0
        %v3905 = vsel %vm3873, %v3691, 0.0
        %v3906 = vsel %vm3874, %v3693, 0.0
        %v3907 = vsel %vm3875, %v3695, 0.0
        %v3908 = vsel %vm3876, %v3697, 0.0
        %v3909 = vsel %vm3877, %v3699, 0.0
        %v3910 = vsel %vm3878, %v3701, 0.0
        %v3911 = vsel %vm3879, %v3703, 0.0
        %v3912 = vsel %vm3880, %v3705, 0.0
        %v3913 = vsel %vm3881, %v3707, 0.0
        %v3914 = vsel %vm3882, %v3709, 0.0
        %v3915 = vsel %vm3883, %v3711, 0.0
        %v3916 = vsel %vm3884, %v3713, 0.0
        %v3917 = vsel %vm3885, %v3715, 0.0
        %v3918 = vsel %vm3886, %v3717, 0.0
        %v3919 = vsel %vm3887, %v3719, 0.0
        %v3920 = vsel %vm3888, %v3721, 0.0
        %v3921 = vsel %vm3889, %v3723, 0.0
        %v3922 = vsel %vm3890, %v3725, 0.0
        %v3923 = vsel %vm3891, %v3727, 0.0
        %v3924 = vsel %vm3892, %v3729, 0.0
        %v3925 = vsel %vm3893, %v3731, 0.0
        %v3926 = vsel %vm3894, %v3733, 0.0
        %v3927 = vsel %vm2213, %v3895, 0.0
        %3928 = vadd.xlane.f32.xlu0 %v3927
        %v3929 = vpop.xlane.xlu0 %3928
        %v3930 = vsel %vm2213, %v3896, 0.0
        %3931 = vadd.xlane.f32.xlu0 %v3930
        %v3932 = vpop.xlane.xlu0 %3931
        %v3933 = vsel %vm2213, %v3897, 0.0
        %3934 = vadd.xlane.f32.xlu0 %v3933
        %v3935 = vpop.xlane.xlu0 %3934
        %v3936 = vsel %vm2213, %v3898, 0.0
        %3937 = vadd.xlane.f32.xlu0 %v3936
        %v3938 = vpop.xlane.xlu0 %3937
        %v3939 = vsel %vm2213, %v3899, 0.0
        %3940 = vadd.xlane.f32.xlu0 %v3939
        %v3941 = vpop.xlane.xlu0 %3940
        %v3942 = vsel %vm2213, %v3900, 0.0
        %3943 = vadd.xlane.f32.xlu0 %v3942
        %v3944 = vpop.xlane.xlu0 %3943
        %v3945 = vsel %vm2213, %v3901, 0.0
        %3946 = vadd.xlane.f32.xlu0 %v3945
        %v3947 = vpop.xlane.xlu0 %3946
        %v3948 = vsel %vm2213, %v3902, 0.0
        %3949 = vadd.xlane.f32.xlu0 %v3948
        %v3950 = vpop.xlane.xlu0 %3949
        %v3951 = vsel %vm2213, %v3903, 0.0
        %3952 = vadd.xlane.f32.xlu0 %v3951
        %v3953 = vpop.xlane.xlu0 %3952
        %v3954 = vsel %vm2213, %v3904, 0.0
        %3955 = vadd.xlane.f32.xlu0 %v3954
        %v3956 = vpop.xlane.xlu0 %3955
        %v3957 = vsel %vm2213, %v3905, 0.0
        %3958 = vadd.xlane.f32.xlu0 %v3957
        %v3959 = vpop.xlane.xlu0 %3958
        %v3960 = vsel %vm2213, %v3906, 0.0
        %3961 = vadd.xlane.f32.xlu0 %v3960
        %v3962 = vpop.xlane.xlu0 %3961
        %v3963 = vsel %vm2213, %v3907, 0.0
        %3964 = vadd.xlane.f32.xlu0 %v3963
        %v3965 = vpop.xlane.xlu0 %3964
        %v3966 = vsel %vm2213, %v3908, 0.0
        %3967 = vadd.xlane.f32.xlu0 %v3966
        %v3968 = vpop.xlane.xlu0 %3967
        %v3969 = vsel %vm2213, %v3909, 0.0
        %3970 = vadd.xlane.f32.xlu0 %v3969
        %v3971 = vpop.xlane.xlu0 %3970
        %v3972 = vsel %vm2213, %v3910, 0.0
        %3973 = vadd.xlane.f32.xlu0 %v3972
        %v3974 = vpop.xlane.xlu0 %3973
        %v3975 = vsel %vm2213, %v3911, 0.0
        %3976 = vadd.xlane.f32.xlu0 %v3975
        %v3977 = vpop.xlane.xlu0 %3976
        %v3978 = vsel %vm2213, %v3912, 0.0
        %3979 = vadd.xlane.f32.xlu0 %v3978
        %v3980 = vpop.xlane.xlu0 %3979
        %v3981 = vsel %vm2213, %v3913, 0.0
        %3982 = vadd.xlane.f32.xlu0 %v3981
        %v3983 = vpop.xlane.xlu0 %3982
        %v3984 = vsel %vm2213, %v3914, 0.0
        %3985 = vadd.xlane.f32.xlu0 %v3984
        %v3986 = vpop.xlane.xlu0 %3985
        %v3987 = vsel %vm2213, %v3915, 0.0
        %3988 = vadd.xlane.f32.xlu0 %v3987
        %v3989 = vpop.xlane.xlu0 %3988
        %v3990 = vsel %vm2213, %v3916, 0.0
        %3991 = vadd.xlane.f32.xlu0 %v3990
        %v3992 = vpop.xlane.xlu0 %3991
        %v3993 = vsel %vm2213, %v3917, 0.0
        %3994 = vadd.xlane.f32.xlu0 %v3993
        %v3995 = vpop.xlane.xlu0 %3994
        %v3996 = vsel %vm2213, %v3918, 0.0
        %3997 = vadd.xlane.f32.xlu0 %v3996
        %v3998 = vpop.xlane.xlu0 %3997
        %v3999 = vsel %vm2213, %v3919, 0.0
        %4000 = vadd.xlane.f32.xlu0 %v3999
        %v4001 = vpop.xlane.xlu0 %4000
        %v4002 = vsel %vm2213, %v3920, 0.0
        %4003 = vadd.xlane.f32.xlu0 %v4002
        %v4004 = vpop.xlane.xlu0 %4003
        %v4005 = vsel %vm2213, %v3921, 0.0
        %4006 = vadd.xlane.f32.xlu0 %v4005
        %v4007 = vpop.xlane.xlu0 %4006
        %v4008 = vsel %vm2213, %v3922, 0.0
        %4009 = vadd.xlane.f32.xlu0 %v4008
        %v4010 = vpop.xlane.xlu0 %4009
        %v4011 = vsel %vm2213, %v3923, 0.0
        %4012 = vadd.xlane.f32.xlu0 %v4011
        %v4013 = vpop.xlane.xlu0 %4012
        %v4014 = vsel %vm2213, %v3924, 0.0
        %4015 = vadd.xlane.f32.xlu0 %v4014
        %v4016 = vpop.xlane.xlu0 %4015
        %v4017 = vsel %vm2213, %v3925, 0.0
        %4018 = vadd.xlane.f32.xlu0 %v4017
        %v4019 = vpop.xlane.xlu0 %4018
        %v4020 = vsel %vm2213, %v3926, 0.0
        %4021 = vadd.xlane.f32.xlu0 %v4020
        %v4022 = vpop.xlane.xlu0 %4021
        %v4023 = vrcp.pop %v3929
        %v4024 = vmul.f32 %v3895, %v4023
        %v4025 = vrcp.pop %v3932
        %v4026 = vmul.f32 %v3896, %v4025
        %v4027 = vrcp.pop %v3935
        %v4028 = vmul.f32 %v3897, %v4027
        %v4029 = vrcp.pop %v3938
        %v4030 = vmul.f32 %v3898, %v4029
        %v4031 = vrcp.pop %v3941
        %v4032 = vmul.f32 %v3899, %v4031
        %v4033 = vrcp.pop %v3944
        %v4034 = vmul.f32 %v3900, %v4033
        %v4035 = vrcp.pop %v3947
        %v4036 = vmul.f32 %v3901, %v4035
        %v4037 = vrcp.pop %v3950
        %v4038 = vmul.f32 %v3902, %v4037
        %v4039 = vrcp.pop %v3953
        %v4040 = vmul.f32 %v3903, %v4039
        %v4041 = vrcp.pop %v3956
        %v4042 = vmul.f32 %v3904, %v4041
        %v4043 = vrcp.pop %v3959
        %v4044 = vmul.f32 %v3905, %v4043
        %v4045 = vrcp.pop %v3962
        %v4046 = vmul.f32 %v3906, %v4045
        %v4047 = vrcp.pop %v3965
        %v4048 = vmul.f32 %v3907, %v4047
        %v4049 = vrcp.pop %v3968
        %v4050 = vmul.f32 %v3908, %v4049
        %v4051 = vrcp.pop %v3971
        %v4052 = vmul.f32 %v3909, %v4051
        %v4053 = vrcp.pop %v3974
        %v4054 = vmul.f32 %v3910, %v4053
        %v4055 = vrcp.pop %v3977
        %v4056 = vmul.f32 %v3911, %v4055
        %v4057 = vrcp.pop %v3980
        %v4058 = vmul.f32 %v3912, %v4057
        %v4059 = vrcp.pop %v3983
        %v4060 = vmul.f32 %v3913, %v4059
        %v4061 = vrcp.pop %v3986
        %v4062 = vmul.f32 %v3914, %v4061
        %v4063 = vrcp.pop %v3989
        %v4064 = vmul.f32 %v3915, %v4063
        %v4065 = vrcp.pop %v3992
        %v4066 = vmul.f32 %v3916, %v4065
        %v4067 = vrcp.pop %v3995
        %v4068 = vmul.f32 %v3917, %v4067
        %v4069 = vrcp.pop %v3998
        %v4070 = vmul.f32 %v3918, %v4069
        %v4071 = vrcp.pop %v4001
        %v4072 = vmul.f32 %v3919, %v4071
        %v4073 = vrcp.pop %v4004
        %v4074 = vmul.f32 %v3920, %v4073
        %v4075 = vrcp.pop %v4007
        %v4076 = vmul.f32 %v3921, %v4075
        %v4077 = vrcp.pop %v4010
        %v4078 = vmul.f32 %v3922, %v4077
        %v4079 = vrcp.pop %v4013
        %v4080 = vmul.f32 %v3923, %v4079
        %v4081 = vrcp.pop %v4016
        %v4082 = vmul.f32 %v3924, %v4081
        %v4083 = vrcp.pop %v4019
        %v4084 = vmul.f32 %v3925, %v4083
        %v4085 = vrcp.pop %v4022
        %v4086 = vmul.f32 %v3926, %v4085
        %v4088 = vsel %vm2213, %v4024, 0
        %v4091 = vsel %vm2213, %v4026, 0
        %4093 = vmatprep.subr.mxu0 0.0
        %4094 = vmatpush1.msra.mxu0 0.0
        %4095 = vmatprep.subr.mxu0 0.0
        %4096 = vmatpush1.msra.mxu0 0.0
        %4097 = vmatprep.subr.mxu0 0.0
        %4098 = vmatpush1.msra.mxu0 0.0
        %4099 = vmatprep.subr.mxu0 0.0
        %4100 = vmatpush1.msra.mxu0 0.0
        %4101 = vmatprep.subr.mxu0 0.0
        %4102 = vmatpush1.msra.mxu0 0.0
        %4103 = vmatprep.subr.mxu0 0.0
        %4104 = vmatpush1.msra.mxu0 0.0
        %4105 = vmatprep.subr.mxu0 0.0
        %4106 = vmatpush1.msra.mxu0 0.0
        %4107 = vmatprep.subr.mxu0 0.0
        %4108 = vmatpush1.msra.mxu0 0.0
        %4109 = vmatprep.subr.mxu0 0.0
        %4110 = vmatpush1.msra.mxu0 0.0
        %4111 = vmatprep.subr.mxu0 0.0
        %4112 = vmatpush1.msra.mxu0 0.0
        %4113 = vmatprep.subr.mxu0 0.0
        %4114 = vmatpush1.msra.mxu0 0.0
        %4115 = vmatprep.subr.mxu0 0.0
        %4116 = vmatpush1.msra.mxu0 0.0
        %4117 = vmatprep.subr.mxu0 0.0
        %4118 = vmatpush1.msra.mxu0 0.0
        %4119 = vmatprep.subr.mxu0 0.0
        %4120 = vmatpush1.msra.mxu0 0.0
        %4121 = vmatprep.subr.mxu0 0.0
        %4122 = vmatpush1.msra.mxu0 %v1980
        %4123 = vmatprep.subr.mxu0 0.0
        %4124 = vmatpush1.msra.mxu0 %v1975
        %4125 = vmatprep.subr.mxu0 0.0
        %4126 = vmatpush2.msra.mxu0 0.0
        %4127 = vmatprep.subr.mxu0 0.0
        %4128 = vmatpush2.msra.mxu0 0.0
        %4129 = vmatprep.subr.mxu0 0.0
        %4130 = vmatpush2.msra.mxu0 0.0
        %4131 = vmatprep.subr.mxu0 0.0
        %4132 = vmatpush2.msra.mxu0 0.0
        %4133 = vmatprep.subr.mxu0 0.0
        %4134 = vmatpush2.msra.mxu0 0.0
        %4135 = vmatprep.subr.mxu0 0.0
        %4136 = vmatpush2.msra.mxu0 0.0
        %4137 = vmatprep.subr.mxu0 0.0
        %4138 = vmatpush2.msra.mxu0 0.0
        %4139 = vmatprep.subr.mxu0 0.0
        %4140 = vmatpush2.msra.mxu0 0.0
        %4141 = vmatprep.subr.mxu0 0.0
        %4142 = vmatpush2.msra.mxu0 0.0
        %4143 = vmatprep.subr.mxu0 0.0
        %4144 = vmatpush2.msra.mxu0 0.0
        %4145 = vmatprep.subr.mxu0 0.0
        %4146 = vmatpush2.msra.mxu0 0.0
        %4147 = vmatprep.subr.mxu0 0.0
        %4148 = vmatpush2.msra.mxu0 0.0
        %4149 = vmatprep.subr.mxu0 0.0
        %4150 = vmatpush2.msra.mxu0 0.0
        %4151 = vmatprep.subr.mxu0 0.0
        %4152 = vmatpush2.msra.mxu0 0.0
        %4153 = vmatprep.subr.mxu0 0.0
        %4154 = vmatpush2.msra.mxu0 0.0
        %4155 = vmatprep.subr.mxu0 0.0
        %4156 = vmatpush2.msra.mxu0 0.0
        %4157 = vmatprep.mubr.f32.mxu0 0.0
        %4158 = vmatmul.mubr.f32.gmra.mxu0 %v4088
        %v4159 = vpop.f32.mrf.mxu0
        %v4160 = vadd.f32 0.0, %v4159
        %v4161 = vpop.f32.mrf.mxu0
        %4162 = vmatprep.mubr.f32.mxu0 0.0
        %4163 = vmatmul.mubr.f32.gmra.mxu0 %v4091
        %v4164 = vpop.f32.mrf.mxu0
        %v4165 = vadd.f32 0.0, %v4164
        %v4166 = vpop.f32.mrf.mxu0
        %4167 = vdwg.mxu0
        %v4169 = vsel %vm2213, %v4028, 0
        %v4172 = vsel %vm2213, %v4030, 0
        %4174 = vmatprep.subr.mxu0 0.0
        %4175 = vmatpush1.msra.mxu0 0.0
        %4176 = vmatprep.subr.mxu0 0.0
        %4177 = vmatpush1.msra.mxu0 0.0
        %4178 = vmatprep.subr.mxu0 0.0
        %4179 = vmatpush1.msra.mxu0 0.0
        %4180 = vmatprep.subr.mxu0 0.0
        %4181 = vmatpush1.msra.mxu0 0.0
        %4182 = vmatprep.subr.mxu0 0.0
        %4183 = vmatpush1.msra.mxu0 0.0
        %4184 = vmatprep.subr.mxu0 0.0
        %4185 = vmatpush1.msra.mxu0 0.0
        %4186 = vmatprep.subr.mxu0 0.0
        %4187 = vmatpush1.msra.mxu0 0.0
        %4188 = vmatprep.subr.mxu0 0.0
        %4189 = vmatpush1.msra.mxu0 0.0
        %4190 = vmatprep.subr.mxu0 0.0
        %4191 = vmatpush1.msra.mxu0 0.0
        %4192 = vmatprep.subr.mxu0 0.0
        %4193 = vmatpush1.msra.mxu0 0.0
        %4194 = vmatprep.subr.mxu0 0.0
        %4195 = vmatpush1.msra.mxu0 0.0
        %4196 = vmatprep.subr.mxu0 0.0
        %4197 = vmatpush1.msra.mxu0 0.0
        %4198 = vmatprep.subr.mxu0 0.0
        %4199 = vmatpush1.msra.mxu0 0.0
        %4200 = vmatprep.subr.mxu0 0.0
        %4201 = vmatpush1.msra.mxu0 0.0
        %4202 = vmatprep.subr.mxu0 0.0
        %4203 = vmatpush1.msra.mxu0 %v1990
        %4204 = vmatprep.subr.mxu0 0.0
        %4205 = vmatpush1.msra.mxu0 %v1985
        %4206 = vmatprep.subr.mxu0 0.0
        %4207 = vmatpush2.msra.mxu0 0.0
        %4208 = vmatprep.subr.mxu0 0.0
        %4209 = vmatpush2.msra.mxu0 0.0
        %4210 = vmatprep.subr.mxu0 0.0
        %4211 = vmatpush2.msra.mxu0 0.0
        %4212 = vmatprep.subr.mxu0 0.0
        %4213 = vmatpush2.msra.mxu0 0.0
        %4214 = vmatprep.subr.mxu0 0.0
        %4215 = vmatpush2.msra.mxu0 0.0
        %4216 = vmatprep.subr.mxu0 0.0
        %4217 = vmatpush2.msra.mxu0 0.0
        %4218 = vmatprep.subr.mxu0 0.0
        %4219 = vmatpush2.msra.mxu0 0.0
        %4220 = vmatprep.subr.mxu0 0.0
        %4221 = vmatpush2.msra.mxu0 0.0
        %4222 = vmatprep.subr.mxu0 0.0
        %4223 = vmatpush2.msra.mxu0 0.0
        %4224 = vmatprep.subr.mxu0 0.0
        %4225 = vmatpush2.msra.mxu0 0.0
        %4226 = vmatprep.subr.mxu0 0.0
        %4227 = vmatpush2.msra.mxu0 0.0
        %4228 = vmatprep.subr.mxu0 0.0
        %4229 = vmatpush2.msra.mxu0 0.0
        %4230 = vmatprep.subr.mxu0 0.0
        %4231 = vmatpush2.msra.mxu0 0.0
        %4232 = vmatprep.subr.mxu0 0.0
        %4233 = vmatpush2.msra.mxu0 0.0
        %4234 = vmatprep.subr.mxu0 0.0
        %4235 = vmatpush2.msra.mxu0 0.0
        %4236 = vmatprep.subr.mxu0 0.0
        %4237 = vmatpush2.msra.mxu0 0.0
        %4238 = vmatprep.mubr.f32.mxu0 0.0
        %4239 = vmatmul.mubr.f32.gmra.mxu0 %v4169
        %v4240 = vpop.f32.mrf.mxu0
        %v4241 = vadd.f32 0.0, %v4240
        %v4242 = vpop.f32.mrf.mxu0
        %4243 = vmatprep.mubr.f32.mxu0 0.0
        %4244 = vmatmul.mubr.f32.gmra.mxu0 %v4172
        %v4245 = vpop.f32.mrf.mxu0
        %v4246 = vadd.f32 0.0, %v4245
        %v4247 = vpop.f32.mrf.mxu0
        %4248 = vdwg.mxu0
        %v4250 = vsel %vm2213, %v4032, 0
        %v4253 = vsel %vm2213, %v4034, 0
        %4255 = vmatprep.subr.mxu0 0.0
        %4256 = vmatpush1.msra.mxu0 0.0
        %4257 = vmatprep.subr.mxu0 0.0
        %4258 = vmatpush1.msra.mxu0 0.0
        %4259 = vmatprep.subr.mxu0 0.0
        %4260 = vmatpush1.msra.mxu0 0.0
        %4261 = vmatprep.subr.mxu0 0.0
        %4262 = vmatpush1.msra.mxu0 0.0
        %4263 = vmatprep.subr.mxu0 0.0
        %4264 = vmatpush1.msra.mxu0 0.0
        %4265 = vmatprep.subr.mxu0 0.0
        %4266 = vmatpush1.msra.mxu0 0.0
        %4267 = vmatprep.subr.mxu0 0.0
        %4268 = vmatpush1.msra.mxu0 0.0
        %4269 = vmatprep.subr.mxu0 0.0
        %4270 = vmatpush1.msra.mxu0 0.0
        %4271 = vmatprep.subr.mxu0 0.0
        %4272 = vmatpush1.msra.mxu0 0.0
        %4273 = vmatprep.subr.mxu0 0.0
        %4274 = vmatpush1.msra.mxu0 0.0
        %4275 = vmatprep.subr.mxu0 0.0
        %4276 = vmatpush1.msra.mxu0 0.0
        %4277 = vmatprep.subr.mxu0 0.0
        %4278 = vmatpush1.msra.mxu0 0.0
        %4279 = vmatprep.subr.mxu0 0.0
        %4280 = vmatpush1.msra.mxu0 0.0
        %4281 = vmatprep.subr.mxu0 0.0
        %4282 = vmatpush1.msra.mxu0 0.0
        %4283 = vmatprep.subr.mxu0 0.0
        %4284 = vmatpush1.msra.mxu0 %v2000
        %4285 = vmatprep.subr.mxu0 0.0
        %4286 = vmatpush1.msra.mxu0 %v1995
        %4287 = vmatprep.subr.mxu0 0.0
        %4288 = vmatpush2.msra.mxu0 0.0
        %4289 = vmatprep.subr.mxu0 0.0
        %4290 = vmatpush2.msra.mxu0 0.0
        %4291 = vmatprep.subr.mxu0 0.0
        %4292 = vmatpush2.msra.mxu0 0.0
        %4293 = vmatprep.subr.mxu0 0.0
        %4294 = vmatpush2.msra.mxu0 0.0
        %4295 = vmatprep.subr.mxu0 0.0
        %4296 = vmatpush2.msra.mxu0 0.0
        %4297 = vmatprep.subr.mxu0 0.0
        %4298 = vmatpush2.msra.mxu0 0.0
        %4299 = vmatprep.subr.mxu0 0.0
        %4300 = vmatpush2.msra.mxu0 0.0
        %4301 = vmatprep.subr.mxu0 0.0
        %4302 = vmatpush2.msra.mxu0 0.0
        %4303 = vmatprep.subr.mxu0 0.0
        %4304 = vmatpush2.msra.mxu0 0.0
        %4305 = vmatprep.subr.mxu0 0.0
        %4306 = vmatpush2.msra.mxu0 0.0
        %4307 = vmatprep.subr.mxu0 0.0
        %4308 = vmatpush2.msra.mxu0 0.0
        %4309 = vmatprep.subr.mxu0 0.0
        %4310 = vmatpush2.msra.mxu0 0.0
        %4311 = vmatprep.subr.mxu0 0.0
        %4312 = vmatpush2.msra.mxu0 0.0
        %4313 = vmatprep.subr.mxu0 0.0
        %4314 = vmatpush2.msra.mxu0 0.0
        %4315 = vmatprep.subr.mxu0 0.0
        %4316 = vmatpush2.msra.mxu0 0.0
        %4317 = vmatprep.subr.mxu0 0.0
        %4318 = vmatpush2.msra.mxu0 0.0
        %4319 = vmatprep.mubr.f32.mxu0 0.0
        %4320 = vmatmul.mubr.f32.gmra.mxu0 %v4250
        %v4321 = vpop.f32.mrf.mxu0
        %v4322 = vadd.f32 0.0, %v4321
        %v4323 = vpop.f32.mrf.mxu0
        %4324 = vmatprep.mubr.f32.mxu0 0.0
        %4325 = vmatmul.mubr.f32.gmra.mxu0 %v4253
        %v4326 = vpop.f32.mrf.mxu0
        %v4327 = vadd.f32 0.0, %v4326
        %v4328 = vpop.f32.mrf.mxu0
        %4329 = vdwg.mxu0
        %v4331 = vsel %vm2213, %v4036, 0
        %v4334 = vsel %vm2213, %v4038, 0
        %4336 = vmatprep.subr.mxu0 0.0
        %4337 = vmatpush1.msra.mxu0 0.0
        %4338 = vmatprep.subr.mxu0 0.0
        %4339 = vmatpush1.msra.mxu0 0.0
        %4340 = vmatprep.subr.mxu0 0.0
        %4341 = vmatpush1.msra.mxu0 0.0
        %4342 = vmatprep.subr.mxu0 0.0
        %4343 = vmatpush1.msra.mxu0 0.0
        %4344 = vmatprep.subr.mxu0 0.0
        %4345 = vmatpush1.msra.mxu0 0.0
        %4346 = vmatprep.subr.mxu0 0.0
        %4347 = vmatpush1.msra.mxu0 0.0
        %4348 = vmatprep.subr.mxu0 0.0
        %4349 = vmatpush1.msra.mxu0 0.0
        %4350 = vmatprep.subr.mxu0 0.0
        %4351 = vmatpush1.msra.mxu0 0.0
        %4352 = vmatprep.subr.mxu0 0.0
        %4353 = vmatpush1.msra.mxu0 0.0
        %4354 = vmatprep.subr.mxu0 0.0
        %4355 = vmatpush1.msra.mxu0 0.0
        %4356 = vmatprep.subr.mxu0 0.0
        %4357 = vmatpush1.msra.mxu0 0.0
        %4358 = vmatprep.subr.mxu0 0.0
        %4359 = vmatpush1.msra.mxu0 0.0
        %4360 = vmatprep.subr.mxu0 0.0
        %4361 = vmatpush1.msra.mxu0 0.0
        %4362 = vmatprep.subr.mxu0 0.0
        %4363 = vmatpush1.msra.mxu0 0.0
        %4364 = vmatprep.subr.mxu0 0.0
        %4365 = vmatpush1.msra.mxu0 %v2010
        %4366 = vmatprep.subr.mxu0 0.0
        %4367 = vmatpush1.msra.mxu0 %v2005
        %4368 = vmatprep.subr.mxu0 0.0
        %4369 = vmatpush2.msra.mxu0 0.0
        %4370 = vmatprep.subr.mxu0 0.0
        %4371 = vmatpush2.msra.mxu0 0.0
        %4372 = vmatprep.subr.mxu0 0.0
        %4373 = vmatpush2.msra.mxu0 0.0
        %4374 = vmatprep.subr.mxu0 0.0
        %4375 = vmatpush2.msra.mxu0 0.0
        %4376 = vmatprep.subr.mxu0 0.0
        %4377 = vmatpush2.msra.mxu0 0.0
        %4378 = vmatprep.subr.mxu0 0.0
        %4379 = vmatpush2.msra.mxu0 0.0
        %4380 = vmatprep.subr.mxu0 0.0
        %4381 = vmatpush2.msra.mxu0 0.0
        %4382 = vmatprep.subr.mxu0 0.0
        %4383 = vmatpush2.msra.mxu0 0.0
        %4384 = vmatprep.subr.mxu0 0.0
        %4385 = vmatpush2.msra.mxu0 0.0
        %4386 = vmatprep.subr.mxu0 0.0
        %4387 = vmatpush2.msra.mxu0 0.0
        %4388 = vmatprep.subr.mxu0 0.0
        %4389 = vmatpush2.msra.mxu0 0.0
        %4390 = vmatprep.subr.mxu0 0.0
        %4391 = vmatpush2.msra.mxu0 0.0
        %4392 = vmatprep.subr.mxu0 0.0
        %4393 = vmatpush2.msra.mxu0 0.0
        %4394 = vmatprep.subr.mxu0 0.0
        %4395 = vmatpush2.msra.mxu0 0.0
        %4396 = vmatprep.subr.mxu0 0.0
        %4397 = vmatpush2.msra.mxu0 0.0
        %4398 = vmatprep.subr.mxu0 0.0
        %4399 = vmatpush2.msra.mxu0 0.0
        %4400 = vmatprep.mubr.f32.mxu0 0.0
        %4401 = vmatmul.mubr.f32.gmra.mxu0 %v4331
        %v4402 = vpop.f32.mrf.mxu0
        %v4403 = vadd.f32 0.0, %v4402
        %v4404 = vpop.f32.mrf.mxu0
        %4405 = vmatprep.mubr.f32.mxu0 0.0
        %4406 = vmatmul.mubr.f32.gmra.mxu0 %v4334
        %v4407 = vpop.f32.mrf.mxu0
        %v4408 = vadd.f32 0.0, %v4407
        %v4409 = vpop.f32.mrf.mxu0
        %4410 = vdwg.mxu0
        %v4412 = vsel %vm2213, %v4040, 0
        %v4415 = vsel %vm2213, %v4042, 0
        %4417 = vmatprep.subr.mxu0 0.0
        %4418 = vmatpush1.msra.mxu0 0.0
        %4419 = vmatprep.subr.mxu0 0.0
        %4420 = vmatpush1.msra.mxu0 0.0
        %4421 = vmatprep.subr.mxu0 0.0
        %4422 = vmatpush1.msra.mxu0 0.0
        %4423 = vmatprep.subr.mxu0 0.0
        %4424 = vmatpush1.msra.mxu0 0.0
        %4425 = vmatprep.subr.mxu0 0.0
        %4426 = vmatpush1.msra.mxu0 0.0
        %4427 = vmatprep.subr.mxu0 0.0
        %4428 = vmatpush1.msra.mxu0 0.0
        %4429 = vmatprep.subr.mxu0 0.0
        %4430 = vmatpush1.msra.mxu0 0.0
        %4431 = vmatprep.subr.mxu0 0.0
        %4432 = vmatpush1.msra.mxu0 0.0
        %4433 = vmatprep.subr.mxu0 0.0
        %4434 = vmatpush1.msra.mxu0 0.0
        %4435 = vmatprep.subr.mxu0 0.0
        %4436 = vmatpush1.msra.mxu0 0.0
        %4437 = vmatprep.subr.mxu0 0.0
        %4438 = vmatpush1.msra.mxu0 0.0
        %4439 = vmatprep.subr.mxu0 0.0
        %4440 = vmatpush1.msra.mxu0 0.0
        %4441 = vmatprep.subr.mxu0 0.0
        %4442 = vmatpush1.msra.mxu0 0.0
        %4443 = vmatprep.subr.mxu0 0.0
        %4444 = vmatpush1.msra.mxu0 0.0
        %4445 = vmatprep.subr.mxu0 0.0
        %4446 = vmatpush1.msra.mxu0 %v2020
        %4447 = vmatprep.subr.mxu0 0.0
        %4448 = vmatpush1.msra.mxu0 %v2015
        %4449 = vmatprep.subr.mxu0 0.0
        %4450 = vmatpush2.msra.mxu0 0.0
        %4451 = vmatprep.subr.mxu0 0.0
        %4452 = vmatpush2.msra.mxu0 0.0
        %4453 = vmatprep.subr.mxu0 0.0
        %4454 = vmatpush2.msra.mxu0 0.0
        %4455 = vmatprep.subr.mxu0 0.0
        %4456 = vmatpush2.msra.mxu0 0.0
        %4457 = vmatprep.subr.mxu0 0.0
        %4458 = vmatpush2.msra.mxu0 0.0
        %4459 = vmatprep.subr.mxu0 0.0
        %4460 = vmatpush2.msra.mxu0 0.0
        %4461 = vmatprep.subr.mxu0 0.0
        %4462 = vmatpush2.msra.mxu0 0.0
        %4463 = vmatprep.subr.mxu0 0.0
        %4464 = vmatpush2.msra.mxu0 0.0
        %4465 = vmatprep.subr.mxu0 0.0
        %4466 = vmatpush2.msra.mxu0 0.0
        %4467 = vmatprep.subr.mxu0 0.0
        %4468 = vmatpush2.msra.mxu0 0.0
        %4469 = vmatprep.subr.mxu0 0.0
        %4470 = vmatpush2.msra.mxu0 0.0
        %4471 = vmatprep.subr.mxu0 0.0
        %4472 = vmatpush2.msra.mxu0 0.0
        %4473 = vmatprep.subr.mxu0 0.0
        %4474 = vmatpush2.msra.mxu0 0.0
        %4475 = vmatprep.subr.mxu0 0.0
        %4476 = vmatpush2.msra.mxu0 0.0
        %4477 = vmatprep.subr.mxu0 0.0
        %4478 = vmatpush2.msra.mxu0 0.0
        %4479 = vmatprep.subr.mxu0 0.0
        %4480 = vmatpush2.msra.mxu0 0.0
        %4481 = vmatprep.mubr.f32.mxu0 0.0
        %4482 = vmatmul.mubr.f32.gmra.mxu0 %v4412
        %v4483 = vpop.f32.mrf.mxu0
        %v4484 = vadd.f32 0.0, %v4483
        %v4485 = vpop.f32.mrf.mxu0
        %4486 = vmatprep.mubr.f32.mxu0 0.0
        %4487 = vmatmul.mubr.f32.gmra.mxu0 %v4415
        %v4488 = vpop.f32.mrf.mxu0
        %v4489 = vadd.f32 0.0, %v4488
        %v4490 = vpop.f32.mrf.mxu0
        %4491 = vdwg.mxu0
        %v4493 = vsel %vm2213, %v4044, 0
        %v4496 = vsel %vm2213, %v4046, 0
        %4498 = vmatprep.subr.mxu0 0.0
        %4499 = vmatpush1.msra.mxu0 0.0
        %4500 = vmatprep.subr.mxu0 0.0
        %4501 = vmatpush1.msra.mxu0 0.0
        %4502 = vmatprep.subr.mxu0 0.0
        %4503 = vmatpush1.msra.mxu0 0.0
        %4504 = vmatprep.subr.mxu0 0.0
        %4505 = vmatpush1.msra.mxu0 0.0
        %4506 = vmatprep.subr.mxu0 0.0
        %4507 = vmatpush1.msra.mxu0 0.0
        %4508 = vmatprep.subr.mxu0 0.0
        %4509 = vmatpush1.msra.mxu0 0.0
        %4510 = vmatprep.subr.mxu0 0.0
        %4511 = vmatpush1.msra.mxu0 0.0
        %4512 = vmatprep.subr.mxu0 0.0
        %4513 = vmatpush1.msra.mxu0 0.0
        %4514 = vmatprep.subr.mxu0 0.0
        %4515 = vmatpush1.msra.mxu0 0.0
        %4516 = vmatprep.subr.mxu0 0.0
        %4517 = vmatpush1.msra.mxu0 0.0
        %4518 = vmatprep.subr.mxu0 0.0
        %4519 = vmatpush1.msra.mxu0 0.0
        %4520 = vmatprep.subr.mxu0 0.0
        %4521 = vmatpush1.msra.mxu0 0.0
        %4522 = vmatprep.subr.mxu0 0.0
        %4523 = vmatpush1.msra.mxu0 0.0
        %4524 = vmatprep.subr.mxu0 0.0
        %4525 = vmatpush1.msra.mxu0 0.0
        %4526 = vmatprep.subr.mxu0 0.0
        %4527 = vmatpush1.msra.mxu0 %v2030
        %4528 = vmatprep.subr.mxu0 0.0
        %4529 = vmatpush1.msra.mxu0 %v2025
        %4530 = vmatprep.subr.mxu0 0.0
        %4531 = vmatpush2.msra.mxu0 0.0
        %4532 = vmatprep.subr.mxu0 0.0
        %4533 = vmatpush2.msra.mxu0 0.0
        %4534 = vmatprep.subr.mxu0 0.0
        %4535 = vmatpush2.msra.mxu0 0.0
        %4536 = vmatprep.subr.mxu0 0.0
        %4537 = vmatpush2.msra.mxu0 0.0
        %4538 = vmatprep.subr.mxu0 0.0
        %4539 = vmatpush2.msra.mxu0 0.0
        %4540 = vmatprep.subr.mxu0 0.0
        %4541 = vmatpush2.msra.mxu0 0.0
        %4542 = vmatprep.subr.mxu0 0.0
        %4543 = vmatpush2.msra.mxu0 0.0
        %4544 = vmatprep.subr.mxu0 0.0
        %4545 = vmatpush2.msra.mxu0 0.0
        %4546 = vmatprep.subr.mxu0 0.0
        %4547 = vmatpush2.msra.mxu0 0.0
        %4548 = vmatprep.subr.mxu0 0.0
        %4549 = vmatpush2.msra.mxu0 0.0
        %4550 = vmatprep.subr.mxu0 0.0
        %4551 = vmatpush2.msra.mxu0 0.0
        %4552 = vmatprep.subr.mxu0 0.0
        %4553 = vmatpush2.msra.mxu0 0.0
        %4554 = vmatprep.subr.mxu0 0.0
        %4555 = vmatpush2.msra.mxu0 0.0
        %4556 = vmatprep.subr.mxu0 0.0
        %4557 = vmatpush2.msra.mxu0 0.0
        %4558 = vmatprep.subr.mxu0 0.0
        %4559 = vmatpush2.msra.mxu0 0.0
        %4560 = vmatprep.subr.mxu0 0.0
        %4561 = vmatpush2.msra.mxu0 0.0
        %4562 = vmatprep.mubr.f32.mxu0 0.0
        %4563 = vmatmul.mubr.f32.gmra.mxu0 %v4493
        %v4564 = vpop.f32.mrf.mxu0
        %v4565 = vadd.f32 0.0, %v4564
        %v4566 = vpop.f32.mrf.mxu0
        %4567 = vmatprep.mubr.f32.mxu0 0.0
        %4568 = vmatmul.mubr.f32.gmra.mxu0 %v4496
        %v4569 = vpop.f32.mrf.mxu0
        %v4570 = vadd.f32 0.0, %v4569
        %v4571 = vpop.f32.mrf.mxu0
        %4572 = vdwg.mxu0
        %v4574 = vsel %vm2213, %v4048, 0
        %v4577 = vsel %vm2213, %v4050, 0
        %4579 = vmatprep.subr.mxu0 0.0
        %4580 = vmatpush1.msra.mxu0 0.0
        %4581 = vmatprep.subr.mxu0 0.0
        %4582 = vmatpush1.msra.mxu0 0.0
        %4583 = vmatprep.subr.mxu0 0.0
        %4584 = vmatpush1.msra.mxu0 0.0
        %4585 = vmatprep.subr.mxu0 0.0
        %4586 = vmatpush1.msra.mxu0 0.0
        %4587 = vmatprep.subr.mxu0 0.0
        %4588 = vmatpush1.msra.mxu0 0.0
        %4589 = vmatprep.subr.mxu0 0.0
        %4590 = vmatpush1.msra.mxu0 0.0
        %4591 = vmatprep.subr.mxu0 0.0
        %4592 = vmatpush1.msra.mxu0 0.0
        %4593 = vmatprep.subr.mxu0 0.0
        %4594 = vmatpush1.msra.mxu0 0.0
        %4595 = vmatprep.subr.mxu0 0.0
        %4596 = vmatpush1.msra.mxu0 0.0
        %4597 = vmatprep.subr.mxu0 0.0
        %4598 = vmatpush1.msra.mxu0 0.0
        %4599 = vmatprep.subr.mxu0 0.0
        %4600 = vmatpush1.msra.mxu0 0.0
        %4601 = vmatprep.subr.mxu0 0.0
        %4602 = vmatpush1.msra.mxu0 0.0
        %4603 = vmatprep.subr.mxu0 0.0
        %4604 = vmatpush1.msra.mxu0 0.0
        %4605 = vmatprep.subr.mxu0 0.0
        %4606 = vmatpush1.msra.mxu0 0.0
        %4607 = vmatprep.subr.mxu0 0.0
        %4608 = vmatpush1.msra.mxu0 %v2040
        %4609 = vmatprep.subr.mxu0 0.0
        %4610 = vmatpush1.msra.mxu0 %v2035
        %4611 = vmatprep.subr.mxu0 0.0
        %4612 = vmatpush2.msra.mxu0 0.0
        %4613 = vmatprep.subr.mxu0 0.0
        %4614 = vmatpush2.msra.mxu0 0.0
        %4615 = vmatprep.subr.mxu0 0.0
        %4616 = vmatpush2.msra.mxu0 0.0
        %4617 = vmatprep.subr.mxu0 0.0
        %4618 = vmatpush2.msra.mxu0 0.0
        %4619 = vmatprep.subr.mxu0 0.0
        %4620 = vmatpush2.msra.mxu0 0.0
        %4621 = vmatprep.subr.mxu0 0.0
        %4622 = vmatpush2.msra.mxu0 0.0
        %4623 = vmatprep.subr.mxu0 0.0
        %4624 = vmatpush2.msra.mxu0 0.0
        %4625 = vmatprep.subr.mxu0 0.0
        %4626 = vmatpush2.msra.mxu0 0.0
        %4627 = vmatprep.subr.mxu0 0.0
        %4628 = vmatpush2.msra.mxu0 0.0
        %4629 = vmatprep.subr.mxu0 0.0
        %4630 = vmatpush2.msra.mxu0 0.0
        %4631 = vmatprep.subr.mxu0 0.0
        %4632 = vmatpush2.msra.mxu0 0.0
        %4633 = vmatprep.subr.mxu0 0.0
        %4634 = vmatpush2.msra.mxu0 0.0
        %4635 = vmatprep.subr.mxu0 0.0
        %4636 = vmatpush2.msra.mxu0 0.0
        %4637 = vmatprep.subr.mxu0 0.0
        %4638 = vmatpush2.msra.mxu0 0.0
        %4639 = vmatprep.subr.mxu0 0.0
        %4640 = vmatpush2.msra.mxu0 0.0
        %4641 = vmatprep.subr.mxu0 0.0
        %4642 = vmatpush2.msra.mxu0 0.0
        %4643 = vmatprep.mubr.f32.mxu0 0.0
        %4644 = vmatmul.mubr.f32.gmra.mxu0 %v4574
        %v4645 = vpop.f32.mrf.mxu0
        %v4646 = vadd.f32 0.0, %v4645
        %v4647 = vpop.f32.mrf.mxu0
        %4648 = vmatprep.mubr.f32.mxu0 0.0
        %4649 = vmatmul.mubr.f32.gmra.mxu0 %v4577
        %v4650 = vpop.f32.mrf.mxu0
        %v4651 = vadd.f32 0.0, %v4650
        %v4652 = vpop.f32.mrf.mxu0
        %4653 = vdwg.mxu0
        %v4655 = vsel %vm2213, %v4052, 0
        %v4658 = vsel %vm2213, %v4054, 0
        %4660 = vmatprep.subr.mxu0 0.0
        %4661 = vmatpush1.msra.mxu0 0.0
        %4662 = vmatprep.subr.mxu0 0.0
        %4663 = vmatpush1.msra.mxu0 0.0
        %4664 = vmatprep.subr.mxu0 0.0
        %4665 = vmatpush1.msra.mxu0 0.0
        %4666 = vmatprep.subr.mxu0 0.0
        %4667 = vmatpush1.msra.mxu0 0.0
        %4668 = vmatprep.subr.mxu0 0.0
        %4669 = vmatpush1.msra.mxu0 0.0
        %4670 = vmatprep.subr.mxu0 0.0
        %4671 = vmatpush1.msra.mxu0 0.0
        %4672 = vmatprep.subr.mxu0 0.0
        %4673 = vmatpush1.msra.mxu0 0.0
        %4674 = vmatprep.subr.mxu0 0.0
        %4675 = vmatpush1.msra.mxu0 0.0
        %4676 = vmatprep.subr.mxu0 0.0
        %4677 = vmatpush1.msra.mxu0 0.0
        %4678 = vmatprep.subr.mxu0 0.0
        %4679 = vmatpush1.msra.mxu0 0.0
        %4680 = vmatprep.subr.mxu0 0.0
        %4681 = vmatpush1.msra.mxu0 0.0
        %4682 = vmatprep.subr.mxu0 0.0
        %4683 = vmatpush1.msra.mxu0 0.0
        %4684 = vmatprep.subr.mxu0 0.0
        %4685 = vmatpush1.msra.mxu0 0.0
        %4686 = vmatprep.subr.mxu0 0.0
        %4687 = vmatpush1.msra.mxu0 0.0
        %4688 = vmatprep.subr.mxu0 0.0
        %4689 = vmatpush1.msra.mxu0 %v2050
        %4690 = vmatprep.subr.mxu0 0.0
        %4691 = vmatpush1.msra.mxu0 %v2045
        %4692 = vmatprep.subr.mxu0 0.0
        %4693 = vmatpush2.msra.mxu0 0.0
        %4694 = vmatprep.subr.mxu0 0.0
        %4695 = vmatpush2.msra.mxu0 0.0
        %4696 = vmatprep.subr.mxu0 0.0
        %4697 = vmatpush2.msra.mxu0 0.0
        %4698 = vmatprep.subr.mxu0 0.0
        %4699 = vmatpush2.msra.mxu0 0.0
        %4700 = vmatprep.subr.mxu0 0.0
        %4701 = vmatpush2.msra.mxu0 0.0
        %4702 = vmatprep.subr.mxu0 0.0
        %4703 = vmatpush2.msra.mxu0 0.0
        %4704 = vmatprep.subr.mxu0 0.0
        %4705 = vmatpush2.msra.mxu0 0.0
        %4706 = vmatprep.subr.mxu0 0.0
        %4707 = vmatpush2.msra.mxu0 0.0
        %4708 = vmatprep.subr.mxu0 0.0
        %4709 = vmatpush2.msra.mxu0 0.0
        %4710 = vmatprep.subr.mxu0 0.0
        %4711 = vmatpush2.msra.mxu0 0.0
        %4712 = vmatprep.subr.mxu0 0.0
        %4713 = vmatpush2.msra.mxu0 0.0
        %4714 = vmatprep.subr.mxu0 0.0
        %4715 = vmatpush2.msra.mxu0 0.0
        %4716 = vmatprep.subr.mxu0 0.0
        %4717 = vmatpush2.msra.mxu0 0.0
        %4718 = vmatprep.subr.mxu0 0.0
        %4719 = vmatpush2.msra.mxu0 0.0
        %4720 = vmatprep.subr.mxu0 0.0
        %4721 = vmatpush2.msra.mxu0 0.0
        %4722 = vmatprep.subr.mxu0 0.0
        %4723 = vmatpush2.msra.mxu0 0.0
        %4724 = vmatprep.mubr.f32.mxu0 0.0
        %4725 = vmatmul.mubr.f32.gmra.mxu0 %v4655
        %v4726 = vpop.f32.mrf.mxu0
        %v4727 = vadd.f32 0.0, %v4726
        %v4728 = vpop.f32.mrf.mxu0
        %4729 = vmatprep.mubr.f32.mxu0 0.0
        %4730 = vmatmul.mubr.f32.gmra.mxu0 %v4658
        %v4731 = vpop.f32.mrf.mxu0
        %v4732 = vadd.f32 0.0, %v4731
        %v4733 = vpop.f32.mrf.mxu0
        %4734 = vdwg.mxu0
        %v4736 = vsel %vm2213, %v4056, 0
        %v4739 = vsel %vm2213, %v4058, 0
        %4741 = vmatprep.subr.mxu0 0.0
        %4742 = vmatpush1.msra.mxu0 0.0
        %4743 = vmatprep.subr.mxu0 0.0
        %4744 = vmatpush1.msra.mxu0 0.0
        %4745 = vmatprep.subr.mxu0 0.0
        %4746 = vmatpush1.msra.mxu0 0.0
        %4747 = vmatprep.subr.mxu0 0.0
        %4748 = vmatpush1.msra.mxu0 0.0
        %4749 = vmatprep.subr.mxu0 0.0
        %4750 = vmatpush1.msra.mxu0 0.0
        %4751 = vmatprep.subr.mxu0 0.0
        %4752 = vmatpush1.msra.mxu0 0.0
        %4753 = vmatprep.subr.mxu0 0.0
        %4754 = vmatpush1.msra.mxu0 0.0
        %4755 = vmatprep.subr.mxu0 0.0
        %4756 = vmatpush1.msra.mxu0 0.0
        %4757 = vmatprep.subr.mxu0 0.0
        %4758 = vmatpush1.msra.mxu0 0.0
        %4759 = vmatprep.subr.mxu0 0.0
        %4760 = vmatpush1.msra.mxu0 0.0
        %4761 = vmatprep.subr.mxu0 0.0
        %4762 = vmatpush1.msra.mxu0 0.0
        %4763 = vmatprep.subr.mxu0 0.0
        %4764 = vmatpush1.msra.mxu0 0.0
        %4765 = vmatprep.subr.mxu0 0.0
        %4766 = vmatpush1.msra.mxu0 0.0
        %4767 = vmatprep.subr.mxu0 0.0
        %4768 = vmatpush1.msra.mxu0 0.0
        %4769 = vmatprep.subr.mxu0 0.0
        %4770 = vmatpush1.msra.mxu0 %v2168
        %4771 = vmatprep.subr.mxu0 0.0
        %4772 = vmatpush1.msra.mxu0 %v2166
        %4773 = vmatprep.subr.mxu0 0.0
        %4774 = vmatpush2.msra.mxu0 0.0
        %4775 = vmatprep.subr.mxu0 0.0
        %4776 = vmatpush2.msra.mxu0 0.0
        %4777 = vmatprep.subr.mxu0 0.0
        %4778 = vmatpush2.msra.mxu0 0.0
        %4779 = vmatprep.subr.mxu0 0.0
        %4780 = vmatpush2.msra.mxu0 0.0
        %4781 = vmatprep.subr.mxu0 0.0
        %4782 = vmatpush2.msra.mxu0 0.0
        %4783 = vmatprep.subr.mxu0 0.0
        %4784 = vmatpush2.msra.mxu0 0.0
        %4785 = vmatprep.subr.mxu0 0.0
        %4786 = vmatpush2.msra.mxu0 0.0
        %4787 = vmatprep.subr.mxu0 0.0
        %4788 = vmatpush2.msra.mxu0 0.0
        %4789 = vmatprep.subr.mxu0 0.0
        %4790 = vmatpush2.msra.mxu0 0.0
        %4791 = vmatprep.subr.mxu0 0.0
        %4792 = vmatpush2.msra.mxu0 0.0
        %4793 = vmatprep.subr.mxu0 0.0
        %4794 = vmatpush2.msra.mxu0 0.0
        %4795 = vmatprep.subr.mxu0 0.0
        %4796 = vmatpush2.msra.mxu0 0.0
        %4797 = vmatprep.subr.mxu0 0.0
        %4798 = vmatpush2.msra.mxu0 0.0
        %4799 = vmatprep.subr.mxu0 0.0
        %4800 = vmatpush2.msra.mxu0 0.0
        %4801 = vmatprep.subr.mxu0 0.0
        %4802 = vmatpush2.msra.mxu0 0.0
        %4803 = vmatprep.subr.mxu0 0.0
        %4804 = vmatpush2.msra.mxu0 0.0
        %4805 = vmatprep.mubr.f32.mxu0 0.0
        %4806 = vmatmul.mubr.f32.gmra.mxu0 %v4736
        %v4807 = vpop.f32.mrf.mxu0
        %v4808 = vadd.f32 0.0, %v4807
        %v4809 = vpop.f32.mrf.mxu0
        %4810 = vmatprep.mubr.f32.mxu0 0.0
        %4811 = vmatmul.mubr.f32.gmra.mxu0 %v4739
        %v4812 = vpop.f32.mrf.mxu0
        %v4813 = vadd.f32 0.0, %v4812
        %v4814 = vpop.f32.mrf.mxu0
        %4815 = vdwg.mxu0
        %v4817 = vsel %vm2213, %v4060, 0
        %v4820 = vsel %vm2213, %v4062, 0
        %4822 = vmatprep.subr.mxu0 0.0
        %4823 = vmatpush1.msra.mxu0 0.0
        %4824 = vmatprep.subr.mxu0 0.0
        %4825 = vmatpush1.msra.mxu0 0.0
        %4826 = vmatprep.subr.mxu0 0.0
        %4827 = vmatpush1.msra.mxu0 0.0
        %4828 = vmatprep.subr.mxu0 0.0
        %4829 = vmatpush1.msra.mxu0 0.0
        %4830 = vmatprep.subr.mxu0 0.0
        %4831 = vmatpush1.msra.mxu0 0.0
        %4832 = vmatprep.subr.mxu0 0.0
        %4833 = vmatpush1.msra.mxu0 0.0
        %4834 = vmatprep.subr.mxu0 0.0
        %4835 = vmatpush1.msra.mxu0 0.0
        %4836 = vmatprep.subr.mxu0 0.0
        %4837 = vmatpush1.msra.mxu0 0.0
        %4838 = vmatprep.subr.mxu0 0.0
        %4839 = vmatpush1.msra.mxu0 0.0
        %4840 = vmatprep.subr.mxu0 0.0
        %4841 = vmatpush1.msra.mxu0 0.0
        %4842 = vmatprep.subr.mxu0 0.0
        %4843 = vmatpush1.msra.mxu0 0.0
        %4844 = vmatprep.subr.mxu0 0.0
        %4845 = vmatpush1.msra.mxu0 0.0
        %4846 = vmatprep.subr.mxu0 0.0
        %4847 = vmatpush1.msra.mxu0 0.0
        %4848 = vmatprep.subr.mxu0 0.0
        %4849 = vmatpush1.msra.mxu0 0.0
        %4850 = vmatprep.subr.mxu0 0.0
        %4851 = vmatpush1.msra.mxu0 %v2172
        %4852 = vmatprep.subr.mxu0 0.0
        %4853 = vmatpush1.msra.mxu0 %v2170
        %4854 = vmatprep.subr.mxu0 0.0
        %4855 = vmatpush2.msra.mxu0 0.0
        %4856 = vmatprep.subr.mxu0 0.0
        %4857 = vmatpush2.msra.mxu0 0.0
        %4858 = vmatprep.subr.mxu0 0.0
        %4859 = vmatpush2.msra.mxu0 0.0
        %4860 = vmatprep.subr.mxu0 0.0
        %4861 = vmatpush2.msra.mxu0 0.0
        %4862 = vmatprep.subr.mxu0 0.0
        %4863 = vmatpush2.msra.mxu0 0.0
        %4864 = vmatprep.subr.mxu0 0.0
        %4865 = vmatpush2.msra.mxu0 0.0
        %4866 = vmatprep.subr.mxu0 0.0
        %4867 = vmatpush2.msra.mxu0 0.0
        %4868 = vmatprep.subr.mxu0 0.0
        %4869 = vmatpush2.msra.mxu0 0.0
        %4870 = vmatprep.subr.mxu0 0.0
        %4871 = vmatpush2.msra.mxu0 0.0
        %4872 = vmatprep.subr.mxu0 0.0
        %4873 = vmatpush2.msra.mxu0 0.0
        %4874 = vmatprep.subr.mxu0 0.0
        %4875 = vmatpush2.msra.mxu0 0.0
        %4876 = vmatprep.subr.mxu0 0.0
        %4877 = vmatpush2.msra.mxu0 0.0
        %4878 = vmatprep.subr.mxu0 0.0
        %4879 = vmatpush2.msra.mxu0 0.0
        %4880 = vmatprep.subr.mxu0 0.0
        %4881 = vmatpush2.msra.mxu0 0.0
        %4882 = vmatprep.subr.mxu0 0.0
        %4883 = vmatpush2.msra.mxu0 0.0
        %4884 = vmatprep.subr.mxu0 0.0
        %4885 = vmatpush2.msra.mxu0 0.0
        %4886 = vmatprep.mubr.f32.mxu0 0.0
        %4887 = vmatmul.mubr.f32.gmra.mxu0 %v4817
        %v4888 = vpop.f32.mrf.mxu0
        %v4889 = vadd.f32 0.0, %v4888
        %v4890 = vpop.f32.mrf.mxu0
        %4891 = vmatprep.mubr.f32.mxu0 0.0
        %4892 = vmatmul.mubr.f32.gmra.mxu0 %v4820
        %v4893 = vpop.f32.mrf.mxu0
        %v4894 = vadd.f32 0.0, %v4893
        %v4895 = vpop.f32.mrf.mxu0
        %4896 = vdwg.mxu0
        %v4898 = vsel %vm2213, %v4064, 0
        %v4901 = vsel %vm2213, %v4066, 0
        %4903 = vmatprep.subr.mxu0 0.0
        %4904 = vmatpush1.msra.mxu0 0.0
        %4905 = vmatprep.subr.mxu0 0.0
        %4906 = vmatpush1.msra.mxu0 0.0
        %4907 = vmatprep.subr.mxu0 0.0
        %4908 = vmatpush1.msra.mxu0 0.0
        %4909 = vmatprep.subr.mxu0 0.0
        %4910 = vmatpush1.msra.mxu0 0.0
        %4911 = vmatprep.subr.mxu0 0.0
        %4912 = vmatpush1.msra.mxu0 0.0
        %4913 = vmatprep.subr.mxu0 0.0
        %4914 = vmatpush1.msra.mxu0 0.0
        %4915 = vmatprep.subr.mxu0 0.0
        %4916 = vmatpush1.msra.mxu0 0.0
        %4917 = vmatprep.subr.mxu0 0.0
        %4918 = vmatpush1.msra.mxu0 0.0
        %4919 = vmatprep.subr.mxu0 0.0
        %4920 = vmatpush1.msra.mxu0 0.0
        %4921 = vmatprep.subr.mxu0 0.0
        %4922 = vmatpush1.msra.mxu0 0.0
        %4923 = vmatprep.subr.mxu0 0.0
        %4924 = vmatpush1.msra.mxu0 0.0
        %4925 = vmatprep.subr.mxu0 0.0
        %4926 = vmatpush1.msra.mxu0 0.0
        %4927 = vmatprep.subr.mxu0 0.0
        %4928 = vmatpush1.msra.mxu0 0.0
        %4929 = vmatprep.subr.mxu0 0.0
        %4930 = vmatpush1.msra.mxu0 0.0
        %4931 = vmatprep.subr.mxu0 0.0
        %4932 = vmatpush1.msra.mxu0 %v2176
        %4933 = vmatprep.subr.mxu0 0.0
        %4934 = vmatpush1.msra.mxu0 %v2174
        %4935 = vmatprep.subr.mxu0 0.0
        %4936 = vmatpush2.msra.mxu0 0.0
        %4937 = vmatprep.subr.mxu0 0.0
        %4938 = vmatpush2.msra.mxu0 0.0
        %4939 = vmatprep.subr.mxu0 0.0
        %4940 = vmatpush2.msra.mxu0 0.0
        %4941 = vmatprep.subr.mxu0 0.0
        %4942 = vmatpush2.msra.mxu0 0.0
        %4943 = vmatprep.subr.mxu0 0.0
        %4944 = vmatpush2.msra.mxu0 0.0
        %4945 = vmatprep.subr.mxu0 0.0
        %4946 = vmatpush2.msra.mxu0 0.0
        %4947 = vmatprep.subr.mxu0 0.0
        %4948 = vmatpush2.msra.mxu0 0.0
        %4949 = vmatprep.subr.mxu0 0.0
        %4950 = vmatpush2.msra.mxu0 0.0
        %4951 = vmatprep.subr.mxu0 0.0
        %4952 = vmatpush2.msra.mxu0 0.0
        %4953 = vmatprep.subr.mxu0 0.0
        %4954 = vmatpush2.msra.mxu0 0.0
        %4955 = vmatprep.subr.mxu0 0.0
        %4956 = vmatpush2.msra.mxu0 0.0
        %4957 = vmatprep.subr.mxu0 0.0
        %4958 = vmatpush2.msra.mxu0 0.0
        %4959 = vmatprep.subr.mxu0 0.0
        %4960 = vmatpush2.msra.mxu0 0.0
        %4961 = vmatprep.subr.mxu0 0.0
        %4962 = vmatpush2.msra.mxu0 0.0
        %4963 = vmatprep.subr.mxu0 0.0
        %4964 = vmatpush2.msra.mxu0 0.0
        %4965 = vmatprep.subr.mxu0 0.0
        %4966 = vmatpush2.msra.mxu0 0.0
        %4967 = vmatprep.mubr.f32.mxu0 0.0
        %4968 = vmatmul.mubr.f32.gmra.mxu0 %v4898
        %v4969 = vpop.f32.mrf.mxu0
        %v4970 = vadd.f32 0.0, %v4969
        %v4971 = vpop.f32.mrf.mxu0
        %4972 = vmatprep.mubr.f32.mxu0 0.0
        %4973 = vmatmul.mubr.f32.gmra.mxu0 %v4901
        %v4974 = vpop.f32.mrf.mxu0
        %v4975 = vadd.f32 0.0, %v4974
        %v4976 = vpop.f32.mrf.mxu0
        %4977 = vdwg.mxu0
        %v4979 = vsel %vm2213, %v4068, 0
        %v4982 = vsel %vm2213, %v4070, 0
        %4984 = vmatprep.subr.mxu0 0.0
        %4985 = vmatpush1.msra.mxu0 0.0
        %4986 = vmatprep.subr.mxu0 0.0
        %4987 = vmatpush1.msra.mxu0 0.0
        %4988 = vmatprep.subr.mxu0 0.0
        %4989 = vmatpush1.msra.mxu0 0.0
        %4990 = vmatprep.subr.mxu0 0.0
        %4991 = vmatpush1.msra.mxu0 0.0
        %4992 = vmatprep.subr.mxu0 0.0
        %4993 = vmatpush1.msra.mxu0 0.0
        %4994 = vmatprep.subr.mxu0 0.0
        %4995 = vmatpush1.msra.mxu0 0.0
        %4996 = vmatprep.subr.mxu0 0.0
        %4997 = vmatpush1.msra.mxu0 0.0
        %4998 = vmatprep.subr.mxu0 0.0
        %4999 = vmatpush1.msra.mxu0 0.0
        %5000 = vmatprep.subr.mxu0 0.0
        %5001 = vmatpush1.msra.mxu0 0.0
        %5002 = vmatprep.subr.mxu0 0.0
        %5003 = vmatpush1.msra.mxu0 0.0
        %5004 = vmatprep.subr.mxu0 0.0
        %5005 = vmatpush1.msra.mxu0 0.0
        %5006 = vmatprep.subr.mxu0 0.0
        %5007 = vmatpush1.msra.mxu0 0.0
        %5008 = vmatprep.subr.mxu0 0.0
        %5009 = vmatpush1.msra.mxu0 0.0
        %5010 = vmatprep.subr.mxu0 0.0
        %5011 = vmatpush1.msra.mxu0 0.0
        %5012 = vmatprep.subr.mxu0 0.0
        %5013 = vmatpush1.msra.mxu0 %v2180
        %5014 = vmatprep.subr.mxu0 0.0
        %5015 = vmatpush1.msra.mxu0 %v2178
        %5016 = vmatprep.subr.mxu0 0.0
        %5017 = vmatpush2.msra.mxu0 0.0
        %5018 = vmatprep.subr.mxu0 0.0
        %5019 = vmatpush2.msra.mxu0 0.0
        %5020 = vmatprep.subr.mxu0 0.0
        %5021 = vmatpush2.msra.mxu0 0.0
        %5022 = vmatprep.subr.mxu0 0.0
        %5023 = vmatpush2.msra.mxu0 0.0
        %5024 = vmatprep.subr.mxu0 0.0
        %5025 = vmatpush2.msra.mxu0 0.0
        %5026 = vmatprep.subr.mxu0 0.0
        %5027 = vmatpush2.msra.mxu0 0.0
        %5028 = vmatprep.subr.mxu0 0.0
        %5029 = vmatpush2.msra.mxu0 0.0
        %5030 = vmatprep.subr.mxu0 0.0
        %5031 = vmatpush2.msra.mxu0 0.0
        %5032 = vmatprep.subr.mxu0 0.0
        %5033 = vmatpush2.msra.mxu0 0.0
        %5034 = vmatprep.subr.mxu0 0.0
        %5035 = vmatpush2.msra.mxu0 0.0
        %5036 = vmatprep.subr.mxu0 0.0
        %5037 = vmatpush2.msra.mxu0 0.0
        %5038 = vmatprep.subr.mxu0 0.0
        %5039 = vmatpush2.msra.mxu0 0.0
        %5040 = vmatprep.subr.mxu0 0.0
        %5041 = vmatpush2.msra.mxu0 0.0
        %5042 = vmatprep.subr.mxu0 0.0
        %5043 = vmatpush2.msra.mxu0 0.0
        %5044 = vmatprep.subr.mxu0 0.0
        %5045 = vmatpush2.msra.mxu0 0.0
        %5046 = vmatprep.subr.mxu0 0.0
        %5047 = vmatpush2.msra.mxu0 0.0
        %5048 = vmatprep.mubr.f32.mxu0 0.0
        %5049 = vmatmul.mubr.f32.gmra.mxu0 %v4979
        %v5050 = vpop.f32.mrf.mxu0
        %v5051 = vadd.f32 0.0, %v5050
        %v5052 = vpop.f32.mrf.mxu0
        %5053 = vmatprep.mubr.f32.mxu0 0.0
        %5054 = vmatmul.mubr.f32.gmra.mxu0 %v4982
        %v5055 = vpop.f32.mrf.mxu0
        %v5056 = vadd.f32 0.0, %v5055
        %v5057 = vpop.f32.mrf.mxu0
        %5058 = vdwg.mxu0
        %v5060 = vsel %vm2213, %v4072, 0
        %v5063 = vsel %vm2213, %v4074, 0
        %5065 = vmatprep.subr.mxu0 0.0
        %5066 = vmatpush1.msra.mxu0 0.0
        %5067 = vmatprep.subr.mxu0 0.0
        %5068 = vmatpush1.msra.mxu0 0.0
        %5069 = vmatprep.subr.mxu0 0.0
        %5070 = vmatpush1.msra.mxu0 0.0
        %5071 = vmatprep.subr.mxu0 0.0
        %5072 = vmatpush1.msra.mxu0 0.0
        %5073 = vmatprep.subr.mxu0 0.0
        %5074 = vmatpush1.msra.mxu0 0.0
        %5075 = vmatprep.subr.mxu0 0.0
        %5076 = vmatpush1.msra.mxu0 0.0
        %5077 = vmatprep.subr.mxu0 0.0
        %5078 = vmatpush1.msra.mxu0 0.0
        %5079 = vmatprep.subr.mxu0 0.0
        %5080 = vmatpush1.msra.mxu0 0.0
        %5081 = vmatprep.subr.mxu0 0.0
        %5082 = vmatpush1.msra.mxu0 0.0
        %5083 = vmatprep.subr.mxu0 0.0
        %5084 = vmatpush1.msra.mxu0 0.0
        %5085 = vmatprep.subr.mxu0 0.0
        %5086 = vmatpush1.msra.mxu0 0.0
        %5087 = vmatprep.subr.mxu0 0.0
        %5088 = vmatpush1.msra.mxu0 0.0
        %5089 = vmatprep.subr.mxu0 0.0
        %5090 = vmatpush1.msra.mxu0 0.0
        %5091 = vmatprep.subr.mxu0 0.0
        %5092 = vmatpush1.msra.mxu0 0.0
        %5093 = vmatprep.subr.mxu0 0.0
        %5094 = vmatpush1.msra.mxu0 %v2184
        %5095 = vmatprep.subr.mxu0 0.0
        %5096 = vmatpush1.msra.mxu0 %v2182
        %5097 = vmatprep.subr.mxu0 0.0
        %5098 = vmatpush2.msra.mxu0 0.0
        %5099 = vmatprep.subr.mxu0 0.0
        %5100 = vmatpush2.msra.mxu0 0.0
        %5101 = vmatprep.subr.mxu0 0.0
        %5102 = vmatpush2.msra.mxu0 0.0
        %5103 = vmatprep.subr.mxu0 0.0
        %5104 = vmatpush2.msra.mxu0 0.0
        %5105 = vmatprep.subr.mxu0 0.0
        %5106 = vmatpush2.msra.mxu0 0.0
        %5107 = vmatprep.subr.mxu0 0.0
        %5108 = vmatpush2.msra.mxu0 0.0
        %5109 = vmatprep.subr.mxu0 0.0
        %5110 = vmatpush2.msra.mxu0 0.0
        %5111 = vmatprep.subr.mxu0 0.0
        %5112 = vmatpush2.msra.mxu0 0.0
        %5113 = vmatprep.subr.mxu0 0.0
        %5114 = vmatpush2.msra.mxu0 0.0
        %5115 = vmatprep.subr.mxu0 0.0
        %5116 = vmatpush2.msra.mxu0 0.0
        %5117 = vmatprep.subr.mxu0 0.0
        %5118 = vmatpush2.msra.mxu0 0.0
        %5119 = vmatprep.subr.mxu0 0.0
        %5120 = vmatpush2.msra.mxu0 0.0
        %5121 = vmatprep.subr.mxu0 0.0
        %5122 = vmatpush2.msra.mxu0 0.0
        %5123 = vmatprep.subr.mxu0 0.0
        %5124 = vmatpush2.msra.mxu0 0.0
        %5125 = vmatprep.subr.mxu0 0.0
        %5126 = vmatpush2.msra.mxu0 0.0
        %5127 = vmatprep.subr.mxu0 0.0
        %5128 = vmatpush2.msra.mxu0 0.0
        %5129 = vmatprep.mubr.f32.mxu0 0.0
        %5130 = vmatmul.mubr.f32.gmra.mxu0 %v5060
        %v5131 = vpop.f32.mrf.mxu0
        %v5132 = vadd.f32 0.0, %v5131
        %v5133 = vpop.f32.mrf.mxu0
        %5134 = vmatprep.mubr.f32.mxu0 0.0
        %5135 = vmatmul.mubr.f32.gmra.mxu0 %v5063
        %v5136 = vpop.f32.mrf.mxu0
        %v5137 = vadd.f32 0.0, %v5136
        %v5138 = vpop.f32.mrf.mxu0
        %5139 = vdwg.mxu0
        %v5141 = vsel %vm2213, %v4076, 0
        %v5144 = vsel %vm2213, %v4078, 0
        %5146 = vmatprep.subr.mxu0 0.0
        %5147 = vmatpush1.msra.mxu0 0.0
        %5148 = vmatprep.subr.mxu0 0.0
        %5149 = vmatpush1.msra.mxu0 0.0
        %5150 = vmatprep.subr.mxu0 0.0
        %5151 = vmatpush1.msra.mxu0 0.0
        %5152 = vmatprep.subr.mxu0 0.0
        %5153 = vmatpush1.msra.mxu0 0.0
        %5154 = vmatprep.subr.mxu0 0.0
        %5155 = vmatpush1.msra.mxu0 0.0
        %5156 = vmatprep.subr.mxu0 0.0
        %5157 = vmatpush1.msra.mxu0 0.0
        %5158 = vmatprep.subr.mxu0 0.0
        %5159 = vmatpush1.msra.mxu0 0.0
        %5160 = vmatprep.subr.mxu0 0.0
        %5161 = vmatpush1.msra.mxu0 0.0
        %5162 = vmatprep.subr.mxu0 0.0
        %5163 = vmatpush1.msra.mxu0 0.0
        %5164 = vmatprep.subr.mxu0 0.0
        %5165 = vmatpush1.msra.mxu0 0.0
        %5166 = vmatprep.subr.mxu0 0.0
        %5167 = vmatpush1.msra.mxu0 0.0
        %5168 = vmatprep.subr.mxu0 0.0
        %5169 = vmatpush1.msra.mxu0 0.0
        %5170 = vmatprep.subr.mxu0 0.0
        %5171 = vmatpush1.msra.mxu0 0.0
        %5172 = vmatprep.subr.mxu0 0.0
        %5173 = vmatpush1.msra.mxu0 0.0
        %5174 = vmatprep.subr.mxu0 0.0
        %5175 = vmatpush1.msra.mxu0 %v2188
        %5176 = vmatprep.subr.mxu0 0.0
        %5177 = vmatpush1.msra.mxu0 %v2186
        %5178 = vmatprep.subr.mxu0 0.0
        %5179 = vmatpush2.msra.mxu0 0.0
        %5180 = vmatprep.subr.mxu0 0.0
        %5181 = vmatpush2.msra.mxu0 0.0
        %5182 = vmatprep.subr.mxu0 0.0
        %5183 = vmatpush2.msra.mxu0 0.0
        %5184 = vmatprep.subr.mxu0 0.0
        %5185 = vmatpush2.msra.mxu0 0.0
        %5186 = vmatprep.subr.mxu0 0.0
        %5187 = vmatpush2.msra.mxu0 0.0
        %5188 = vmatprep.subr.mxu0 0.0
        %5189 = vmatpush2.msra.mxu0 0.0
        %5190 = vmatprep.subr.mxu0 0.0
        %5191 = vmatpush2.msra.mxu0 0.0
        %5192 = vmatprep.subr.mxu0 0.0
        %5193 = vmatpush2.msra.mxu0 0.0
        %5194 = vmatprep.subr.mxu0 0.0
        %5195 = vmatpush2.msra.mxu0 0.0
        %5196 = vmatprep.subr.mxu0 0.0
        %5197 = vmatpush2.msra.mxu0 0.0
        %5198 = vmatprep.subr.mxu0 0.0
        %5199 = vmatpush2.msra.mxu0 0.0
        %5200 = vmatprep.subr.mxu0 0.0
        %5201 = vmatpush2.msra.mxu0 0.0
        %5202 = vmatprep.subr.mxu0 0.0
        %5203 = vmatpush2.msra.mxu0 0.0
        %5204 = vmatprep.subr.mxu0 0.0
        %5205 = vmatpush2.msra.mxu0 0.0
        %5206 = vmatprep.subr.mxu0 0.0
        %5207 = vmatpush2.msra.mxu0 0.0
        %5208 = vmatprep.subr.mxu0 0.0
        %5209 = vmatpush2.msra.mxu0 0.0
        %5210 = vmatprep.mubr.f32.mxu0 0.0
        %5211 = vmatmul.mubr.f32.gmra.mxu0 %v5141
        %v5212 = vpop.f32.mrf.mxu0
        %v5213 = vadd.f32 0.0, %v5212
        %v5214 = vpop.f32.mrf.mxu0
        %5215 = vmatprep.mubr.f32.mxu0 0.0
        %5216 = vmatmul.mubr.f32.gmra.mxu0 %v5144
        %v5217 = vpop.f32.mrf.mxu0
        %v5218 = vadd.f32 0.0, %v5217
        %v5219 = vpop.f32.mrf.mxu0
        %5220 = vdwg.mxu0
        %v5222 = vsel %vm2213, %v4080, 0
        %v5225 = vsel %vm2213, %v4082, 0
        %5227 = vmatprep.subr.mxu0 0.0
        %5228 = vmatpush1.msra.mxu0 0.0
        %5229 = vmatprep.subr.mxu0 0.0
        %5230 = vmatpush1.msra.mxu0 0.0
        %5231 = vmatprep.subr.mxu0 0.0
        %5232 = vmatpush1.msra.mxu0 0.0
        %5233 = vmatprep.subr.mxu0 0.0
        %5234 = vmatpush1.msra.mxu0 0.0
        %5235 = vmatprep.subr.mxu0 0.0
        %5236 = vmatpush1.msra.mxu0 0.0
        %5237 = vmatprep.subr.mxu0 0.0
        %5238 = vmatpush1.msra.mxu0 0.0
        %5239 = vmatprep.subr.mxu0 0.0
        %5240 = vmatpush1.msra.mxu0 0.0
        %5241 = vmatprep.subr.mxu0 0.0
        %5242 = vmatpush1.msra.mxu0 0.0
        %5243 = vmatprep.subr.mxu0 0.0
        %5244 = vmatpush1.msra.mxu0 0.0
        %5245 = vmatprep.subr.mxu0 0.0
        %5246 = vmatpush1.msra.mxu0 0.0
        %5247 = vmatprep.subr.mxu0 0.0
        %5248 = vmatpush1.msra.mxu0 0.0
        %5249 = vmatprep.subr.mxu0 0.0
        %5250 = vmatpush1.msra.mxu0 0.0
        %5251 = vmatprep.subr.mxu0 0.0
        %5252 = vmatpush1.msra.mxu0 0.0
        %5253 = vmatprep.subr.mxu0 0.0
        %5254 = vmatpush1.msra.mxu0 0.0
        %5255 = vmatprep.subr.mxu0 0.0
        %5256 = vmatpush1.msra.mxu0 %v2192
        %5257 = vmatprep.subr.mxu0 0.0
        %5258 = vmatpush1.msra.mxu0 %v2190
        %5259 = vmatprep.subr.mxu0 0.0
        %5260 = vmatpush2.msra.mxu0 0.0
        %5261 = vmatprep.subr.mxu0 0.0
        %5262 = vmatpush2.msra.mxu0 0.0
        %5263 = vmatprep.subr.mxu0 0.0
        %5264 = vmatpush2.msra.mxu0 0.0
        %5265 = vmatprep.subr.mxu0 0.0
        %5266 = vmatpush2.msra.mxu0 0.0
        %5267 = vmatprep.subr.mxu0 0.0
        %5268 = vmatpush2.msra.mxu0 0.0
        %5269 = vmatprep.subr.mxu0 0.0
        %5270 = vmatpush2.msra.mxu0 0.0
        %5271 = vmatprep.subr.mxu0 0.0
        %5272 = vmatpush2.msra.mxu0 0.0
        %5273 = vmatprep.subr.mxu0 0.0
        %5274 = vmatpush2.msra.mxu0 0.0
        %5275 = vmatprep.subr.mxu0 0.0
        %5276 = vmatpush2.msra.mxu0 0.0
        %5277 = vmatprep.subr.mxu0 0.0
        %5278 = vmatpush2.msra.mxu0 0.0
        %5279 = vmatprep.subr.mxu0 0.0
        %5280 = vmatpush2.msra.mxu0 0.0
        %5281 = vmatprep.subr.mxu0 0.0
        %5282 = vmatpush2.msra.mxu0 0.0
        %5283 = vmatprep.subr.mxu0 0.0
        %5284 = vmatpush2.msra.mxu0 0.0
        %5285 = vmatprep.subr.mxu0 0.0
        %5286 = vmatpush2.msra.mxu0 0.0
        %5287 = vmatprep.subr.mxu0 0.0
        %5288 = vmatpush2.msra.mxu0 0.0
        %5289 = vmatprep.subr.mxu0 0.0
        %5290 = vmatpush2.msra.mxu0 0.0
        %5291 = vmatprep.mubr.f32.mxu0 0.0
        %5292 = vmatmul.mubr.f32.gmra.mxu0 %v5222
        %v5293 = vpop.f32.mrf.mxu0
        %v5294 = vadd.f32 0.0, %v5293
        %v5295 = vpop.f32.mrf.mxu0
        %5296 = vmatprep.mubr.f32.mxu0 0.0
        %5297 = vmatmul.mubr.f32.gmra.mxu0 %v5225
        %v5298 = vpop.f32.mrf.mxu0
        %v5299 = vadd.f32 0.0, %v5298
        %v5300 = vpop.f32.mrf.mxu0
        %5301 = vdwg.mxu0
        %v5303 = vsel %vm2213, %v4084, 0
        %v5306 = vsel %vm2213, %v4086, 0
        %5308 = vmatprep.subr.mxu0 0.0
        %5309 = vmatpush1.msra.mxu0 0.0
        %5310 = vmatprep.subr.mxu0 0.0
        %5311 = vmatpush1.msra.mxu0 0.0
        %5312 = vmatprep.subr.mxu0 0.0
        %5313 = vmatpush1.msra.mxu0 0.0
        %5314 = vmatprep.subr.mxu0 0.0
        %5315 = vmatpush1.msra.mxu0 0.0
        %5316 = vmatprep.subr.mxu0 0.0
        %5317 = vmatpush1.msra.mxu0 0.0
        %5318 = vmatprep.subr.mxu0 0.0
        %5319 = vmatpush1.msra.mxu0 0.0
        %5320 = vmatprep.subr.mxu0 0.0
        %5321 = vmatpush1.msra.mxu0 0.0
        %5322 = vmatprep.subr.mxu0 0.0
        %5323 = vmatpush1.msra.mxu0 0.0
        %5324 = vmatprep.subr.mxu0 0.0
        %5325 = vmatpush1.msra.mxu0 0.0
        %5326 = vmatprep.subr.mxu0 0.0
        %5327 = vmatpush1.msra.mxu0 0.0
        %5328 = vmatprep.subr.mxu0 0.0
        %5329 = vmatpush1.msra.mxu0 0.0
        %5330 = vmatprep.subr.mxu0 0.0
        %5331 = vmatpush1.msra.mxu0 0.0
        %5332 = vmatprep.subr.mxu0 0.0
        %5333 = vmatpush1.msra.mxu0 0.0
        %5334 = vmatprep.subr.mxu0 0.0
        %5335 = vmatpush1.msra.mxu0 0.0
        %5336 = vmatprep.subr.mxu0 0.0
        %5337 = vmatpush1.msra.mxu0 %v2196
        %5338 = vmatprep.subr.mxu0 0.0
        %5339 = vmatpush1.msra.mxu0 %v2194
        %5340 = vmatprep.subr.mxu0 0.0
        %5341 = vmatpush2.msra.mxu0 0.0
        %5342 = vmatprep.subr.mxu0 0.0
        %5343 = vmatpush2.msra.mxu0 0.0
        %5344 = vmatprep.subr.mxu0 0.0
        %5345 = vmatpush2.msra.mxu0 0.0
        %5346 = vmatprep.subr.mxu0 0.0
        %5347 = vmatpush2.msra.mxu0 0.0
        %5348 = vmatprep.subr.mxu0 0.0
        %5349 = vmatpush2.msra.mxu0 0.0
        %5350 = vmatprep.subr.mxu0 0.0
        %5351 = vmatpush2.msra.mxu0 0.0
        %5352 = vmatprep.subr.mxu0 0.0
        %5353 = vmatpush2.msra.mxu0 0.0
        %5354 = vmatprep.subr.mxu0 0.0
        %5355 = vmatpush2.msra.mxu0 0.0
        %5356 = vmatprep.subr.mxu0 0.0
        %5357 = vmatpush2.msra.mxu0 0.0
        %5358 = vmatprep.subr.mxu0 0.0
        %5359 = vmatpush2.msra.mxu0 0.0
        %5360 = vmatprep.subr.mxu0 0.0
        %5361 = vmatpush2.msra.mxu0 0.0
        %5362 = vmatprep.subr.mxu0 0.0
        %5363 = vmatpush2.msra.mxu0 0.0
        %5364 = vmatprep.subr.mxu0 0.0
        %5365 = vmatpush2.msra.mxu0 0.0
        %5366 = vmatprep.subr.mxu0 0.0
        %5367 = vmatpush2.msra.mxu0 0.0
        %5368 = vmatprep.subr.mxu0 0.0
        %5369 = vmatpush2.msra.mxu0 0.0
        %5370 = vmatprep.subr.mxu0 0.0
        %5371 = vmatpush2.msra.mxu0 0.0
        %5372 = vmatprep.mubr.f32.mxu0 0.0
        %5373 = vmatmul.mubr.f32.gmra.mxu0 %v5303
        %v5374 = vpop.f32.mrf.mxu0
        %v5375 = vadd.f32 0.0, %v5374
        %v5376 = vpop.f32.mrf.mxu0
        %5377 = vmatprep.mubr.f32.mxu0 0.0
        %5378 = vmatmul.mubr.f32.gmra.mxu0 %v5306
        %v5379 = vpop.f32.mrf.mxu0
        %v5380 = vadd.f32 0.0, %v5379
        %v5381 = vpop.f32.mrf.mxu0
        %5382 = vdwg.mxu0
        %v5383 = vld [vmem:[#allocation15] sm:$0xff]
        %v5384 = vld [vmem:[#allocation15 + $0x8] sm:$0xff]
        %v5385 = vld [vmem:[#allocation15 + $0x10] sm:$0xff]
        %v5386 = vld [vmem:[#allocation15 + $0x18] sm:$0xff]
        %v5388 = vsel %vm2213, %v4808, 0
        %v5391 = vsel %vm2213, %v4813, 0
        %v5394 = vsel %vm2213, %v4889, 0
        %v5397 = vsel %vm2213, %v4894, 0
        %v5400 = vsel %vm2213, %v4970, 0
        %v5403 = vsel %vm2213, %v4975, 0
        %v5406 = vsel %vm2213, %v5051, 0
        %v5409 = vsel %vm2213, %v5056, 0
        %v5412 = vsel %vm2213, %v5132, 0
        %v5415 = vsel %vm2213, %v5137, 0
        %v5418 = vsel %vm2213, %v5213, 0
        %v5421 = vsel %vm2213, %v5218, 0
        %v5424 = vsel %vm2213, %v5294, 0
        %v5427 = vsel %vm2213, %v5299, 0
        %v5430 = vsel %vm2213, %v5375, 0
        %v5433 = vsel %vm2213, %v5380, 0
        %5435 = vmatprep.subr.mxu0 0.0
        %5436 = vmatpush1.msra.mxu0 0.0
        %5437 = vmatprep.subr.mxu0 0.0
        %5438 = vmatpush1.msra.mxu0 0.0
        %5439 = vmatprep.subr.mxu0 0.0
        %5440 = vmatpush1.msra.mxu0 0.0
        %5441 = vmatprep.subr.mxu0 0.0
        %5442 = vmatpush1.msra.mxu0 0.0
        %5443 = vmatprep.subr.mxu0 0.0
        %5444 = vmatpush1.msra.mxu0 0.0
        %5445 = vmatprep.subr.mxu0 0.0
        %5446 = vmatpush1.msra.mxu0 0.0
        %5447 = vmatprep.subr.mxu0 0.0
        %5448 = vmatpush1.msra.mxu0 0.0
        %5449 = vmatprep.subr.mxu0 0.0
        %5450 = vmatpush1.msra.mxu0 0.0
        %5451 = vmatprep.subr.mxu0 0.0
        %5452 = vmatpush1.msra.mxu0 0.0
        %5453 = vmatprep.subr.mxu0 0.0
        %5454 = vmatpush1.msra.mxu0 0.0
        %5455 = vmatprep.subr.mxu0 0.0
        %5456 = vmatpush1.msra.mxu0 0.0
        %5457 = vmatprep.subr.mxu0 0.0
        %5458 = vmatpush1.msra.mxu0 0.0
        %5459 = vmatprep.subr.mxu0 0.0
        %5460 = vmatpush1.msra.mxu0 0.0
        %5461 = vmatprep.subr.mxu0 0.0
        %5462 = vmatpush1.msra.mxu0 0.0
        %5463 = vmatprep.subr.mxu0 0.0
        %5464 = vmatpush1.msra.mxu0 %v5386
        %5465 = vmatprep.subr.mxu0 0.0
        %5466 = vmatpush1.msra.mxu0 %v5385
        %5467 = vmatprep.subr.mxu0 0.0
        %5468 = vmatpush2.msra.mxu0 0.0
        %5469 = vmatprep.subr.mxu0 0.0
        %5470 = vmatpush2.msra.mxu0 0.0
        %5471 = vmatprep.subr.mxu0 0.0
        %5472 = vmatpush2.msra.mxu0 0.0
        %5473 = vmatprep.subr.mxu0 0.0
        %5474 = vmatpush2.msra.mxu0 0.0
        %5475 = vmatprep.subr.mxu0 0.0
        %5476 = vmatpush2.msra.mxu0 0.0
        %5477 = vmatprep.subr.mxu0 0.0
        %5478 = vmatpush2.msra.mxu0 0.0
        %5479 = vmatprep.subr.mxu0 0.0
        %5480 = vmatpush2.msra.mxu0 0.0
        %5481 = vmatprep.subr.mxu0 0.0
        %5482 = vmatpush2.msra.mxu0 0.0
        %5483 = vmatprep.subr.mxu0 0.0
        %5484 = vmatpush2.msra.mxu0 0.0
        %5485 = vmatprep.subr.mxu0 0.0
        %5486 = vmatpush2.msra.mxu0 0.0
        %5487 = vmatprep.subr.mxu0 0.0
        %5488 = vmatpush2.msra.mxu0 0.0
        %5489 = vmatprep.subr.mxu0 0.0
        %5490 = vmatpush2.msra.mxu0 0.0
        %5491 = vmatprep.subr.mxu0 0.0
        %5492 = vmatpush2.msra.mxu0 0.0
        %5493 = vmatprep.subr.mxu0 0.0
        %5494 = vmatpush2.msra.mxu0 0.0
        %5495 = vmatprep.subr.mxu0 0.0
        %5496 = vmatpush2.msra.mxu0 0.0
        %5497 = vmatprep.subr.mxu0 0.0
        %5498 = vmatpush2.msra.mxu0 0.0
        %5499 = vmatprep.mubr.f32.mxu0 0.0
        %5500 = vmatmul.mubr.f32.gmra.mxu0 %v5388
        %v5501 = vpop.f32.mrf.mxu0
        %v5502 = vadd.f32 0.0, %v5501
        %v5503 = vpop.f32.mrf.mxu0
        %5504 = vmatprep.mubr.f32.mxu0 0.0
        %5505 = vmatmul.mubr.f32.gmra.mxu0 %v5391
        %v5506 = vpop.f32.mrf.mxu0
        %v5507 = vadd.f32 0.0, %v5506
        %v5508 = vpop.f32.mrf.mxu0
        %5509 = vmatprep.mubr.f32.mxu0 0.0
        %5510 = vmatmul.mubr.f32.gmra.mxu0 %v5394
        %v5511 = vpop.f32.mrf.mxu0
        %v5512 = vadd.f32 0.0, %v5511
        %v5513 = vpop.f32.mrf.mxu0
        %5514 = vmatprep.mubr.f32.mxu0 0.0
        %5515 = vmatmul.mubr.f32.gmra.mxu0 %v5397
        %v5516 = vpop.f32.mrf.mxu0
        %v5517 = vadd.f32 0.0, %v5516
        %v5518 = vpop.f32.mrf.mxu0
        %5519 = vmatprep.mubr.f32.mxu0 0.0
        %5520 = vmatmul.mubr.f32.gmra.mxu0 %v5400
        %v5521 = vpop.f32.mrf.mxu0
        %v5522 = vadd.f32 0.0, %v5521
        %v5523 = vpop.f32.mrf.mxu0
        %5524 = vmatprep.mubr.f32.mxu0 0.0
        %5525 = vmatmul.mubr.f32.gmra.mxu0 %v5403
        %v5526 = vpop.f32.mrf.mxu0
        %v5527 = vadd.f32 0.0, %v5526
        %v5528 = vpop.f32.mrf.mxu0
        %5529 = vmatprep.mubr.f32.mxu0 0.0
        %5530 = vmatmul.mubr.f32.gmra.mxu0 %v5406
        %v5531 = vpop.f32.mrf.mxu0
        %v5532 = vadd.f32 0.0, %v5531
        %v5533 = vpop.f32.mrf.mxu0
        %5534 = vmatprep.mubr.f32.mxu0 0.0
        %5535 = vmatmul.mubr.f32.gmra.mxu0 %v5409
        %v5536 = vpop.f32.mrf.mxu0
        %v5537 = vadd.f32 0.0, %v5536
        %v5538 = vpop.f32.mrf.mxu0
        %5539 = vmatprep.mubr.f32.mxu0 0.0
        %5540 = vmatmul.mubr.f32.gmra.mxu0 %v5412
        %v5541 = vpop.f32.mrf.mxu0
        %v5542 = vadd.f32 0.0, %v5541
        %v5543 = vpop.f32.mrf.mxu0
        %5544 = vmatprep.mubr.f32.mxu0 0.0
        %5545 = vmatmul.mubr.f32.gmra.mxu0 %v5415
        %v5546 = vpop.f32.mrf.mxu0
        %v5547 = vadd.f32 0.0, %v5546
        %v5548 = vpop.f32.mrf.mxu0
        %5549 = vmatprep.mubr.f32.mxu0 0.0
        %5550 = vmatmul.mubr.f32.gmra.mxu0 %v5418
        %v5551 = vpop.f32.mrf.mxu0
        %v5552 = vadd.f32 0.0, %v5551
        %v5553 = vpop.f32.mrf.mxu0
        %5554 = vmatprep.mubr.f32.mxu0 0.0
        %5555 = vmatmul.mubr.f32.gmra.mxu0 %v5421
        %v5556 = vpop.f32.mrf.mxu0
        %v5557 = vadd.f32 0.0, %v5556
        %v5558 = vpop.f32.mrf.mxu0
        %5559 = vmatprep.mubr.f32.mxu0 0.0
        %5560 = vmatmul.mubr.f32.gmra.mxu0 %v5424
        %v5561 = vpop.f32.mrf.mxu0
        %v5562 = vadd.f32 0.0, %v5561
        %v5563 = vpop.f32.mrf.mxu0
        %5564 = vmatprep.mubr.f32.mxu0 0.0
        %5565 = vmatmul.mubr.f32.gmra.mxu0 %v5427
        %v5566 = vpop.f32.mrf.mxu0
        %v5567 = vadd.f32 0.0, %v5566
        %v5568 = vpop.f32.mrf.mxu0
        %5569 = vmatprep.mubr.f32.mxu0 0.0
        %5570 = vmatmul.mubr.f32.gmra.mxu0 %v5430
        %v5571 = vpop.f32.mrf.mxu0
        %v5572 = vadd.f32 0.0, %v5571
        %v5573 = vpop.f32.mrf.mxu0
        %5574 = vmatprep.mubr.f32.mxu0 0.0
        %5575 = vmatmul.mubr.f32.gmra.mxu0 %v5433
        %v5576 = vpop.f32.mrf.mxu0
        %v5577 = vadd.f32 0.0, %v5576
        %v5578 = vpop.f32.mrf.mxu0
        %5579 = vdwg.mxu0
        %v5581 = vsel %vm2213, %v4160, 0
        %v5584 = vsel %vm2213, %v4165, 0
        %v5587 = vsel %vm2213, %v4241, 0
        %v5590 = vsel %vm2213, %v4246, 0
        %v5593 = vsel %vm2213, %v4322, 0
        %v5596 = vsel %vm2213, %v4327, 0
        %v5599 = vsel %vm2213, %v4403, 0
        %v5602 = vsel %vm2213, %v4408, 0
        %v5605 = vsel %vm2213, %v4484, 0
        %v5608 = vsel %vm2213, %v4489, 0
        %v5611 = vsel %vm2213, %v4565, 0
        %v5614 = vsel %vm2213, %v4570, 0
        %v5617 = vsel %vm2213, %v4646, 0
        %v5620 = vsel %vm2213, %v4651, 0
        %v5623 = vsel %vm2213, %v4727, 0
        %v5626 = vsel %vm2213, %v4732, 0
        %5628 = vmatprep.subr.mxu0 0.0
        %5629 = vmatpush1.msra.mxu0 0.0
        %5630 = vmatprep.subr.mxu0 0.0
        %5631 = vmatpush1.msra.mxu0 0.0
        %5632 = vmatprep.subr.mxu0 0.0
        %5633 = vmatpush1.msra.mxu0 0.0
        %5634 = vmatprep.subr.mxu0 0.0
        %5635 = vmatpush1.msra.mxu0 0.0
        %5636 = vmatprep.subr.mxu0 0.0
        %5637 = vmatpush1.msra.mxu0 0.0
        %5638 = vmatprep.subr.mxu0 0.0
        %5639 = vmatpush1.msra.mxu0 0.0
        %5640 = vmatprep.subr.mxu0 0.0
        %5641 = vmatpush1.msra.mxu0 0.0
        %5642 = vmatprep.subr.mxu0 0.0
        %5643 = vmatpush1.msra.mxu0 0.0
        %5644 = vmatprep.subr.mxu0 0.0
        %5645 = vmatpush1.msra.mxu0 0.0
        %5646 = vmatprep.subr.mxu0 0.0
        %5647 = vmatpush1.msra.mxu0 0.0
        %5648 = vmatprep.subr.mxu0 0.0
        %5649 = vmatpush1.msra.mxu0 0.0
        %5650 = vmatprep.subr.mxu0 0.0
        %5651 = vmatpush1.msra.mxu0 0.0
        %5652 = vmatprep.subr.mxu0 0.0
        %5653 = vmatpush1.msra.mxu0 0.0
        %5654 = vmatprep.subr.mxu0 0.0
        %5655 = vmatpush1.msra.mxu0 0.0
        %5656 = vmatprep.subr.mxu0 0.0
        %5657 = vmatpush1.msra.mxu0 %v5384
        %5658 = vmatprep.subr.mxu0 0.0
        %5659 = vmatpush1.msra.mxu0 %v5383
        %5660 = vmatprep.subr.mxu0 0.0
        %5661 = vmatpush2.msra.mxu0 0.0
        %5662 = vmatprep.subr.mxu0 0.0
        %5663 = vmatpush2.msra.mxu0 0.0
        %5664 = vmatprep.subr.mxu0 0.0
        %5665 = vmatpush2.msra.mxu0 0.0
        %5666 = vmatprep.subr.mxu0 0.0
        %5667 = vmatpush2.msra.mxu0 0.0
        %5668 = vmatprep.subr.mxu0 0.0
        %5669 = vmatpush2.msra.mxu0 0.0
        %5670 = vmatprep.subr.mxu0 0.0
        %5671 = vmatpush2.msra.mxu0 0.0
        %5672 = vmatprep.subr.mxu0 0.0
        %5673 = vmatpush2.msra.mxu0 0.0
        %5674 = vmatprep.subr.mxu0 0.0
        %5675 = vmatpush2.msra.mxu0 0.0
        %5676 = vmatprep.subr.mxu0 0.0
        %5677 = vmatpush2.msra.mxu0 0.0
        %5678 = vmatprep.subr.mxu0 0.0
        %5679 = vmatpush2.msra.mxu0 0.0
        %5680 = vmatprep.subr.mxu0 0.0
        %5681 = vmatpush2.msra.mxu0 0.0
        %5682 = vmatprep.subr.mxu0 0.0
        %5683 = vmatpush2.msra.mxu0 0.0
        %5684 = vmatprep.subr.mxu0 0.0
        %5685 = vmatpush2.msra.mxu0 0.0
        %5686 = vmatprep.subr.mxu0 0.0
        %5687 = vmatpush2.msra.mxu0 0.0
        %5688 = vmatprep.subr.mxu0 0.0
        %5689 = vmatpush2.msra.mxu0 0.0
        %5690 = vmatprep.subr.mxu0 0.0
        %5691 = vmatpush2.msra.mxu0 0.0
        %5692 = vmatprep.mubr.f32.mxu0 0.0
        %5693 = vmatmul.mubr.f32.gmra.mxu0 %v5581
        %v5694 = vpop.f32.mrf.mxu0
        %v5695 = vadd.f32 %v5502, %v5694
        %v5696 = vpop.f32.mrf.mxu0
        %5697 = vmatprep.mubr.f32.mxu0 0.0
        %5698 = vmatmul.mubr.f32.gmra.mxu0 %v5584
        %v5699 = vpop.f32.mrf.mxu0
        %v5700 = vadd.f32 %v5507, %v5699
        %v5701 = vpop.f32.mrf.mxu0
        %5702 = vmatprep.mubr.f32.mxu0 0.0
        %5703 = vmatmul.mubr.f32.gmra.mxu0 %v5587
        %v5704 = vpop.f32.mrf.mxu0
        %v5705 = vadd.f32 %v5512, %v5704
        %v5706 = vpop.f32.mrf.mxu0
        %5707 = vmatprep.mubr.f32.mxu0 0.0
        %5708 = vmatmul.mubr.f32.gmra.mxu0 %v5590
        %v5709 = vpop.f32.mrf.mxu0
        %v5710 = vadd.f32 %v5517, %v5709
        %v5711 = vpop.f32.mrf.mxu0
        %5712 = vmatprep.mubr.f32.mxu0 0.0
        %5713 = vmatmul.mubr.f32.gmra.mxu0 %v5593
        %v5714 = vpop.f32.mrf.mxu0
        %v5715 = vadd.f32 %v5522, %v5714
        %v5716 = vpop.f32.mrf.mxu0
        %5717 = vmatprep.mubr.f32.mxu0 0.0
        %5718 = vmatmul.mubr.f32.gmra.mxu0 %v5596
        %v5719 = vpop.f32.mrf.mxu0
        %v5720 = vadd.f32 %v5527, %v5719
        %v5721 = vpop.f32.mrf.mxu0
        %5722 = vmatprep.mubr.f32.mxu0 0.0
        %5723 = vmatmul.mubr.f32.gmra.mxu0 %v5599
        %v5724 = vpop.f32.mrf.mxu0
        %v5725 = vadd.f32 %v5532, %v5724
        %v5726 = vpop.f32.mrf.mxu0
        %5727 = vmatprep.mubr.f32.mxu0 0.0
        %5728 = vmatmul.mubr.f32.gmra.mxu0 %v5602
        %v5729 = vpop.f32.mrf.mxu0
        %v5730 = vadd.f32 %v5537, %v5729
        %v5731 = vpop.f32.mrf.mxu0
        %5732 = vmatprep.mubr.f32.mxu0 0.0
        %5733 = vmatmul.mubr.f32.gmra.mxu0 %v5605
        %v5734 = vpop.f32.mrf.mxu0
        %v5735 = vadd.f32 %v5542, %v5734
        %v5736 = vpop.f32.mrf.mxu0
        %5737 = vmatprep.mubr.f32.mxu0 0.0
        %5738 = vmatmul.mubr.f32.gmra.mxu0 %v5608
        %v5739 = vpop.f32.mrf.mxu0
        %v5740 = vadd.f32 %v5547, %v5739
        %v5741 = vpop.f32.mrf.mxu0
        %5742 = vmatprep.mubr.f32.mxu0 0.0
        %5743 = vmatmul.mubr.f32.gmra.mxu0 %v5611
        %v5744 = vpop.f32.mrf.mxu0
        %v5745 = vadd.f32 %v5552, %v5744
        %v5746 = vpop.f32.mrf.mxu0
        %5747 = vmatprep.mubr.f32.mxu0 0.0
        %5748 = vmatmul.mubr.f32.gmra.mxu0 %v5614
        %v5749 = vpop.f32.mrf.mxu0
        %v5750 = vadd.f32 %v5557, %v5749
        %v5751 = vpop.f32.mrf.mxu0
        %5752 = vmatprep.mubr.f32.mxu0 0.0
        %5753 = vmatmul.mubr.f32.gmra.mxu0 %v5617
        %v5754 = vpop.f32.mrf.mxu0
        %v5755 = vadd.f32 %v5562, %v5754
        %v5756 = vpop.f32.mrf.mxu0
        %5757 = vmatprep.mubr.f32.mxu0 0.0
        %5758 = vmatmul.mubr.f32.gmra.mxu0 %v5620
        %v5759 = vpop.f32.mrf.mxu0
        %v5760 = vadd.f32 %v5567, %v5759
        %v5761 = vpop.f32.mrf.mxu0
        %5762 = vmatprep.mubr.f32.mxu0 0.0
        %5763 = vmatmul.mubr.f32.gmra.mxu0 %v5623
        %v5764 = vpop.f32.mrf.mxu0
        %v5765 = vadd.f32 %v5572, %v5764
        %v5766 = vpop.f32.mrf.mxu0
        %5767 = vmatprep.mubr.f32.mxu0 0.0
        %5768 = vmatmul.mubr.f32.gmra.mxu0 %v5626
        %v5769 = vpop.f32.mrf.mxu0
        %v5770 = vadd.f32 %v5577, %v5769
        %v5771 = vpop.f32.mrf.mxu0
        %5772 = vdwg.mxu0
        %v5773 = vadd.f32 %v5695, %v1446
        %v5774 = vadd.f32 %v5700, %v1447
        %v5775 = vadd.f32 %v5705, %v1448
        %v5776 = vadd.f32 %v5710, %v1449
        %v5777 = vadd.f32 %v5715, %v1450
        %v5778 = vadd.f32 %v5720, %v1451
        %v5779 = vadd.f32 %v5725, %v1452
        %v5780 = vadd.f32 %v5730, %v1453
        %v5781 = vadd.f32 %v5735, %v1454
        %v5782 = vadd.f32 %v5740, %v1455
        %v5783 = vadd.f32 %v5745, %v1456
        %v5784 = vadd.f32 %v5750, %v1457
        %v5785 = vadd.f32 %v5755, %v1458
        %v5786 = vadd.f32 %v5760, %v1459
        %v5787 = vadd.f32 %v5765, %v1460
        %v5788 = vadd.f32 %v5770, %v1461
        %v5789 = vld [vmem:[%s13] sm:$0x1]
        %v5790 = vld [vmem:[%s14] sm:$0x1]
        %v5791 = vsel %vm736, %v5773, 0.0
        %5792 = vadd.xlane.f32.xlu0 %v5791
        %v5793 = vpop.xlane.xlu0 %5792
        %v5794 = vsel %vm736, %v5774, 0.0
        %5795 = vadd.xlane.f32.xlu0 %v5794
        %v5796 = vpop.xlane.xlu0 %5795
        %v5797 = vsel %vm736, %v5775, 0.0
        %5798 = vadd.xlane.f32.xlu0 %v5797
        %v5799 = vpop.xlane.xlu0 %5798
        %v5800 = vsel %vm736, %v5776, 0.0
        %5801 = vadd.xlane.f32.xlu0 %v5800
        %v5802 = vpop.xlane.xlu0 %5801
        %v5803 = vsel %vm736, %v5777, 0.0
        %5804 = vadd.xlane.f32.xlu0 %v5803
        %v5805 = vpop.xlane.xlu0 %5804
        %v5806 = vsel %vm736, %v5778, 0.0
        %5807 = vadd.xlane.f32.xlu0 %v5806
        %v5808 = vpop.xlane.xlu0 %5807
        %v5809 = vsel %vm736, %v5779, 0.0
        %5810 = vadd.xlane.f32.xlu0 %v5809
        %v5811 = vpop.xlane.xlu0 %5810
        %v5812 = vsel %vm736, %v5780, 0.0
        %5813 = vadd.xlane.f32.xlu0 %v5812
        %v5814 = vpop.xlane.xlu0 %5813
        %v5815 = vsel %vm736, %v5781, 0.0
        %5816 = vadd.xlane.f32.xlu0 %v5815
        %v5817 = vpop.xlane.xlu0 %5816
        %v5818 = vsel %vm736, %v5782, 0.0
        %5819 = vadd.xlane.f32.xlu0 %v5818
        %v5820 = vpop.xlane.xlu0 %5819
        %v5821 = vsel %vm736, %v5783, 0.0
        %5822 = vadd.xlane.f32.xlu0 %v5821
        %v5823 = vpop.xlane.xlu0 %5822
        %v5824 = vsel %vm736, %v5784, 0.0
        %5825 = vadd.xlane.f32.xlu0 %v5824
        %v5826 = vpop.xlane.xlu0 %5825
        %v5827 = vsel %vm736, %v5785, 0.0
        %5828 = vadd.xlane.f32.xlu0 %v5827
        %v5829 = vpop.xlane.xlu0 %5828
        %v5830 = vsel %vm736, %v5786, 0.0
        %5831 = vadd.xlane.f32.xlu0 %v5830
        %v5832 = vpop.xlane.xlu0 %5831
        %v5833 = vsel %vm736, %v5787, 0.0
        %5834 = vadd.xlane.f32.xlu0 %v5833
        %v5835 = vpop.xlane.xlu0 %5834
        %v5836 = vsel %vm736, %v5788, 0.0
        %5837 = vadd.xlane.f32.xlu0 %v5836
        %v5838 = vpop.xlane.xlu0 %5837
        %v5839 = vmul.f32 %v5793, %v785
        %v5840 = vmul.f32 %v5796, %v785
        %v5841 = vmul.f32 %v5799, %v785
        %v5842 = vmul.f32 %v5802, %v785
        %v5843 = vmul.f32 %v5805, %v785
        %v5844 = vmul.f32 %v5808, %v785
        %v5845 = vmul.f32 %v5811, %v785
        %v5846 = vmul.f32 %v5814, %v785
        %v5847 = vmul.f32 %v5817, %v785
        %v5848 = vmul.f32 %v5820, %v785
        %v5849 = vmul.f32 %v5823, %v785
        %v5850 = vmul.f32 %v5826, %v785
        %v5851 = vmul.f32 %v5829, %v785
        %v5852 = vmul.f32 %v5832, %v785
        %v5853 = vmul.f32 %v5835, %v785
        %v5854 = vmul.f32 %v5838, %v785
        %v5855 = vsub.f32 %v5773, %v5839
        %v5856 = vsub.f32 %v5774, %v5840
        %v5857 = vsub.f32 %v5775, %v5841
        %v5858 = vsub.f32 %v5776, %v5842
        %v5859 = vsub.f32 %v5777, %v5843
        %v5860 = vsub.f32 %v5778, %v5844
        %v5861 = vsub.f32 %v5779, %v5845
        %v5862 = vsub.f32 %v5780, %v5846
        %v5863 = vsub.f32 %v5781, %v5847
        %v5864 = vsub.f32 %v5782, %v5848
        %v5865 = vsub.f32 %v5783, %v5849
        %v5866 = vsub.f32 %v5784, %v5850
        %v5867 = vsub.f32 %v5785, %v5851
        %v5868 = vsub.f32 %v5786, %v5852
        %v5869 = vsub.f32 %v5787, %v5853
        %v5870 = vsub.f32 %v5788, %v5854
        %v5871 = vmul.f32 %v5855, %v5855
        %v5872 = vmul.f32 %v5856, %v5856
        %v5873 = vmul.f32 %v5857, %v5857
        %v5874 = vmul.f32 %v5858, %v5858
        %v5875 = vmul.f32 %v5859, %v5859
        %v5876 = vmul.f32 %v5860, %v5860
        %v5877 = vmul.f32 %v5861, %v5861
        %v5878 = vmul.f32 %v5862, %v5862
        %v5879 = vmul.f32 %v5863, %v5863
        %v5880 = vmul.f32 %v5864, %v5864
        %v5881 = vmul.f32 %v5865, %v5865
        %v5882 = vmul.f32 %v5866, %v5866
        %v5883 = vmul.f32 %v5867, %v5867
        %v5884 = vmul.f32 %v5868, %v5868
        %v5885 = vmul.f32 %v5869, %v5869
        %v5886 = vmul.f32 %v5870, %v5870
        %v5887 = vsel %vm736, %v5871, 0.0
        %5888 = vadd.xlane.f32.xlu0 %v5887
        %v5889 = vpop.xlane.xlu0 %5888
        %v5890 = vsel %vm736, %v5872, 0.0
        %5891 = vadd.xlane.f32.xlu0 %v5890
        %v5892 = vpop.xlane.xlu0 %5891
        %v5893 = vsel %vm736, %v5873, 0.0
        %5894 = vadd.xlane.f32.xlu0 %v5893
        %v5895 = vpop.xlane.xlu0 %5894
        %v5896 = vsel %vm736, %v5874, 0.0
        %5897 = vadd.xlane.f32.xlu0 %v5896
        %v5898 = vpop.xlane.xlu0 %5897
        %v5899 = vsel %vm736, %v5875, 0.0
        %5900 = vadd.xlane.f32.xlu0 %v5899
        %v5901 = vpop.xlane.xlu0 %5900
        %v5902 = vsel %vm736, %v5876, 0.0
        %5903 = vadd.xlane.f32.xlu0 %v5902
        %v5904 = vpop.xlane.xlu0 %5903
        %v5905 = vsel %vm736, %v5877, 0.0
        %5906 = vadd.xlane.f32.xlu0 %v5905
        %v5907 = vpop.xlane.xlu0 %5906
        %v5908 = vsel %vm736, %v5878, 0.0
        %5909 = vadd.xlane.f32.xlu0 %v5908
        %v5910 = vpop.xlane.xlu0 %5909
        %v5911 = vsel %vm736, %v5879, 0.0
        %5912 = vadd.xlane.f32.xlu0 %v5911
        %v5913 = vpop.xlane.xlu0 %5912
        %v5914 = vsel %vm736, %v5880, 0.0
        %5915 = vadd.xlane.f32.xlu0 %v5914
        %v5916 = vpop.xlane.xlu0 %5915
        %v5917 = vsel %vm736, %v5881, 0.0
        %5918 = vadd.xlane.f32.xlu0 %v5917
        %v5919 = vpop.xlane.xlu0 %5918
        %v5920 = vsel %vm736, %v5882, 0.0
        %5921 = vadd.xlane.f32.xlu0 %v5920
        %v5922 = vpop.xlane.xlu0 %5921
        %v5923 = vsel %vm736, %v5883, 0.0
        %5924 = vadd.xlane.f32.xlu0 %v5923
        %v5925 = vpop.xlane.xlu0 %5924
        %v5926 = vsel %vm736, %v5884, 0.0
        %5927 = vadd.xlane.f32.xlu0 %v5926
        %v5928 = vpop.xlane.xlu0 %5927
        %v5929 = vsel %vm736, %v5885, 0.0
        %5930 = vadd.xlane.f32.xlu0 %v5929
        %v5931 = vpop.xlane.xlu0 %5930
        %v5932 = vsel %vm736, %v5886, 0.0
        %5933 = vadd.xlane.f32.xlu0 %v5932
        %v5934 = vpop.xlane.xlu0 %5933
        %v5935 = vmul.f32 %v5889, %v785
        %v5936 = vmul.f32 %v5892, %v785
        %v5937 = vmul.f32 %v5895, %v785
        %v5938 = vmul.f32 %v5898, %v785
        %v5939 = vmul.f32 %v5901, %v785
        %v5940 = vmul.f32 %v5904, %v785
        %v5941 = vmul.f32 %v5907, %v785
        %v5942 = vmul.f32 %v5910, %v785
        %v5943 = vmul.f32 %v5913, %v785
        %v5944 = vmul.f32 %v5916, %v785
        %v5945 = vmul.f32 %v5919, %v785
        %v5946 = vmul.f32 %v5922, %v785
        %v5947 = vmul.f32 %v5925, %v785
        %v5948 = vmul.f32 %v5928, %v785
        %v5949 = vmul.f32 %v5931, %v785
        %v5950 = vmul.f32 %v5934, %v785
        %v5951 = vadd.f32 %v5935, 1e-06
        %v5952 = vadd.f32 %v5936, 1e-06
        %v5953 = vadd.f32 %v5937, 1e-06
        %v5954 = vadd.f32 %v5938, 1e-06
        %v5955 = vadd.f32 %v5939, 1e-06
        %v5956 = vadd.f32 %v5940, 1e-06
        %v5957 = vadd.f32 %v5941, 1e-06
        %v5958 = vadd.f32 %v5942, 1e-06
        %v5959 = vadd.f32 %v5943, 1e-06
        %v5960 = vadd.f32 %v5944, 1e-06
        %v5961 = vadd.f32 %v5945, 1e-06
        %v5962 = vadd.f32 %v5946, 1e-06
        %v5963 = vadd.f32 %v5947, 1e-06
        %v5964 = vadd.f32 %v5948, 1e-06
        %v5965 = vadd.f32 %v5949, 1e-06
        %v5966 = vadd.f32 %v5950, 1e-06
        %v5967 = vrsqrt.pop %v5951
        %v5968 = vrsqrt.pop %v5952
        %v5969 = vrsqrt.pop %v5953
        %v5970 = vrsqrt.pop %v5954
        %v5971 = vrsqrt.pop %v5955
        %v5972 = vrsqrt.pop %v5956
        %v5973 = vrsqrt.pop %v5957
        %v5974 = vrsqrt.pop %v5958
        %v5975 = vrsqrt.pop %v5959
        %v5976 = vrsqrt.pop %v5960
        %v5977 = vrsqrt.pop %v5961
        %v5978 = vrsqrt.pop %v5962
        %v5979 = vrsqrt.pop %v5963
        %v5980 = vrsqrt.pop %v5964
        %v5981 = vrsqrt.pop %v5965
        %v5982 = vrsqrt.pop %v5966
        %v5983 = vmul.f32 %v5855, %v5967
        %v5984 = vmul.f32 %v5856, %v5968
        %v5985 = vmul.f32 %v5857, %v5969
        %v5986 = vmul.f32 %v5858, %v5970
        %v5987 = vmul.f32 %v5859, %v5971
        %v5988 = vmul.f32 %v5860, %v5972
        %v5989 = vmul.f32 %v5861, %v5973
        %v5990 = vmul.f32 %v5862, %v5974
        %v5991 = vmul.f32 %v5863, %v5975
        %v5992 = vmul.f32 %v5864, %v5976
        %v5993 = vmul.f32 %v5865, %v5977
        %v5994 = vmul.f32 %v5866, %v5978
        %v5995 = vmul.f32 %v5867, %v5979
        %v5996 = vmul.f32 %v5868, %v5980
        %v5997 = vmul.f32 %v5869, %v5981
        %v5998 = vmul.f32 %v5870, %v5982
        %v6000 = vlaneseq
        %v6001 = vshrl.u32 %v6000, 7
        %v6002 = vsub.s32 0, %v6001
        %v6003 = vrot.slane %v5789, %v6002
        %v6005 = vmul.f32 %v5983, %v6003
        %v6006 = vmul.f32 %v5984, %v6003
        %v6007 = vmul.f32 %v5985, %v6003
        %v6008 = vmul.f32 %v5986, %v6003
        %v6009 = vmul.f32 %v5987, %v6003
        %v6010 = vmul.f32 %v5988, %v6003
        %v6011 = vmul.f32 %v5989, %v6003
        %v6012 = vmul.f32 %v5990, %v6003
        %v6013 = vmul.f32 %v5991, %v6003
        %v6014 = vmul.f32 %v5992, %v6003
        %v6015 = vmul.f32 %v5993, %v6003
        %v6016 = vmul.f32 %v5994, %v6003
        %v6017 = vmul.f32 %v5995, %v6003
        %v6018 = vmul.f32 %v5996, %v6003
        %v6019 = vmul.f32 %v5997, %v6003
        %v6020 = vmul.f32 %v5998, %v6003
        %v6022 = vlaneseq
        %v6023 = vshrl.u32 %v6022, 7
        %v6024 = vsub.s32 0, %v6023
        %v6025 = vrot.slane %v5790, %v6024
        %v6027 = vadd.f32 %v6005, %v6025
        %v6028 = vadd.f32 %v6006, %v6025
        %v6029 = vadd.f32 %v6007, %v6025
        %v6030 = vadd.f32 %v6008, %v6025
        %v6031 = vadd.f32 %v6009, %v6025
        %v6032 = vadd.f32 %v6010, %v6025
        %v6033 = vadd.f32 %v6011, %v6025
        %v6034 = vadd.f32 %v6012, %v6025
        %v6035 = vadd.f32 %v6013, %v6025
        %v6036 = vadd.f32 %v6014, %v6025
        %v6037 = vadd.f32 %v6015, %v6025
        %v6038 = vadd.f32 %v6016, %v6025
        %v6039 = vadd.f32 %v6017, %v6025
        %v6040 = vadd.f32 %v6018, %v6025
        %v6041 = vadd.f32 %v6019, %v6025
        %v6042 = vadd.f32 %v6020, %v6025
        %v6043 = vxor.u32 %v6027, 2147483648
        %v6044 = vxor.u32 %v6028, 2147483648
        %v6045 = vxor.u32 %v6029, 2147483648
        %v6046 = vxor.u32 %v6030, 2147483648
        %v6047 = vxor.u32 %v6031, 2147483648
        %v6048 = vxor.u32 %v6032, 2147483648
        %v6049 = vxor.u32 %v6033, 2147483648
        %v6050 = vxor.u32 %v6034, 2147483648
        %v6051 = vxor.u32 %v6035, 2147483648
        %v6052 = vxor.u32 %v6036, 2147483648
        %v6053 = vxor.u32 %v6037, 2147483648
        %v6054 = vxor.u32 %v6038, 2147483648
        %v6055 = vxor.u32 %v6039, 2147483648
        %v6056 = vxor.u32 %v6040, 2147483648
        %v6057 = vxor.u32 %v6041, 2147483648
        %v6058 = vxor.u32 %v6042, 2147483648
        %v6059 = vmul.f32 %v6043, 1.442695
        %v6060 = vpow.pop %v6059
        %v6061 = vmul.f32 %v6044, 1.442695
        %v6062 = vpow.pop %v6061
        %v6063 = vmul.f32 %v6045, 1.442695
        %v6064 = vpow.pop %v6063
        %v6065 = vmul.f32 %v6046, 1.442695
        %v6066 = vpow.pop %v6065
        %v6067 = vmul.f32 %v6047, 1.442695
        %v6068 = vpow.pop %v6067
        %v6069 = vmul.f32 %v6048, 1.442695
        %v6070 = vpow.pop %v6069
        %v6071 = vmul.f32 %v6049, 1.442695
        %v6072 = vpow.pop %v6071
        %v6073 = vmul.f32 %v6050, 1.442695
        %v6074 = vpow.pop %v6073
        %v6075 = vmul.f32 %v6051, 1.442695
        %v6076 = vpow.pop %v6075
        %v6077 = vmul.f32 %v6052, 1.442695
        %v6078 = vpow.pop %v6077
        %v6079 = vmul.f32 %v6053, 1.442695
        %v6080 = vpow.pop %v6079
        %v6081 = vmul.f32 %v6054, 1.442695
        %v6082 = vpow.pop %v6081
        %v6083 = vmul.f32 %v6055, 1.442695
        %v6084 = vpow.pop %v6083
        %v6085 = vmul.f32 %v6056, 1.442695
        %v6086 = vpow.pop %v6085
        %v6087 = vmul.f32 %v6057, 1.442695
        %v6088 = vpow.pop %v6087
        %v6089 = vmul.f32 %v6058, 1.442695
        %v6090 = vpow.pop %v6089
        %v6091 = vadd.f32 %v6060, 1.0
        %v6092 = vadd.f32 %v6062, 1.0
        %v6093 = vadd.f32 %v6064, 1.0
        %v6094 = vadd.f32 %v6066, 1.0
        %v6095 = vadd.f32 %v6068, 1.0
        %v6096 = vadd.f32 %v6070, 1.0
        %v6097 = vadd.f32 %v6072, 1.0
        %v6098 = vadd.f32 %v6074, 1.0
        %v6099 = vadd.f32 %v6076, 1.0
        %v6100 = vadd.f32 %v6078, 1.0
        %v6101 = vadd.f32 %v6080, 1.0
        %v6102 = vadd.f32 %v6082, 1.0
        %v6103 = vadd.f32 %v6084, 1.0
        %v6104 = vadd.f32 %v6086, 1.0
        %v6105 = vadd.f32 %v6088, 1.0
        %v6106 = vadd.f32 %v6090, 1.0
        %v6107 = vrcp.pop %v6091
        %v6108 = vmul.f32 1.0, %v6107
        %v6109 = vrcp.pop %v6092
        %v6110 = vmul.f32 1.0, %v6109
        %v6111 = vrcp.pop %v6093
        %v6112 = vmul.f32 1.0, %v6111
        %v6113 = vrcp.pop %v6094
        %v6114 = vmul.f32 1.0, %v6113
        %v6115 = vrcp.pop %v6095
        %v6116 = vmul.f32 1.0, %v6115
        %v6117 = vrcp.pop %v6096
        %v6118 = vmul.f32 1.0, %v6117
        %v6119 = vrcp.pop %v6097
        %v6120 = vmul.f32 1.0, %v6119
        %v6121 = vrcp.pop %v6098
        %v6122 = vmul.f32 1.0, %v6121
        %v6123 = vrcp.pop %v6099
        %v6124 = vmul.f32 1.0, %v6123
        %v6125 = vrcp.pop %v6100
        %v6126 = vmul.f32 1.0, %v6125
        %v6127 = vrcp.pop %v6101
        %v6128 = vmul.f32 1.0, %v6127
        %v6129 = vrcp.pop %v6102
        %v6130 = vmul.f32 1.0, %v6129
        %v6131 = vrcp.pop %v6103
        %v6132 = vmul.f32 1.0, %v6131
        %v6133 = vrcp.pop %v6104
        %v6134 = vmul.f32 1.0, %v6133
        %v6135 = vrcp.pop %v6105
        %v6136 = vmul.f32 1.0, %v6135
        %v6137 = vrcp.pop %v6106
        %v6138 = vmul.f32 1.0, %v6137
        %v6139 = vmul.f32 %v1446, %v6108
        %v6140 = vmul.f32 %v1447, %v6110
        %v6141 = vmul.f32 %v1448, %v6112
        %v6142 = vmul.f32 %v1449, %v6114
        %v6143 = vmul.f32 %v1450, %v6116
        %v6144 = vmul.f32 %v1451, %v6118
        %v6145 = vmul.f32 %v1452, %v6120
        %v6146 = vmul.f32 %v1453, %v6122
        %v6147 = vmul.f32 %v1454, %v6124
        %v6148 = vmul.f32 %v1455, %v6126
        %v6149 = vmul.f32 %v1456, %v6128
        %v6150 = vmul.f32 %v1457, %v6130
        %v6151 = vmul.f32 %v1458, %v6132
        %v6152 = vmul.f32 %v1459, %v6134
        %v6153 = vmul.f32 %v1460, %v6136
        %v6154 = vmul.f32 %v1461, %v6138
        %v6155 = vadd.f32 %v974, %v6139
        %v6156 = vadd.f32 %v975, %v6140
        %v6157 = vadd.f32 %v976, %v6141
        %v6158 = vadd.f32 %v977, %v6142
        %v6159 = vadd.f32 %v978, %v6143
        %v6160 = vadd.f32 %v979, %v6144
        %v6161 = vadd.f32 %v980, %v6145
        %v6162 = vadd.f32 %v981, %v6146
        %v6163 = vadd.f32 %v982, %v6147
        %v6164 = vadd.f32 %v983, %v6148
        %v6165 = vadd.f32 %v984, %v6149
        %v6166 = vadd.f32 %v985, %v6150
        %v6167 = vadd.f32 %v986, %v6151
        %v6168 = vadd.f32 %v987, %v6152
        %v6169 = vadd.f32 %v988, %v6153
        %v6170 = vadd.f32 %v989, %v6154
        %6171 = vst.msk [vmem:[%s684] sm:$0xff] %vm736, %v6155
        %6172 = vst.msk [vmem:[%s684 + $0x8] sm:$0xff] %vm736, %v6156
        %6173 = vst.msk [vmem:[%s684 + $0x10] sm:$0xff] %vm736, %v6157
        %6174 = vst.msk [vmem:[%s684 + $0x18] sm:$0xff] %vm736, %v6158
        %6175 = vst.msk [vmem:[%s684 + $0x20] sm:$0xff] %vm736, %v6159
        %6176 = vst.msk [vmem:[%s684 + $0x28] sm:$0xff] %vm736, %v6160
        %6177 = vst.msk [vmem:[%s684 + $0x30] sm:$0xff] %vm736, %v6161
        %6178 = vst.msk [vmem:[%s684 + $0x38] sm:$0xff] %vm736, %v6162
        %6179 = vst.msk [vmem:[%s684 + $0x40] sm:$0xff] %vm736, %v6163
        %6180 = vst.msk [vmem:[%s684 + $0x48] sm:$0xff] %vm736, %v6164
        %6181 = vst.msk [vmem:[%s684 + $0x50] sm:$0xff] %vm736, %v6165
        %6182 = vst.msk [vmem:[%s684 + $0x58] sm:$0xff] %vm736, %v6166
        %6183 = vst.msk [vmem:[%s684 + $0x60] sm:$0xff] %vm736, %v6167
        %6184 = vst.msk [vmem:[%s684 + $0x68] sm:$0xff] %vm736, %v6168
        %6185 = vst.msk [vmem:[%s684 + $0x70] sm:$0xff] %vm736, %v6169
        %6186 = vst.msk [vmem:[%s684 + $0x78] sm:$0xff] %vm736, %v6170
        %s6187 = smul.u32 16, %s35
        %p6188 = scmp.lt.s32.totalorder %s6187, 31
        %s6189 = scalar_select %p6188, %s6187, 31
        %s6190 = smul.addr %s6189, 8
        %s6191 = scalar_lea.vmem %s15, %s6190
        // Predicated region
        $region117: #{tpu_custom_call.1} parent=79 // pred_check
          %p6192 = pneg %p383
        $region118: #{tpu_custom_call.1} parent=79 // pred_check_branch
          %6194 = sbr.rel (%p6192) target = $region120
        $region119: #{tpu_custom_call.1} parent=79 // pred_region
          %s6195 = smul.u32 16, %s35
        $region120: #{tpu_custom_call.1} parent=79 // pred_fallthru
          _
      $region80: #{tpu_custom_call.1} parent=5 // pred_fallthru
        _
      %p6196 = scmp.le.s32.totalorder 2, %s30
      // Predicated region
      $region121: #{tpu_custom_call.1} parent=5 // pred_check
        %p6197 = pneg %p6196
      $region122: #{tpu_custom_call.1} parent=5 // pred_check_branch
        %6199 = sbr.rel (%p6197) target = $region124
      $region123: #{tpu_custom_call.1} parent=5 // pred_region
        %s6200 = ssub.s32 %s30, 2
        // Predicated region
        $region125: #{tpu_custom_call.1} parent=123 // pred_check
          %p6201 = pneg %p389
        $region126: #{tpu_custom_call.1} parent=123 // pred_check_branch
          %6203 = sbr.rel (%p6201) target = $region128
        $region127: #{tpu_custom_call.1} parent=123 // pred_region
          %s6204 = smul.u32 16, %s36
          %p6205 = scmp.lt.s32.totalorder %s6204, 31
          %s6206 = scalar_select %p6205, %s6204, 31
          %s6207 = smul.addr %s6206, 8
          %s6208 = scalar_lea.vmem %s15, %s6207
        $region128: #{tpu_custom_call.1} parent=123 // pred_fallthru
          _
      $region124: #{tpu_custom_call.1} parent=5 // pred_fallthru
        _
    $region6: #{tpu_custom_call.1} parent=1 // loop_footer
      %s34 = sadd.s32 1, %s30
    $region7: #{tpu_custom_call.1} parent=1 // loop_footer_branch
      %29 = sbr.rel target = $region3
    $region8: #{tpu_custom_call.1} parent=1 // loop_exit
      _
    %6209 = vsyncpa [#allocation3], 1
    %s6210 = scalar_lea.sflag [#allocation3], 1
    %6211 = vsyncpa %s6210, 1
    %6212 = vsyncpa [#allocation5], 1
    %s6213 = scalar_lea.sflag [#allocation5], 1
    %6214 = vsyncpa %s6213, 1
    %6215 = vsyncpa [#allocation8], 1
    %6216 = vsyncpa [#allocation11], 1
    %6217 = vsyncpa [#allocation14], 1

</llo_original>
